<compile_context>
chip_gen: v5e
topology: v5e:2x2
jax: 0.10.0
libtpu: 0.0.40
codegen_flags: <defaults>
</compile_context>

<pallas_src>
import functools

import jax
import jax.numpy as jnp
from jax.experimental import pallas as pl
from jax.experimental.pallas import tpu as pltpu

# Logical and lane-padded feature dims.
ID_IN, ID_IN_PAD, ID_HID, ID_OUT = 500, 512, 1024, 1024
VW_IN, VW_IN_PAD, VW_HID, VW_OUT = 31, 128, 512, 512

MAX_TILE_B = 256  # batch tile (multiple of 8); weights loaded once per call


def _round_up(x, m):
    return (x + m - 1) // m * m


def _fused_kernel(id_x_ref, vw_x_ref,
                  id_w1_ref, id_b1_ref, id_w2_ref, id_b2_ref,
                  vw_w1_ref, vw_b1_ref, vw_w2_ref, vw_b2_ref,
                  id_o_ref, vw_o_ref):
    """Both 2-layer MLP branches fused: tanh(relu(x@W1+b1)@W2+b2), f32 accum."""
    # --- identity branch: 512 -> 1024 -> 1024 ---
    x = id_x_ref[...].astype(jnp.bfloat16)
    h = jnp.dot(x, id_w1_ref[...], preferred_element_type=jnp.float32)
    h = jnp.maximum(h + id_b1_ref[...], 0.0).astype(jnp.bfloat16)   # ReLU (VPU)
    y = jnp.dot(h, id_w2_ref[...], preferred_element_type=jnp.float32)
    id_o_ref[...] = jnp.tanh(y + id_b2_ref[...])                    # Tanh (EUP)

    # --- view branch: 128 -> 512 -> 512 ---
    x = vw_x_ref[...].astype(jnp.bfloat16)
    h = jnp.dot(x, vw_w1_ref[...], preferred_element_type=jnp.float32)
    h = jnp.maximum(h + vw_b1_ref[...], 0.0).astype(jnp.bfloat16)
    y = jnp.dot(h, vw_w2_ref[...], preferred_element_type=jnp.float32)
    vw_o_ref[...] = jnp.tanh(y + vw_b2_ref[...])


def _fused_forward(params, identity_p, view_p, tile_b):
    """Single pallas_call over a batch-tiled grid; weights VMEM-resident."""
    bp = identity_p.shape[0]
    grid = (bp // tile_b,)

    def wspec(shape):
        # Constant block index -> DMA'd once, reused across batch tiles.
        return pl.BlockSpec(shape, lambda i: (0, 0))

    return pl.pallas_call(
        _fused_kernel,
        out_shape=(
            jax.ShapeDtypeStruct((bp, ID_OUT), jnp.float32),
            jax.ShapeDtypeStruct((bp, VW_OUT), jnp.float32),
        ),
        grid=grid,
        in_specs=[
            pl.BlockSpec((tile_b, ID_IN_PAD), lambda i: (i, 0)),   # identity x
            pl.BlockSpec((tile_b, VW_IN_PAD), lambda i: (i, 0)),   # view x
            wspec((ID_IN_PAD, ID_HID)),   # id_w1 (bf16)
            wspec((1, ID_HID)),           # id_b1 (f32)
            wspec((ID_HID, ID_OUT)),      # id_w2 (bf16)
            wspec((1, ID_OUT)),           # id_b2 (f32)
            wspec((VW_IN_PAD, VW_HID)),   # vw_w1 (bf16)
            wspec((1, VW_HID)),           # vw_b1 (f32)
            wspec((VW_HID, VW_OUT)),      # vw_w2 (bf16)
            wspec((1, VW_OUT)),           # vw_b2 (f32)
        ],
        out_specs=(
            pl.BlockSpec((tile_b, ID_OUT), lambda i: (i, 0)),
            pl.BlockSpec((tile_b, VW_OUT), lambda i: (i, 0)),
        ),
        compiler_params=pltpu.CompilerParams(
            dimension_semantics=("parallel",),
            vmem_limit_bytes=64 * 1024 * 1024,
        ),
    )(
        identity_p, view_p,
        params["id_w1"], params["id_b1"], params["id_w2"], params["id_b2"],
        params["vw_w1"], params["vw_b1"], params["vw_w2"], params["vw_b2"],
    )


@jax.jit
def tag_mapping_net_forward(params, identity, view):
    """Matches TagMappingNet.forward: returns [identity_out, view_out] (f32)."""
    b = identity.shape[0]
    # Lane-align the contraction dims (zero-padded; weight rows are zero too).
    identity_p = jnp.pad(identity, ((0, 0), (0, ID_IN_PAD - ID_IN)))
    view_p = jnp.pad(view, ((0, 0), (0, VW_IN_PAD - VW_IN)))

    # Sublane-align / tile the batch dim.
    tile_b = min(MAX_TILE_B, _round_up(b, 8))
    bp = _round_up(b, tile_b)
    if bp != b:
        identity_p = jnp.pad(identity_p, ((0, bp - b), (0, 0)))
        view_p = jnp.pad(view_p, ((0, bp - b), (0, 0)))

    id_out, vw_out = _fused_forward(params, identity_p, view_p, tile_b)
    return [id_out[:b], vw_out[:b]]


def _init_linear(key, d_in, d_out, d_in_pad):
    """PyTorch nn.Linear default init (U[-1/sqrt(fan_in), 1/sqrt(fan_in)]).

    Weight is stored as (d_in_pad, d_out) bf16 with zero-padded rows so the
    kernel computes x @ W + b with fully (8,128)-aligned tiles.
    """
    kw, kb = jax.random.split(key)
    bound = 1.0 / (d_in ** 0.5)
    w = jax.random.uniform(kw, (d_in, d_out), jnp.float32, -bound, bound)
    b = jax.random.uniform(kb, (1, d_out), jnp.float32, -bound, bound)
    w_pad = jnp.zeros((d_in_pad, d_out), jnp.float32).at[:d_in, :].set(w)
    return w_pad.astype(jnp.bfloat16), b


def init_tag_mapping_net(key):
    k1, k2, k3, k4 = jax.random.split(key, 4)
    params = {}
    params["id_w1"], params["id_b1"] = _init_linear(k1, ID_IN, ID_HID, ID_IN_PAD)
    params["id_w2"], params["id_b2"] = _init_linear(k2, ID_HID, ID_OUT, ID_HID)
    params["vw_w1"], params["vw_b1"] = _init_linear(k3, VW_IN, VW_HID, VW_IN_PAD)
    params["vw_w2"], params["vw_b2"] = _init_linear(k4, VW_HID, VW_OUT, VW_HID)
    return params


def _reference_forward(params, identity, view):
    """Pure-JAX f32 reference (weights upcast from the stored bf16 values)."""
    id_x = jnp.pad(identity, ((0, 0), (0, ID_IN_PAD - ID_IN)))
    vw_x = jnp.pad(view, ((0, 0), (0, VW_IN_PAD - VW_IN)))
    h = jnp.maximum(id_x @ params["id_w1"].astype(jnp.float32) + params["id_b1"], 0.0)
    ident = jnp.tanh(h @ params["id_w2"].astype(jnp.float32) + params["id_b2"])
    h = jnp.maximum(vw_x @ params["vw_w1"].astype(jnp.float32) + params["vw_b1"], 0.0)
    vw = jnp.tanh(h @ params["vw_w2"].astype(jnp.float32) + params["vw_b2"])
    return [ident, vw]


if __name__ == "__main__":
    key = jax.random.PRNGKey(0)
    kp, ki, kv = jax.random.split(key, 3)

    batch = 2
    identity = jax.random.normal(ki, (batch, 500), jnp.float32)
    view = jax.random.normal(kv, (batch, 31), jnp.float32)

    params = init_tag_mapping_net(kp)

    outs = tag_mapping_net_forward(params, identity, view)
    outs = [jax.block_until_ready(o) for o in outs]

    assert outs[0].shape == (batch, 1024), outs[0].shape
    assert outs[1].shape == (batch, 512), outs[1].shape

    # Correctness vs pure-JAX f32 reference. Activations pass through bf16 on
    # the MXU inside the kernel, so tolerance is relaxed vs the old f32 path.
    refs = _reference_forward(params, identity, view)
    for o, r in zip(outs, refs):
        err = float(jnp.max(jnp.abs(o - r)))
        assert err < 2e-2, err

    print("KERNEL_OK")
</pallas_src>

<mosaic_0001>
module attributes {stable_mosaic.version = 11 : i64} {
  func.func @_fused_kernel(%arg0: i32, %arg1: memref<8x512xf32, #tpu.memory_space<vmem>>, %arg2: memref<8x128xf32, #tpu.memory_space<vmem>>, %arg3: memref<512x1024xbf16, #tpu.memory_space<vmem>>, %arg4: memref<1x1024xf32, #tpu.memory_space<vmem>>, %arg5: memref<1024x1024xbf16, #tpu.memory_space<vmem>>, %arg6: memref<1x1024xf32, #tpu.memory_space<vmem>>, %arg7: memref<128x512xbf16, #tpu.memory_space<vmem>>, %arg8: memref<1x512xf32, #tpu.memory_space<vmem>>, %arg9: memref<512x512xbf16, #tpu.memory_space<vmem>>, %arg10: memref<1x512xf32, #tpu.memory_space<vmem>>, %arg11: memref<8x1024xf32, #tpu.memory_space<vmem>>, %arg12: memref<8x512xf32, #tpu.memory_space<vmem>>) attributes {dimension_semantics = [#tpu.dimension_semantics<parallel>], iteration_bounds = array<i64: 1>, scalar_prefetch = 0 : i64, scratch_operands = 0 : i64, tpu.core_type = #tpu.core_type<tc>, window_params = [{transform_indices = @transform_0, window_bounds = array<i64: 8, 512>}, {transform_indices = @transform_1, window_bounds = array<i64: 8, 128>}, {pipeline_mode = #tpu.pipeline_mode<synchronous>, transform_indices = @transform_2, window_bounds = array<i64: 512, 1024>}, {pipeline_mode = #tpu.pipeline_mode<synchronous>, transform_indices = @transform_3, window_bounds = array<i64: 1, 1024>}, {pipeline_mode = #tpu.pipeline_mode<synchronous>, transform_indices = @transform_4, window_bounds = array<i64: 1024, 1024>}, {pipeline_mode = #tpu.pipeline_mode<synchronous>, transform_indices = @transform_5, window_bounds = array<i64: 1, 1024>}, {pipeline_mode = #tpu.pipeline_mode<synchronous>, transform_indices = @transform_6, window_bounds = array<i64: 128, 512>}, {pipeline_mode = #tpu.pipeline_mode<synchronous>, transform_indices = @transform_7, window_bounds = array<i64: 1, 512>}, {pipeline_mode = #tpu.pipeline_mode<synchronous>, transform_indices = @transform_8, window_bounds = array<i64: 512, 512>}, {pipeline_mode = #tpu.pipeline_mode<synchronous>, transform_indices = @transform_9, window_bounds = array<i64: 1, 512>}, {transform_indices = @transform_10, window_bounds = array<i64: 8, 1024>}, {transform_indices = @transform_11, window_bounds = array<i64: 8, 512>}]} {
    %c0 = arith.constant 0 : index
    %c0_0 = arith.constant 0 : index
    %0 = vector.load %arg1[%c0, %c0_0] : memref<8x512xf32, #tpu.memory_space<vmem>>, vector<8x512xf32>
    %1 = arith.truncf %0 : vector<8x512xf32> to vector<8x512xbf16>
    %c0_1 = arith.constant 0 : index
    %c0_2 = arith.constant 0 : index
    %2 = vector.load %arg3[%c0_1, %c0_2] : memref<512x1024xbf16, #tpu.memory_space<vmem>>, vector<512x1024xbf16>
    %cst = arith.constant dense<0.000000e+00> : vector<8x1024xf32>
    %3 = tpu.matmul %1, %2, %cst {dimension_numbers = #tpu.dot_dimension_numbers<[1], [0], [0], [1], [0, 0, 1, 1], [], []>} : vector<8x512xbf16>, vector<512x1024xbf16>, vector<8x1024xf32> -> vector<8x1024xf32>
    %c0_3 = arith.constant 0 : index
    %c0_4 = arith.constant 0 : index
    %4 = vector.load %arg4[%c0_3, %c0_4] : memref<1x1024xf32, #tpu.memory_space<vmem>>, vector<1x1024xf32>
    %5 = vector.broadcast %4 : vector<1x1024xf32> to vector<8x1024xf32>
    %6 = arith.addf %3, %5 : vector<8x1024xf32>
    %cst_5 = arith.constant 0.000000e+00 : f32
    %7 = vector.broadcast %cst_5 : f32 to vector<8x1024xf32>
    %8 = arith.maximumf %6, %7 : vector<8x1024xf32>
    %9 = arith.truncf %8 : vector<8x1024xf32> to vector<8x1024xbf16>
    %c0_6 = arith.constant 0 : index
    %c0_7 = arith.constant 0 : index
    %10 = vector.load %arg5[%c0_6, %c0_7] : memref<1024x1024xbf16, #tpu.memory_space<vmem>>, vector<1024x1024xbf16>
    %cst_8 = arith.constant dense<0.000000e+00> : vector<8x1024xf32>
    %11 = tpu.matmul %9, %10, %cst_8 {dimension_numbers = #tpu.dot_dimension_numbers<[1], [0], [0], [1], [0, 0, 1, 1], [], []>} : vector<8x1024xbf16>, vector<1024x1024xbf16>, vector<8x1024xf32> -> vector<8x1024xf32>
    %c0_9 = arith.constant 0 : index
    %c0_10 = arith.constant 0 : index
    %12 = vector.load %arg6[%c0_9, %c0_10] : memref<1x1024xf32, #tpu.memory_space<vmem>>, vector<1x1024xf32>
    %13 = vector.broadcast %12 : vector<1x1024xf32> to vector<8x1024xf32>
    %14 = arith.addf %11, %13 : vector<8x1024xf32>
    %15 = math.tanh %14 : vector<8x1024xf32>
    %c0_11 = arith.constant 0 : index
    %c0_12 = arith.constant 0 : index
    %16 = vector.load %arg11[%c0_11, %c0_12] : memref<8x1024xf32, #tpu.memory_space<vmem>>, vector<8x1024xf32>
    tpu.vector_store %arg11[%c0_11, %c0_12], %15 {strides = array<i32>} : memref<8x1024xf32, #tpu.memory_space<vmem>>, vector<8x1024xf32>,
    %c0_13 = arith.constant 0 : index
    %c0_14 = arith.constant 0 : index
    %17 = vector.load %arg2[%c0_13, %c0_14] : memref<8x128xf32, #tpu.memory_space<vmem>>, vector<8x128xf32>
    %18 = arith.truncf %17 : vector<8x128xf32> to vector<8x128xbf16>
    %c0_15 = arith.constant 0 : index
    %c0_16 = arith.constant 0 : index
    %19 = vector.load %arg7[%c0_15, %c0_16] : memref<128x512xbf16, #tpu.memory_space<vmem>>, vector<128x512xbf16>
    %cst_17 = arith.constant dense<0.000000e+00> : vector<8x512xf32>
    %20 = tpu.matmul %18, %19, %cst_17 {dimension_numbers = #tpu.dot_dimension_numbers<[1], [0], [0], [1], [0, 0, 1, 1], [], []>} : vector<8x128xbf16>, vector<128x512xbf16>, vector<8x512xf32> -> vector<8x512xf32>
    %c0_18 = arith.constant 0 : index
    %c0_19 = arith.constant 0 : index
    %21 = vector.load %arg8[%c0_18, %c0_19] : memref<1x512xf32, #tpu.memory_space<vmem>>, vector<1x512xf32>
    %22 = vector.broadcast %21 : vector<1x512xf32> to vector<8x512xf32>
    %23 = arith.addf %20, %22 : vector<8x512xf32>
    %cst_20 = arith.constant 0.000000e+00 : f32
    %24 = vector.broadcast %cst_20 : f32 to vector<8x512xf32>
    %25 = arith.maximumf %23, %24 : vector<8x512xf32>
    %26 = arith.truncf %25 : vector<8x512xf32> to vector<8x512xbf16>
    %c0_21 = arith.constant 0 : index
    %c0_22 = arith.constant 0 : index
    %27 = vector.load %arg9[%c0_21, %c0_22] : memref<512x512xbf16, #tpu.memory_space<vmem>>, vector<512x512xbf16>
    %cst_23 = arith.constant dense<0.000000e+00> : vector<8x512xf32>
    %28 = tpu.matmul %26, %27, %cst_23 {dimension_numbers = #tpu.dot_dimension_numbers<[1], [0], [0], [1], [0, 0, 1, 1], [], []>} : vector<8x512xbf16>, vector<512x512xbf16>, vector<8x512xf32> -> vector<8x512xf32>
    %c0_24 = arith.constant 0 : index
    %c0_25 = arith.constant 0 : index
    %29 = vector.load %arg10[%c0_24, %c0_25] : memref<1x512xf32, #tpu.memory_space<vmem>>, vector<1x512xf32>
    %30 = vector.broadcast %29 : vector<1x512xf32> to vector<8x512xf32>
    %31 = arith.addf %28, %30 : vector<8x512xf32>
    %32 = math.tanh %31 : vector<8x512xf32>
    %c0_26 = arith.constant 0 : index
    %c0_27 = arith.constant 0 : index
    %33 = vector.load %arg12[%c0_26, %c0_27] : memref<8x512xf32, #tpu.memory_space<vmem>>, vector<8x512xf32>
    tpu.vector_store %arg12[%c0_26, %c0_27], %32 {strides = array<i32>} : memref<8x512xf32, #tpu.memory_space<vmem>>, vector<8x512xf32>,
    return
  }
  func.func @transform_0(%arg0: i32) -> (i32, i32) {
    %c0_i32 = arith.constant 0 : i32
    %c0_i32_0 = arith.constant 0 : i32
    return %arg0, %c0_i32 : i32, i32
  }
  func.func @transform_1(%arg0: i32) -> (i32, i32) {
    %c0_i32 = arith.constant 0 : i32
    %c0_i32_0 = arith.constant 0 : i32
    return %arg0, %c0_i32 : i32, i32
  }
  func.func @transform_2(%arg0: i32) -> (i32, i32) {
    %c0_i32 = arith.constant 0 : i32
    %c0_i32_0 = arith.constant 0 : i32
    %c0_i32_1 = arith.constant 0 : i32
    return %c0_i32, %c0_i32_0 : i32, i32
  }
  func.func @transform_3(%arg0: i32) -> (i32, i32) {
    %c0_i32 = arith.constant 0 : i32
    %c0_i32_0 = arith.constant 0 : i32
    %c0_i32_1 = arith.constant 0 : i32
    return %c0_i32, %c0_i32_0 : i32, i32
  }
  func.func @transform_4(%arg0: i32) -> (i32, i32) {
    %c0_i32 = arith.constant 0 : i32
    %c0_i32_0 = arith.constant 0 : i32
    %c0_i32_1 = arith.constant 0 : i32
    return %c0_i32, %c0_i32_0 : i32, i32
  }
  func.func @transform_5(%arg0: i32) -> (i32, i32) {
    %c0_i32 = arith.constant 0 : i32
    %c0_i32_0 = arith.constant 0 : i32
    %c0_i32_1 = arith.constant 0 : i32
    return %c0_i32, %c0_i32_0 : i32, i32
  }
  func.func @transform_6(%arg0: i32) -> (i32, i32) {
    %c0_i32 = arith.constant 0 : i32
    %c0_i32_0 = arith.constant 0 : i32
    %c0_i32_1 = arith.constant 0 : i32
    return %c0_i32, %c0_i32_0 : i32, i32
  }
  func.func @transform_7(%arg0: i32) -> (i32, i32) {
    %c0_i32 = arith.constant 0 : i32
    %c0_i32_0 = arith.constant 0 : i32
    %c0_i32_1 = arith.constant 0 : i32
    return %c0_i32, %c0_i32_0 : i32, i32
  }
  func.func @transform_8(%arg0: i32) -> (i32, i32) {
    %c0_i32 = arith.constant 0 : i32
    %c0_i32_0 = arith.constant 0 : i32
    %c0_i32_1 = arith.constant 0 : i32
    return %c0_i32, %c0_i32_0 : i32, i32
  }
  func.func @transform_9(%arg0: i32) -> (i32, i32) {
    %c0_i32 = arith.constant 0 : i32
    %c0_i32_0 = arith.constant 0 : i32
    %c0_i32_1 = arith.constant 0 : i32
    return %c0_i32, %c0_i32_0 : i32, i32
  }
  func.func @transform_10(%arg0: i32) -> (i32, i32) {
    %c0_i32 = arith.constant 0 : i32
    %c0_i32_0 = arith.constant 0 : i32
    return %arg0, %c0_i32 : i32, i32
  }
  func.func @transform_11(%arg0: i32) -> (i32, i32) {
    %c0_i32 = arith.constant 0 : i32
    %c0_i32_0 = arith.constant 0 : i32
    return %arg0, %c0_i32 : i32, i32
  }
}

</mosaic_0001>

<llo_original>
// kernel: tag_mapping_net_forward.1
$region0: #{tag_mapping_net_forward.1}
  #allocation0 [shape = 'u32[]', space=smem, size = 0x4, offset = 0x4, fixed_abs, tag = 'smem constant byte address 0x4 - core index']
  #allocation1 [shape = 'u32[72,128]{1,0:T(1,128)}', space=vmem, size = 0x9000, scoped, tag = 'internal scratch']
  %s0 = inlined_call_operand.vmem [shape: f32[8,512], index: 0, kind: input, shape index: {}]
  %s1 = inlined_call_operand.vmem [shape: f32[8,128], index: 1, kind: input, shape index: {}]
  %s2 = inlined_call_operand.hbm [shape: bf16[512,1024], index: 2, kind: input, shape index: {}]
  %s3 = inlined_call_operand.hbm [shape: f32[1,1024], index: 3, kind: input, shape index: {}]
  %s4 = inlined_call_operand.hbm [shape: bf16[1024,1024], index: 4, kind: input, shape index: {}]
  %s5 = inlined_call_operand.hbm [shape: f32[1,1024], index: 5, kind: input, shape index: {}]
  %s6 = inlined_call_operand.hbm [shape: bf16[128,512], index: 6, kind: input, shape index: {}]
  %s7 = inlined_call_operand.hbm [shape: f32[1,512], index: 7, kind: input, shape index: {}]
  %s8 = inlined_call_operand.hbm [shape: bf16[512,512], index: 8, kind: input, shape index: {}]
  %s9 = inlined_call_operand.hbm [shape: f32[1,512], index: 9, kind: input, shape index: {}]
  %s10 = inlined_call_operand.vmem [shape: f32[8,1024], index: 10, kind: output, shape index: {0}]
  %s11 = inlined_call_operand.vmem [shape: f32[8,512], index: 11, kind: output, shape index: {1}]
  %12 = xla_tuple %s10, %s11
  %s13 = sld [smem:[#allocation0]]
  $region90: #{tag_mapping_net_forward.1} parent=0
    _
  %s15 = ssub.s32 1, %s13
  %s16 = scalar_select 0, %s15, %s13
  $region1: #{tag_mapping_net_forward.1} parent=0
    #allocation2 [shape = 'u8[1048576]{0}', space=vmem, size = 0x100000, scoped, tag = 'input window, operand 2, single buffered']
    #allocation3 [shape = 's32[1]{0}', space=sflag, size = 0x4, scoped, tag = 'scoped memory for tag_mapping_net_forward.1']
    #allocation4 [shape = 'u8[4096]{0}', space=vmem, size = 0x1000, scoped, tag = 'input window, operand 3, single buffered']
    #allocation5 [shape = 's32[1]{0}', space=sflag, size = 0x4, scoped, tag = 'scoped memory for tag_mapping_net_forward.1']
    #allocation6 [shape = 'u8[2097152]{0}', space=vmem, size = 0x200000, scoped, tag = 'input window, operand 4, single buffered']
    #allocation7 [shape = 'u8[4096]{0}', space=vmem, size = 0x1000, scoped, tag = 'input window, operand 5, single buffered']
    #allocation8 [shape = 's32[1]{0}', space=sflag, size = 0x4, scoped, tag = 'scoped memory for tag_mapping_net_forward.1']
    #allocation9 [shape = 'u8[131072]{0}', space=vmem, size = 0x20000, scoped, tag = 'input window, operand 6, single buffered']
    #allocation10 [shape = 'u8[2048]{0}', space=vmem, size = 0x800, scoped, tag = 'input window, operand 7, single buffered']
    #allocation11 [shape = 's32[1]{0}', space=sflag, size = 0x4, scoped, tag = 'scoped memory for tag_mapping_net_forward.1']
    #allocation12 [shape = 'u8[524288]{0}', space=vmem, size = 0x80000, scoped, tag = 'input window, operand 8, single buffered']
    #allocation13 [shape = 'u8[2048]{0}', space=vmem, size = 0x800, scoped, tag = 'input window, operand 9, single buffered']
    #allocation14 [shape = 's32[1]{0}', space=sflag, size = 0x4, scoped, tag = 'scoped memory for tag_mapping_net_forward.1']
    %17 = vsyncpa [#allocation3], 0
    %18 = vsyncpa [#allocation5], 0
    %19 = vsyncpa [#allocation8], 0
    %20 = vsyncpa [#allocation11], 0
    %21 = vsyncpa [#allocation14], 0
    // Predicated region
    $region2: #{tag_mapping_net_forward.1} parent=1 // pred_check
      _
    $region3: #{tag_mapping_net_forward.1} parent=1 // pred_check_branch
      %23 = sbr.rel (0) target = $region5
    $region4: #{tag_mapping_net_forward.1} parent=1 // pred_region
      _
    $region5: #{tag_mapping_net_forward.1} parent=1 // pred_fallthru
      _
    // Predicated region
    $region6: #{tag_mapping_net_forward.1} parent=1 // pred_check
      _
    $region7: #{tag_mapping_net_forward.1} parent=1 // pred_check_branch
      %25 = sbr.rel (0) target = $region9
    $region8: #{tag_mapping_net_forward.1} parent=1 // pred_region
      _
    $region9: #{tag_mapping_net_forward.1} parent=1 // pred_fallthru
      _
    // Predicated region
    $region10: #{tag_mapping_net_forward.1} parent=1 // pred_check
      _
    $region11: #{tag_mapping_net_forward.1} parent=1 // pred_check_branch
      %27 = sbr.rel (0) target = $region13
    $region12: #{tag_mapping_net_forward.1} parent=1 // pred_region
      %29 = vsyncadd [#allocation3], 0
      %s30 = sshll.u32 %s2, 4
      %s31 = int_to_ptr.hbm [resolvable:$true] %s30
      %s32 = sshll.u32 [#allocation2], 4
      %s33 = int_to_ptr.vmem [resolvable:$true] %s32
      %38 = dma.hbm_to_vmem [thread:$0]  %s31, 32768, %s33, [#allocation3], 512, 512, 32
    $region13: #{tag_mapping_net_forward.1} parent=1 // pred_fallthru
      _
    // Predicated region
    $region14: #{tag_mapping_net_forward.1} parent=1 // pred_check
      _
    $region15: #{tag_mapping_net_forward.1} parent=1 // pred_check_branch
      %40 = sbr.rel (0) target = $region17
    $region16: #{tag_mapping_net_forward.1} parent=1 // pred_region
      %42 = vsyncadd [#allocation5], 0
      %s44 = sshll.u32 %s3, 4
      %s45 = int_to_ptr.hbm [resolvable:$true] %s44
      %s46 = sshll.u32 [#allocation4], 4
      %s47 = int_to_ptr.vmem [resolvable:$true] %s46
      %49 = dma.hbm_to_vmem [thread:$0]  %s45, 128, %s47, [#allocation5]
    $region17: #{tag_mapping_net_forward.1} parent=1 // pred_fallthru
      _
    // Predicated region
    $region18: #{tag_mapping_net_forward.1} parent=1 // pred_check
      _
    $region19: #{tag_mapping_net_forward.1} parent=1 // pred_check_branch
      %51 = sbr.rel (0) target = $region21
    $region20: #{tag_mapping_net_forward.1} parent=1 // pred_region
      %53 = vsyncadd [#allocation5], 0
      %s54 = sshll.u32 %s4, 4
      %s55 = int_to_ptr.hbm [resolvable:$true] %s54
      %s56 = sshll.u32 [#allocation6], 4
      %s57 = int_to_ptr.vmem [resolvable:$true] %s56
      %62 = dma.hbm_to_vmem [thread:$0]  %s55, 65536, %s57, [#allocation5], 512, 512, 32
    $region21: #{tag_mapping_net_forward.1} parent=1 // pred_fallthru
      _
    // Predicated region
    $region22: #{tag_mapping_net_forward.1} parent=1 // pred_check
      _
    $region23: #{tag_mapping_net_forward.1} parent=1 // pred_check_branch
      %64 = sbr.rel (0) target = $region25
    $region24: #{tag_mapping_net_forward.1} parent=1 // pred_region
      %66 = vsyncadd [#allocation8], 0
      %s68 = sshll.u32 %s5, 4
      %s69 = int_to_ptr.hbm [resolvable:$true] %s68
      %s70 = sshll.u32 [#allocation7], 4
      %s71 = int_to_ptr.vmem [resolvable:$true] %s70
      %73 = dma.hbm_to_vmem [thread:$0]  %s69, 128, %s71, [#allocation8]
    $region25: #{tag_mapping_net_forward.1} parent=1 // pred_fallthru
      _
    // Predicated region
    $region26: #{tag_mapping_net_forward.1} parent=1 // pred_check
      _
    $region27: #{tag_mapping_net_forward.1} parent=1 // pred_check_branch
      %75 = sbr.rel (0) target = $region29
    $region28: #{tag_mapping_net_forward.1} parent=1 // pred_region
      %77 = vsyncadd [#allocation8], 0
      %s78 = sshll.u32 %s6, 4
      %s79 = int_to_ptr.hbm [resolvable:$true] %s78
      %s80 = sshll.u32 [#allocation9], 4
      %s81 = int_to_ptr.vmem [resolvable:$true] %s80
      %86 = dma.hbm_to_vmem [thread:$0]  %s79, 4096, %s81, [#allocation8], 256, 256, 16
    $region29: #{tag_mapping_net_forward.1} parent=1 // pred_fallthru
      _
    // Predicated region
    $region30: #{tag_mapping_net_forward.1} parent=1 // pred_check
      _
    $region31: #{tag_mapping_net_forward.1} parent=1 // pred_check_branch
      %88 = sbr.rel (0) target = $region33
    $region32: #{tag_mapping_net_forward.1} parent=1 // pred_region
      %90 = vsyncadd [#allocation11], 0
      %s92 = sshll.u32 %s7, 4
      %s93 = int_to_ptr.hbm [resolvable:$true] %s92
      %s94 = sshll.u32 [#allocation10], 4
      %s95 = int_to_ptr.vmem [resolvable:$true] %s94
      %97 = dma.hbm_to_vmem [thread:$0]  %s93, 64, %s95, [#allocation11]
    $region33: #{tag_mapping_net_forward.1} parent=1 // pred_fallthru
      _
    // Predicated region
    $region34: #{tag_mapping_net_forward.1} parent=1 // pred_check
      _
    $region35: #{tag_mapping_net_forward.1} parent=1 // pred_check_branch
      %99 = sbr.rel (0) target = $region37
    $region36: #{tag_mapping_net_forward.1} parent=1 // pred_region
      %101 = vsyncadd [#allocation11], 0
      %s102 = sshll.u32 %s8, 4
      %s103 = int_to_ptr.hbm [resolvable:$true] %s102
      %s104 = sshll.u32 [#allocation12], 4
      %s105 = int_to_ptr.vmem [resolvable:$true] %s104
      %110 = dma.hbm_to_vmem [thread:$0]  %s103, 16384, %s105, [#allocation11], 256, 256, 16
    $region37: #{tag_mapping_net_forward.1} parent=1 // pred_fallthru
      _
    // Predicated region
    $region38: #{tag_mapping_net_forward.1} parent=1 // pred_check
      _
    $region39: #{tag_mapping_net_forward.1} parent=1 // pred_check_branch
      %112 = sbr.rel (0) target = $region41
    $region40: #{tag_mapping_net_forward.1} parent=1 // pred_region
      %114 = vsyncadd [#allocation14], 0
      %s116 = sshll.u32 %s9, 4
      %s117 = int_to_ptr.hbm [resolvable:$true] %s116
      %s118 = sshll.u32 [#allocation13], 4
      %s119 = int_to_ptr.vmem [resolvable:$true] %s118
      %121 = dma.hbm_to_vmem [thread:$0]  %s117, 64, %s119, [#allocation14]
    $region41: #{tag_mapping_net_forward.1} parent=1 // pred_fallthru
      _
    // Predicated region
    $region42: #{tag_mapping_net_forward.1} parent=1 // pred_check
      _
    $region43: #{tag_mapping_net_forward.1} parent=1 // pred_check_branch
      %123 = sbr.rel (0) target = $region45
    $region44: #{tag_mapping_net_forward.1} parent=1 // pred_region
      %125 = dma.done [#allocation3], 32768
    $region45: #{tag_mapping_net_forward.1} parent=1 // pred_fallthru
      _
    // Predicated region
    $region46: #{tag_mapping_net_forward.1} parent=1 // pred_check
      _
    $region47: #{tag_mapping_net_forward.1} parent=1 // pred_check_branch
      %127 = sbr.rel (0) target = $region49
    $region48: #{tag_mapping_net_forward.1} parent=1 // pred_region
      %129 = dma.done [#allocation5], 128
    $region49: #{tag_mapping_net_forward.1} parent=1 // pred_fallthru
      _
    // Predicated region
    $region50: #{tag_mapping_net_forward.1} parent=1 // pred_check
      _
    $region51: #{tag_mapping_net_forward.1} parent=1 // pred_check_branch
      %131 = sbr.rel (0) target = $region53
    $region52: #{tag_mapping_net_forward.1} parent=1 // pred_region
      %133 = dma.done [#allocation5], 65536
    $region53: #{tag_mapping_net_forward.1} parent=1 // pred_fallthru
      _
    // Predicated region
    $region54: #{tag_mapping_net_forward.1} parent=1 // pred_check
      _
    $region55: #{tag_mapping_net_forward.1} parent=1 // pred_check_branch
      %135 = sbr.rel (0) target = $region57
    $region56: #{tag_mapping_net_forward.1} parent=1 // pred_region
      %137 = dma.done [#allocation8], 128
    $region57: #{tag_mapping_net_forward.1} parent=1 // pred_fallthru
      _
    // Predicated region
    $region58: #{tag_mapping_net_forward.1} parent=1 // pred_check
      _
    $region59: #{tag_mapping_net_forward.1} parent=1 // pred_check_branch
      %139 = sbr.rel (0) target = $region61
    $region60: #{tag_mapping_net_forward.1} parent=1 // pred_region
      %141 = dma.done [#allocation8], 4096
    $region61: #{tag_mapping_net_forward.1} parent=1 // pred_fallthru
      _
    // Predicated region
    $region62: #{tag_mapping_net_forward.1} parent=1 // pred_check
      _
    $region63: #{tag_mapping_net_forward.1} parent=1 // pred_check_branch
      %143 = sbr.rel (0) target = $region65
    $region64: #{tag_mapping_net_forward.1} parent=1 // pred_region
      %145 = dma.done [#allocation11], 64
    $region65: #{tag_mapping_net_forward.1} parent=1 // pred_fallthru
      _
    // Predicated region
    $region66: #{tag_mapping_net_forward.1} parent=1 // pred_check
      _
    $region67: #{tag_mapping_net_forward.1} parent=1 // pred_check_branch
      %147 = sbr.rel (0) target = $region69
    $region68: #{tag_mapping_net_forward.1} parent=1 // pred_region
      %149 = dma.done [#allocation11], 16384
    $region69: #{tag_mapping_net_forward.1} parent=1 // pred_fallthru
      _
    // Predicated region
    $region70: #{tag_mapping_net_forward.1} parent=1 // pred_check
      _
    $region71: #{tag_mapping_net_forward.1} parent=1 // pred_check_branch
      %151 = sbr.rel (0) target = $region73
    $region72: #{tag_mapping_net_forward.1} parent=1 // pred_region
      %153 = dma.done [#allocation14], 64
    $region73: #{tag_mapping_net_forward.1} parent=1 // pred_fallthru
      _
    %v154 = vld [vmem:[%s0] sm:$0xff]
    %v155 = vld [vmem:[%s0 + $0x8] sm:$0xff]
    %v156 = vld [vmem:[%s0 + $0x10] sm:$0xff]
    %v157 = vld [vmem:[%s0 + $0x18] sm:$0xff]
    %v158 = vpack.c.bf16 %v154, %v154
    %v159 = vpack.c.bf16 %v155, %v155
    %v160 = vpack.c.bf16 %v156, %v156
    %v161 = vpack.c.bf16 %v157, %v157
    %v162 = vld [vmem:[#allocation2] sm:$0xff]
    %v163 = vld [vmem:[#allocation2 + $0x8] sm:$0xff]
    %v164 = vld [vmem:[#allocation2 + $0x10] sm:$0xff]
    %v165 = vld [vmem:[#allocation2 + $0x18] sm:$0xff]
    %v166 = vld [vmem:[#allocation2 + $0x20] sm:$0xff]
    %v167 = vld [vmem:[#allocation2 + $0x28] sm:$0xff]
    %v168 = vld [vmem:[#allocation2 + $0x30] sm:$0xff]
    %v169 = vld [vmem:[#allocation2 + $0x38] sm:$0xff]
    %v170 = vld [vmem:[#allocation2 + $0x40] sm:$0xff]
    %v171 = vld [vmem:[#allocation2 + $0x48] sm:$0xff]
    %v172 = vld [vmem:[#allocation2 + $0x50] sm:$0xff]
    %v173 = vld [vmem:[#allocation2 + $0x58] sm:$0xff]
    %v174 = vld [vmem:[#allocation2 + $0x60] sm:$0xff]
    %v175 = vld [vmem:[#allocation2 + $0x68] sm:$0xff]
    %v176 = vld [vmem:[#allocation2 + $0x70] sm:$0xff]
    %v177 = vld [vmem:[#allocation2 + $0x78] sm:$0xff]
    %v178 = vld [vmem:[#allocation2 + $0x80] sm:$0xff]
    %v179 = vld [vmem:[#allocation2 + $0x88] sm:$0xff]
    %v180 = vld [vmem:[#allocation2 + $0x90] sm:$0xff]
    %v181 = vld [vmem:[#allocation2 + $0x98] sm:$0xff]
    %v182 = vld [vmem:[#allocation2 + $0xa0] sm:$0xff]
    %v183 = vld [vmem:[#allocation2 + $0xa8] sm:$0xff]
    %v184 = vld [vmem:[#allocation2 + $0xb0] sm:$0xff]
    %v185 = vld [vmem:[#allocation2 + $0xb8] sm:$0xff]
    %v186 = vld [vmem:[#allocation2 + $0xc0] sm:$0xff]
    %v187 = vld [vmem:[#allocation2 + $0xc8] sm:$0xff]
    %v188 = vld [vmem:[#allocation2 + $0xd0] sm:$0xff]
    %v189 = vld [vmem:[#allocation2 + $0xd8] sm:$0xff]
    %v190 = vld [vmem:[#allocation2 + $0xe0] sm:$0xff]
    %v191 = vld [vmem:[#allocation2 + $0xe8] sm:$0xff]
    %v192 = vld [vmem:[#allocation2 + $0xf0] sm:$0xff]
    %v193 = vld [vmem:[#allocation2 + $0xf8] sm:$0xff]
    %v194 = vld [vmem:[#allocation2 + $0x100] sm:$0xff]
    %v195 = vld [vmem:[#allocation2 + $0x108] sm:$0xff]
    %v196 = vld [vmem:[#allocation2 + $0x110] sm:$0xff]
    %v197 = vld [vmem:[#allocation2 + $0x118] sm:$0xff]
    %v198 = vld [vmem:[#allocation2 + $0x120] sm:$0xff]
    %v199 = vld [vmem:[#allocation2 + $0x128] sm:$0xff]
    %v200 = vld [vmem:[#allocation2 + $0x130] sm:$0xff]
    %v201 = vld [vmem:[#allocation2 + $0x138] sm:$0xff]
    %v202 = vld [vmem:[#allocation2 + $0x140] sm:$0xff]
    %v203 = vld [vmem:[#allocation2 + $0x148] sm:$0xff]
    %v204 = vld [vmem:[#allocation2 + $0x150] sm:$0xff]
    %v205 = vld [vmem:[#allocation2 + $0x158] sm:$0xff]
    %v206 = vld [vmem:[#allocation2 + $0x160] sm:$0xff]
    %v207 = vld [vmem:[#allocation2 + $0x168] sm:$0xff]
    %v208 = vld [vmem:[#allocation2 + $0x170] sm:$0xff]
    %v209 = vld [vmem:[#allocation2 + $0x178] sm:$0xff]
    %v210 = vld [vmem:[#allocation2 + $0x180] sm:$0xff]
    %v211 = vld [vmem:[#allocation2 + $0x188] sm:$0xff]
    %v212 = vld [vmem:[#allocation2 + $0x190] sm:$0xff]
    %v213 = vld [vmem:[#allocation2 + $0x198] sm:$0xff]
    %v214 = vld [vmem:[#allocation2 + $0x1a0] sm:$0xff]
    %v215 = vld [vmem:[#allocation2 + $0x1a8] sm:$0xff]
    %v216 = vld [vmem:[#allocation2 + $0x1b0] sm:$0xff]
    %v217 = vld [vmem:[#allocation2 + $0x1b8] sm:$0xff]
    %v218 = vld [vmem:[#allocation2 + $0x1c0] sm:$0xff]
    %v219 = vld [vmem:[#allocation2 + $0x1c8] sm:$0xff]
    %v220 = vld [vmem:[#allocation2 + $0x1d0] sm:$0xff]
    %v221 = vld [vmem:[#allocation2 + $0x1d8] sm:$0xff]
    %v222 = vld [vmem:[#allocation2 + $0x1e0] sm:$0xff]
    %v223 = vld [vmem:[#allocation2 + $0x1e8] sm:$0xff]
    %v224 = vld [vmem:[#allocation2 + $0x1f0] sm:$0xff]
    %v225 = vld [vmem:[#allocation2 + $0x1f8] sm:$0xff]
    %v226 = vld [vmem:[#allocation2 + $0x200] sm:$0xff]
    %v227 = vld [vmem:[#allocation2 + $0x208] sm:$0xff]
    %v228 = vld [vmem:[#allocation2 + $0x210] sm:$0xff]
    %v229 = vld [vmem:[#allocation2 + $0x218] sm:$0xff]
    %v230 = vld [vmem:[#allocation2 + $0x220] sm:$0xff]
    %v231 = vld [vmem:[#allocation2 + $0x228] sm:$0xff]
    %v232 = vld [vmem:[#allocation2 + $0x230] sm:$0xff]
    %v233 = vld [vmem:[#allocation2 + $0x238] sm:$0xff]
    %v234 = vld [vmem:[#allocation2 + $0x240] sm:$0xff]
    %v235 = vld [vmem:[#allocation2 + $0x248] sm:$0xff]
    %v236 = vld [vmem:[#allocation2 + $0x250] sm:$0xff]
    %v237 = vld [vmem:[#allocation2 + $0x258] sm:$0xff]
    %v238 = vld [vmem:[#allocation2 + $0x260] sm:$0xff]
    %v239 = vld [vmem:[#allocation2 + $0x268] sm:$0xff]
    %v240 = vld [vmem:[#allocation2 + $0x270] sm:$0xff]
    %v241 = vld [vmem:[#allocation2 + $0x278] sm:$0xff]
    %v242 = vld [vmem:[#allocation2 + $0x280] sm:$0xff]
    %v243 = vld [vmem:[#allocation2 + $0x288] sm:$0xff]
    %v244 = vld [vmem:[#allocation2 + $0x290] sm:$0xff]
    %v245 = vld [vmem:[#allocation2 + $0x298] sm:$0xff]
    %v246 = vld [vmem:[#allocation2 + $0x2a0] sm:$0xff]
    %v247 = vld [vmem:[#allocation2 + $0x2a8] sm:$0xff]
    %v248 = vld [vmem:[#allocation2 + $0x2b0] sm:$0xff]
    %v249 = vld [vmem:[#allocation2 + $0x2b8] sm:$0xff]
    %v250 = vld [vmem:[#allocation2 + $0x2c0] sm:$0xff]
    %v251 = vld [vmem:[#allocation2 + $0x2c8] sm:$0xff]
    %v252 = vld [vmem:[#allocation2 + $0x2d0] sm:$0xff]
    %v253 = vld [vmem:[#allocation2 + $0x2d8] sm:$0xff]
    %v254 = vld [vmem:[#allocation2 + $0x2e0] sm:$0xff]
    %v255 = vld [vmem:[#allocation2 + $0x2e8] sm:$0xff]
    %v256 = vld [vmem:[#allocation2 + $0x2f0] sm:$0xff]
    %v257 = vld [vmem:[#allocation2 + $0x2f8] sm:$0xff]
    %v258 = vld [vmem:[#allocation2 + $0x300] sm:$0xff]
    %v259 = vld [vmem:[#allocation2 + $0x308] sm:$0xff]
    %v260 = vld [vmem:[#allocation2 + $0x310] sm:$0xff]
    %v261 = vld [vmem:[#allocation2 + $0x318] sm:$0xff]
    %v262 = vld [vmem:[#allocation2 + $0x320] sm:$0xff]
    %v263 = vld [vmem:[#allocation2 + $0x328] sm:$0xff]
    %v264 = vld [vmem:[#allocation2 + $0x330] sm:$0xff]
    %v265 = vld [vmem:[#allocation2 + $0x338] sm:$0xff]
    %v266 = vld [vmem:[#allocation2 + $0x340] sm:$0xff]
    %v267 = vld [vmem:[#allocation2 + $0x348] sm:$0xff]
    %v268 = vld [vmem:[#allocation2 + $0x350] sm:$0xff]
    %v269 = vld [vmem:[#allocation2 + $0x358] sm:$0xff]
    %v270 = vld [vmem:[#allocation2 + $0x360] sm:$0xff]
    %v271 = vld [vmem:[#allocation2 + $0x368] sm:$0xff]
    %v272 = vld [vmem:[#allocation2 + $0x370] sm:$0xff]
    %v273 = vld [vmem:[#allocation2 + $0x378] sm:$0xff]
    %v274 = vld [vmem:[#allocation2 + $0x380] sm:$0xff]
    %v275 = vld [vmem:[#allocation2 + $0x388] sm:$0xff]
    %v276 = vld [vmem:[#allocation2 + $0x390] sm:$0xff]
    %v277 = vld [vmem:[#allocation2 + $0x398] sm:$0xff]
    %v278 = vld [vmem:[#allocation2 + $0x3a0] sm:$0xff]
    %v279 = vld [vmem:[#allocation2 + $0x3a8] sm:$0xff]
    %v280 = vld [vmem:[#allocation2 + $0x3b0] sm:$0xff]
    %v281 = vld [vmem:[#allocation2 + $0x3b8] sm:$0xff]
    %v282 = vld [vmem:[#allocation2 + $0x3c0] sm:$0xff]
    %v283 = vld [vmem:[#allocation2 + $0x3c8] sm:$0xff]
    %v284 = vld [vmem:[#allocation2 + $0x3d0] sm:$0xff]
    %v285 = vld [vmem:[#allocation2 + $0x3d8] sm:$0xff]
    %v286 = vld [vmem:[#allocation2 + $0x3e0] sm:$0xff]
    %v287 = vld [vmem:[#allocation2 + $0x3e8] sm:$0xff]
    %v288 = vld [vmem:[#allocation2 + $0x3f0] sm:$0xff]
    %v289 = vld [vmem:[#allocation2 + $0x3f8] sm:$0xff]
    %v290 = vld [vmem:[#allocation2 + $0x400] sm:$0xff]
    %v291 = vld [vmem:[#allocation2 + $0x408] sm:$0xff]
    %v292 = vld [vmem:[#allocation2 + $0x410] sm:$0xff]
    %v293 = vld [vmem:[#allocation2 + $0x418] sm:$0xff]
    %v294 = vld [vmem:[#allocation2 + $0x420] sm:$0xff]
    %v295 = vld [vmem:[#allocation2 + $0x428] sm:$0xff]
    %v296 = vld [vmem:[#allocation2 + $0x430] sm:$0xff]
    %v297 = vld [vmem:[#allocation2 + $0x438] sm:$0xff]
    %v298 = vld [vmem:[#allocation2 + $0x440] sm:$0xff]
    %v299 = vld [vmem:[#allocation2 + $0x448] sm:$0xff]
    %v300 = vld [vmem:[#allocation2 + $0x450] sm:$0xff]
    %v301 = vld [vmem:[#allocation2 + $0x458] sm:$0xff]
    %v302 = vld [vmem:[#allocation2 + $0x460] sm:$0xff]
    %v303 = vld [vmem:[#allocation2 + $0x468] sm:$0xff]
    %v304 = vld [vmem:[#allocation2 + $0x470] sm:$0xff]
    %v305 = vld [vmem:[#allocation2 + $0x478] sm:$0xff]
    %v306 = vld [vmem:[#allocation2 + $0x480] sm:$0xff]
    %v307 = vld [vmem:[#allocation2 + $0x488] sm:$0xff]
    %v308 = vld [vmem:[#allocation2 + $0x490] sm:$0xff]
    %v309 = vld [vmem:[#allocation2 + $0x498] sm:$0xff]
    %v310 = vld [vmem:[#allocation2 + $0x4a0] sm:$0xff]
    %v311 = vld [vmem:[#allocation2 + $0x4a8] sm:$0xff]
    %v312 = vld [vmem:[#allocation2 + $0x4b0] sm:$0xff]
    %v313 = vld [vmem:[#allocation2 + $0x4b8] sm:$0xff]
    %v314 = vld [vmem:[#allocation2 + $0x4c0] sm:$0xff]
    %v315 = vld [vmem:[#allocation2 + $0x4c8] sm:$0xff]
    %v316 = vld [vmem:[#allocation2 + $0x4d0] sm:$0xff]
    %v317 = vld [vmem:[#allocation2 + $0x4d8] sm:$0xff]
    %v318 = vld [vmem:[#allocation2 + $0x4e0] sm:$0xff]
    %v319 = vld [vmem:[#allocation2 + $0x4e8] sm:$0xff]
    %v320 = vld [vmem:[#allocation2 + $0x4f0] sm:$0xff]
    %v321 = vld [vmem:[#allocation2 + $0x4f8] sm:$0xff]
    %v322 = vld [vmem:[#allocation2 + $0x500] sm:$0xff]
    %v323 = vld [vmem:[#allocation2 + $0x508] sm:$0xff]
    %v324 = vld [vmem:[#allocation2 + $0x510] sm:$0xff]
    %v325 = vld [vmem:[#allocation2 + $0x518] sm:$0xff]
    %v326 = vld [vmem:[#allocation2 + $0x520] sm:$0xff]
    %v327 = vld [vmem:[#allocation2 + $0x528] sm:$0xff]
    %v328 = vld [vmem:[#allocation2 + $0x530] sm:$0xff]
    %v329 = vld [vmem:[#allocation2 + $0x538] sm:$0xff]
    %v330 = vld [vmem:[#allocation2 + $0x540] sm:$0xff]
    %v331 = vld [vmem:[#allocation2 + $0x548] sm:$0xff]
    %v332 = vld [vmem:[#allocation2 + $0x550] sm:$0xff]
    %v333 = vld [vmem:[#allocation2 + $0x558] sm:$0xff]
    %v334 = vld [vmem:[#allocation2 + $0x560] sm:$0xff]
    %v335 = vld [vmem:[#allocation2 + $0x568] sm:$0xff]
    %v336 = vld [vmem:[#allocation2 + $0x570] sm:$0xff]
    %v337 = vld [vmem:[#allocation2 + $0x578] sm:$0xff]
    %v338 = vld [vmem:[#allocation2 + $0x580] sm:$0xff]
    %v339 = vld [vmem:[#allocation2 + $0x588] sm:$0xff]
    %v340 = vld [vmem:[#allocation2 + $0x590] sm:$0xff]
    %v341 = vld [vmem:[#allocation2 + $0x598] sm:$0xff]
    %v342 = vld [vmem:[#allocation2 + $0x5a0] sm:$0xff]
    %v343 = vld [vmem:[#allocation2 + $0x5a8] sm:$0xff]
    %v344 = vld [vmem:[#allocation2 + $0x5b0] sm:$0xff]
    %v345 = vld [vmem:[#allocation2 + $0x5b8] sm:$0xff]
    %v346 = vld [vmem:[#allocation2 + $0x5c0] sm:$0xff]
    %v347 = vld [vmem:[#allocation2 + $0x5c8] sm:$0xff]
    %v348 = vld [vmem:[#allocation2 + $0x5d0] sm:$0xff]
    %v349 = vld [vmem:[#allocation2 + $0x5d8] sm:$0xff]
    %v350 = vld [vmem:[#allocation2 + $0x5e0] sm:$0xff]
    %v351 = vld [vmem:[#allocation2 + $0x5e8] sm:$0xff]
    %v352 = vld [vmem:[#allocation2 + $0x5f0] sm:$0xff]
    %v353 = vld [vmem:[#allocation2 + $0x5f8] sm:$0xff]
    %v354 = vld [vmem:[#allocation2 + $0x600] sm:$0xff]
    %v355 = vld [vmem:[#allocation2 + $0x608] sm:$0xff]
    %v356 = vld [vmem:[#allocation2 + $0x610] sm:$0xff]
    %v357 = vld [vmem:[#allocation2 + $0x618] sm:$0xff]
    %v358 = vld [vmem:[#allocation2 + $0x620] sm:$0xff]
    %v359 = vld [vmem:[#allocation2 + $0x628] sm:$0xff]
    %v360 = vld [vmem:[#allocation2 + $0x630] sm:$0xff]
    %v361 = vld [vmem:[#allocation2 + $0x638] sm:$0xff]
    %v362 = vld [vmem:[#allocation2 + $0x640] sm:$0xff]
    %v363 = vld [vmem:[#allocation2 + $0x648] sm:$0xff]
    %v364 = vld [vmem:[#allocation2 + $0x650] sm:$0xff]
    %v365 = vld [vmem:[#allocation2 + $0x658] sm:$0xff]
    %v366 = vld [vmem:[#allocation2 + $0x660] sm:$0xff]
    %v367 = vld [vmem:[#allocation2 + $0x668] sm:$0xff]
    %v368 = vld [vmem:[#allocation2 + $0x670] sm:$0xff]
    %v369 = vld [vmem:[#allocation2 + $0x678] sm:$0xff]
    %v370 = vld [vmem:[#allocation2 + $0x680] sm:$0xff]
    %v371 = vld [vmem:[#allocation2 + $0x688] sm:$0xff]
    %v372 = vld [vmem:[#allocation2 + $0x690] sm:$0xff]
    %v373 = vld [vmem:[#allocation2 + $0x698] sm:$0xff]
    %v374 = vld [vmem:[#allocation2 + $0x6a0] sm:$0xff]
    %v375 = vld [vmem:[#allocation2 + $0x6a8] sm:$0xff]
    %v376 = vld [vmem:[#allocation2 + $0x6b0] sm:$0xff]
    %v377 = vld [vmem:[#allocation2 + $0x6b8] sm:$0xff]
    %v378 = vld [vmem:[#allocation2 + $0x6c0] sm:$0xff]
    %v379 = vld [vmem:[#allocation2 + $0x6c8] sm:$0xff]
    %v380 = vld [vmem:[#allocation2 + $0x6d0] sm:$0xff]
    %v381 = vld [vmem:[#allocation2 + $0x6d8] sm:$0xff]
    %v382 = vld [vmem:[#allocation2 + $0x6e0] sm:$0xff]
    %v383 = vld [vmem:[#allocation2 + $0x6e8] sm:$0xff]
    %v384 = vld [vmem:[#allocation2 + $0x6f0] sm:$0xff]
    %v385 = vld [vmem:[#allocation2 + $0x6f8] sm:$0xff]
    %v386 = vld [vmem:[#allocation2 + $0x700] sm:$0xff]
    %v387 = vld [vmem:[#allocation2 + $0x708] sm:$0xff]
    %v388 = vld [vmem:[#allocation2 + $0x710] sm:$0xff]
    %v389 = vld [vmem:[#allocation2 + $0x718] sm:$0xff]
    %v390 = vld [vmem:[#allocation2 + $0x720] sm:$0xff]
    %v391 = vld [vmem:[#allocation2 + $0x728] sm:$0xff]
    %v392 = vld [vmem:[#allocation2 + $0x730] sm:$0xff]
    %v393 = vld [vmem:[#allocation2 + $0x738] sm:$0xff]
    %v394 = vld [vmem:[#allocation2 + $0x740] sm:$0xff]
    %v395 = vld [vmem:[#allocation2 + $0x748] sm:$0xff]
    %v396 = vld [vmem:[#allocation2 + $0x750] sm:$0xff]
    %v397 = vld [vmem:[#allocation2 + $0x758] sm:$0xff]
    %v398 = vld [vmem:[#allocation2 + $0x760] sm:$0xff]
    %v399 = vld [vmem:[#allocation2 + $0x768] sm:$0xff]
    %v400 = vld [vmem:[#allocation2 + $0x770] sm:$0xff]
    %v401 = vld [vmem:[#allocation2 + $0x778] sm:$0xff]
    %v402 = vld [vmem:[#allocation2 + $0x780] sm:$0xff]
    %v403 = vld [vmem:[#allocation2 + $0x788] sm:$0xff]
    %v404 = vld [vmem:[#allocation2 + $0x790] sm:$0xff]
    %v405 = vld [vmem:[#allocation2 + $0x798] sm:$0xff]
    %v406 = vld [vmem:[#allocation2 + $0x7a0] sm:$0xff]
    %v407 = vld [vmem:[#allocation2 + $0x7a8] sm:$0xff]
    %v408 = vld [vmem:[#allocation2 + $0x7b0] sm:$0xff]
    %v409 = vld [vmem:[#allocation2 + $0x7b8] sm:$0xff]
    %v410 = vld [vmem:[#allocation2 + $0x7c0] sm:$0xff]
    %v411 = vld [vmem:[#allocation2 + $0x7c8] sm:$0xff]
    %v412 = vld [vmem:[#allocation2 + $0x7d0] sm:$0xff]
    %v413 = vld [vmem:[#allocation2 + $0x7d8] sm:$0xff]
    %v414 = vld [vmem:[#allocation2 + $0x7e0] sm:$0xff]
    %v415 = vld [vmem:[#allocation2 + $0x7e8] sm:$0xff]
    %v416 = vld [vmem:[#allocation2 + $0x7f0] sm:$0xff]
    %v417 = vld [vmem:[#allocation2 + $0x7f8] sm:$0xff]
    %v418 = vld [vmem:[#allocation4] sm:$0xff]
    %v420 = vperm.slane %v418, 0
    %v421 = vperm.slane %v418, 1
    %v422 = vperm.slane %v418, 2
    %v423 = vperm.slane %v418, 3
    %v424 = vperm.slane %v418, 4
    %v425 = vperm.slane %v418, 5
    %v426 = vperm.slane %v418, 6
    %v427 = vperm.slane %v418, 7
    %v692 = vunpack.c.l.b16 %v162
    %v693 = vunpack.c.h.b16 %v162
    %v694 = vunpack.c.l.b16 %v163
    %v695 = vunpack.c.h.b16 %v163
    %v696 = vunpack.c.l.b16 %v164
    %v697 = vunpack.c.h.b16 %v164
    %v698 = vunpack.c.l.b16 %v165
    %v699 = vunpack.c.h.b16 %v165
    %v700 = vunpack.c.l.b16 %v166
    %v701 = vunpack.c.h.b16 %v166
    %v702 = vunpack.c.l.b16 %v167
    %v703 = vunpack.c.h.b16 %v167
    %v704 = vunpack.c.l.b16 %v168
    %v705 = vunpack.c.h.b16 %v168
    %v706 = vunpack.c.l.b16 %v169
    %v707 = vunpack.c.h.b16 %v169
    %v708 = vunpack.c.l.b16 %v170
    %v709 = vunpack.c.h.b16 %v170
    %v710 = vunpack.c.l.b16 %v171
    %v711 = vunpack.c.h.b16 %v171
    %v712 = vunpack.c.l.b16 %v172
    %v713 = vunpack.c.h.b16 %v172
    %v714 = vunpack.c.l.b16 %v173
    %v715 = vunpack.c.h.b16 %v173
    %v716 = vunpack.c.l.b16 %v174
    %v717 = vunpack.c.h.b16 %v174
    %v718 = vunpack.c.l.b16 %v175
    %v719 = vunpack.c.h.b16 %v175
    %v720 = vunpack.c.l.b16 %v176
    %v721 = vunpack.c.h.b16 %v176
    %v722 = vunpack.c.l.b16 %v177
    %v723 = vunpack.c.h.b16 %v177
    %v724 = vunpack.c.l.b16 %v178
    %v725 = vunpack.c.h.b16 %v178
    %v726 = vunpack.c.l.b16 %v179
    %v727 = vunpack.c.h.b16 %v179
    %v728 = vunpack.c.l.b16 %v180
    %v729 = vunpack.c.h.b16 %v180
    %v730 = vunpack.c.l.b16 %v181
    %v731 = vunpack.c.h.b16 %v181
    %v732 = vunpack.c.l.b16 %v182
    %v733 = vunpack.c.h.b16 %v182
    %v734 = vunpack.c.l.b16 %v183
    %v735 = vunpack.c.h.b16 %v183
    %v736 = vunpack.c.l.b16 %v184
    %v737 = vunpack.c.h.b16 %v184
    %v738 = vunpack.c.l.b16 %v185
    %v739 = vunpack.c.h.b16 %v185
    %v740 = vunpack.c.l.b16 %v186
    %v741 = vunpack.c.h.b16 %v186
    %v742 = vunpack.c.l.b16 %v187
    %v743 = vunpack.c.h.b16 %v187
    %v744 = vunpack.c.l.b16 %v188
    %v745 = vunpack.c.h.b16 %v188
    %v746 = vunpack.c.l.b16 %v189
    %v747 = vunpack.c.h.b16 %v189
    %v748 = vunpack.c.l.b16 %v190
    %v749 = vunpack.c.h.b16 %v190
    %v750 = vunpack.c.l.b16 %v191
    %v751 = vunpack.c.h.b16 %v191
    %v752 = vunpack.c.l.b16 %v192
    %v753 = vunpack.c.h.b16 %v192
    %v754 = vunpack.c.l.b16 %v193
    %v755 = vunpack.c.h.b16 %v193
    %v756 = vunpack.c.l.b16 %v194
    %v757 = vunpack.c.h.b16 %v194
    %v758 = vunpack.c.l.b16 %v195
    %v759 = vunpack.c.h.b16 %v195
    %v760 = vunpack.c.l.b16 %v196
    %v761 = vunpack.c.h.b16 %v196
    %v762 = vunpack.c.l.b16 %v197
    %v763 = vunpack.c.h.b16 %v197
    %v764 = vunpack.c.l.b16 %v198
    %v765 = vunpack.c.h.b16 %v198
    %v766 = vunpack.c.l.b16 %v199
    %v767 = vunpack.c.h.b16 %v199
    %v768 = vunpack.c.l.b16 %v200
    %v769 = vunpack.c.h.b16 %v200
    %v770 = vunpack.c.l.b16 %v201
    %v771 = vunpack.c.h.b16 %v201
    %v772 = vunpack.c.l.b16 %v202
    %v773 = vunpack.c.h.b16 %v202
    %v774 = vunpack.c.l.b16 %v203
    %v775 = vunpack.c.h.b16 %v203
    %v776 = vunpack.c.l.b16 %v204
    %v777 = vunpack.c.h.b16 %v204
    %v778 = vunpack.c.l.b16 %v205
    %v779 = vunpack.c.h.b16 %v205
    %v780 = vunpack.c.l.b16 %v206
    %v781 = vunpack.c.h.b16 %v206
    %v782 = vunpack.c.l.b16 %v207
    %v783 = vunpack.c.h.b16 %v207
    %v784 = vunpack.c.l.b16 %v208
    %v785 = vunpack.c.h.b16 %v208
    %v786 = vunpack.c.l.b16 %v209
    %v787 = vunpack.c.h.b16 %v209
    %v788 = vunpack.c.l.b16 %v210
    %v789 = vunpack.c.h.b16 %v210
    %v790 = vunpack.c.l.b16 %v211
    %v791 = vunpack.c.h.b16 %v211
    %v792 = vunpack.c.l.b16 %v212
    %v793 = vunpack.c.h.b16 %v212
    %v794 = vunpack.c.l.b16 %v213
    %v795 = vunpack.c.h.b16 %v213
    %v796 = vunpack.c.l.b16 %v214
    %v797 = vunpack.c.h.b16 %v214
    %v798 = vunpack.c.l.b16 %v215
    %v799 = vunpack.c.h.b16 %v215
    %v800 = vunpack.c.l.b16 %v216
    %v801 = vunpack.c.h.b16 %v216
    %v802 = vunpack.c.l.b16 %v217
    %v803 = vunpack.c.h.b16 %v217
    %v804 = vunpack.c.l.b16 %v218
    %v805 = vunpack.c.h.b16 %v218
    %v806 = vunpack.c.l.b16 %v219
    %v807 = vunpack.c.h.b16 %v219
    %v808 = vunpack.c.l.b16 %v220
    %v809 = vunpack.c.h.b16 %v220
    %v810 = vunpack.c.l.b16 %v221
    %v811 = vunpack.c.h.b16 %v221
    %v812 = vunpack.c.l.b16 %v222
    %v813 = vunpack.c.h.b16 %v222
    %v814 = vunpack.c.l.b16 %v223
    %v815 = vunpack.c.h.b16 %v223
    %v816 = vunpack.c.l.b16 %v224
    %v817 = vunpack.c.h.b16 %v224
    %v818 = vunpack.c.l.b16 %v225
    %v819 = vunpack.c.h.b16 %v225
    %v820 = vunpack.c.l.b16 %v226
    %v821 = vunpack.c.h.b16 %v226
    %v822 = vunpack.c.l.b16 %v227
    %v823 = vunpack.c.h.b16 %v227
    %v824 = vunpack.c.l.b16 %v228
    %v825 = vunpack.c.h.b16 %v228
    %v826 = vunpack.c.l.b16 %v229
    %v827 = vunpack.c.h.b16 %v229
    %v828 = vunpack.c.l.b16 %v230
    %v829 = vunpack.c.h.b16 %v230
    %v830 = vunpack.c.l.b16 %v231
    %v831 = vunpack.c.h.b16 %v231
    %v832 = vunpack.c.l.b16 %v232
    %v833 = vunpack.c.h.b16 %v232
    %v834 = vunpack.c.l.b16 %v233
    %v835 = vunpack.c.h.b16 %v233
    %v836 = vunpack.c.l.b16 %v234
    %v837 = vunpack.c.h.b16 %v234
    %v838 = vunpack.c.l.b16 %v235
    %v839 = vunpack.c.h.b16 %v235
    %v840 = vunpack.c.l.b16 %v236
    %v841 = vunpack.c.h.b16 %v236
    %v842 = vunpack.c.l.b16 %v237
    %v843 = vunpack.c.h.b16 %v237
    %v844 = vunpack.c.l.b16 %v238
    %v845 = vunpack.c.h.b16 %v238
    %v846 = vunpack.c.l.b16 %v239
    %v847 = vunpack.c.h.b16 %v239
    %v848 = vunpack.c.l.b16 %v240
    %v849 = vunpack.c.h.b16 %v240
    %v850 = vunpack.c.l.b16 %v241
    %v851 = vunpack.c.h.b16 %v241
    %v852 = vunpack.c.l.b16 %v242
    %v853 = vunpack.c.h.b16 %v242
    %v854 = vunpack.c.l.b16 %v243
    %v855 = vunpack.c.h.b16 %v243
    %v856 = vunpack.c.l.b16 %v244
    %v857 = vunpack.c.h.b16 %v244
    %v858 = vunpack.c.l.b16 %v245
    %v859 = vunpack.c.h.b16 %v245
    %v860 = vunpack.c.l.b16 %v246
    %v861 = vunpack.c.h.b16 %v246
    %v862 = vunpack.c.l.b16 %v247
    %v863 = vunpack.c.h.b16 %v247
    %v864 = vunpack.c.l.b16 %v248
    %v865 = vunpack.c.h.b16 %v248
    %v866 = vunpack.c.l.b16 %v249
    %v867 = vunpack.c.h.b16 %v249
    %v868 = vunpack.c.l.b16 %v250
    %v869 = vunpack.c.h.b16 %v250
    %v870 = vunpack.c.l.b16 %v251
    %v871 = vunpack.c.h.b16 %v251
    %v872 = vunpack.c.l.b16 %v252
    %v873 = vunpack.c.h.b16 %v252
    %v874 = vunpack.c.l.b16 %v253
    %v875 = vunpack.c.h.b16 %v253
    %v876 = vunpack.c.l.b16 %v254
    %v877 = vunpack.c.h.b16 %v254
    %v878 = vunpack.c.l.b16 %v255
    %v879 = vunpack.c.h.b16 %v255
    %v880 = vunpack.c.l.b16 %v256
    %v881 = vunpack.c.h.b16 %v256
    %v882 = vunpack.c.l.b16 %v257
    %v883 = vunpack.c.h.b16 %v257
    %v884 = vunpack.c.l.b16 %v258
    %v885 = vunpack.c.h.b16 %v258
    %v886 = vunpack.c.l.b16 %v259
    %v887 = vunpack.c.h.b16 %v259
    %v888 = vunpack.c.l.b16 %v260
    %v889 = vunpack.c.h.b16 %v260
    %v890 = vunpack.c.l.b16 %v261
    %v891 = vunpack.c.h.b16 %v261
    %v892 = vunpack.c.l.b16 %v262
    %v893 = vunpack.c.h.b16 %v262
    %v894 = vunpack.c.l.b16 %v263
    %v895 = vunpack.c.h.b16 %v263
    %v896 = vunpack.c.l.b16 %v264
    %v897 = vunpack.c.h.b16 %v264
    %v898 = vunpack.c.l.b16 %v265
    %v899 = vunpack.c.h.b16 %v265
    %v900 = vunpack.c.l.b16 %v266
    %v901 = vunpack.c.h.b16 %v266
    %v902 = vunpack.c.l.b16 %v267
    %v903 = vunpack.c.h.b16 %v267
    %v904 = vunpack.c.l.b16 %v268
    %v905 = vunpack.c.h.b16 %v268
    %v906 = vunpack.c.l.b16 %v269
    %v907 = vunpack.c.h.b16 %v269
    %v908 = vunpack.c.l.b16 %v270
    %v909 = vunpack.c.h.b16 %v270
    %v910 = vunpack.c.l.b16 %v271
    %v911 = vunpack.c.h.b16 %v271
    %v912 = vunpack.c.l.b16 %v272
    %v913 = vunpack.c.h.b16 %v272
    %v914 = vunpack.c.l.b16 %v273
    %v915 = vunpack.c.h.b16 %v273
    %v916 = vunpack.c.l.b16 %v274
    %v917 = vunpack.c.h.b16 %v274
    %v918 = vunpack.c.l.b16 %v275
    %v919 = vunpack.c.h.b16 %v275
    %v920 = vunpack.c.l.b16 %v276
    %v921 = vunpack.c.h.b16 %v276
    %v922 = vunpack.c.l.b16 %v277
    %v923 = vunpack.c.h.b16 %v277
    %v924 = vunpack.c.l.b16 %v278
    %v925 = vunpack.c.h.b16 %v278
    %v926 = vunpack.c.l.b16 %v279
    %v927 = vunpack.c.h.b16 %v279
    %v928 = vunpack.c.l.b16 %v280
    %v929 = vunpack.c.h.b16 %v280
    %v930 = vunpack.c.l.b16 %v281
    %v931 = vunpack.c.h.b16 %v281
    %v932 = vunpack.c.l.b16 %v282
    %v933 = vunpack.c.h.b16 %v282
    %v934 = vunpack.c.l.b16 %v283
    %v935 = vunpack.c.h.b16 %v283
    %v936 = vunpack.c.l.b16 %v284
    %v937 = vunpack.c.h.b16 %v284
    %v938 = vunpack.c.l.b16 %v285
    %v939 = vunpack.c.h.b16 %v285
    %v940 = vunpack.c.l.b16 %v286
    %v941 = vunpack.c.h.b16 %v286
    %v942 = vunpack.c.l.b16 %v287
    %v943 = vunpack.c.h.b16 %v287
    %v944 = vunpack.c.l.b16 %v288
    %v945 = vunpack.c.h.b16 %v288
    %v946 = vunpack.c.l.b16 %v289
    %v947 = vunpack.c.h.b16 %v289
    %v948 = vunpack.c.l.b16 %v290
    %v949 = vunpack.c.h.b16 %v290
    %v950 = vunpack.c.l.b16 %v291
    %v951 = vunpack.c.h.b16 %v291
    %v952 = vunpack.c.l.b16 %v292
    %v953 = vunpack.c.h.b16 %v292
    %v954 = vunpack.c.l.b16 %v293
    %v955 = vunpack.c.h.b16 %v293
    %v956 = vunpack.c.l.b16 %v294
    %v957 = vunpack.c.h.b16 %v294
    %v958 = vunpack.c.l.b16 %v295
    %v959 = vunpack.c.h.b16 %v295
    %v960 = vunpack.c.l.b16 %v296
    %v961 = vunpack.c.h.b16 %v296
    %v962 = vunpack.c.l.b16 %v297
    %v963 = vunpack.c.h.b16 %v297
    %v964 = vunpack.c.l.b16 %v298
    %v965 = vunpack.c.h.b16 %v298
    %v966 = vunpack.c.l.b16 %v299
    %v967 = vunpack.c.h.b16 %v299
    %v968 = vunpack.c.l.b16 %v300
    %v969 = vunpack.c.h.b16 %v300
    %v970 = vunpack.c.l.b16 %v301
    %v971 = vunpack.c.h.b16 %v301
    %v972 = vunpack.c.l.b16 %v302
    %v973 = vunpack.c.h.b16 %v302
    %v974 = vunpack.c.l.b16 %v303
    %v975 = vunpack.c.h.b16 %v303
    %v976 = vunpack.c.l.b16 %v304
    %v977 = vunpack.c.h.b16 %v304
    %v978 = vunpack.c.l.b16 %v305
    %v979 = vunpack.c.h.b16 %v305
    %v980 = vunpack.c.l.b16 %v306
    %v981 = vunpack.c.h.b16 %v306
    %v982 = vunpack.c.l.b16 %v307
    %v983 = vunpack.c.h.b16 %v307
    %v984 = vunpack.c.l.b16 %v308
    %v985 = vunpack.c.h.b16 %v308
    %v986 = vunpack.c.l.b16 %v309
    %v987 = vunpack.c.h.b16 %v309
    %v988 = vunpack.c.l.b16 %v310
    %v989 = vunpack.c.h.b16 %v310
    %v990 = vunpack.c.l.b16 %v311
    %v991 = vunpack.c.h.b16 %v311
    %v992 = vunpack.c.l.b16 %v312
    %v993 = vunpack.c.h.b16 %v312
    %v994 = vunpack.c.l.b16 %v313
    %v995 = vunpack.c.h.b16 %v313
    %v996 = vunpack.c.l.b16 %v314
    %v997 = vunpack.c.h.b16 %v314
    %v998 = vunpack.c.l.b16 %v315
    %v999 = vunpack.c.h.b16 %v315
    %v1000 = vunpack.c.l.b16 %v316
    %v1001 = vunpack.c.h.b16 %v316
    %v1002 = vunpack.c.l.b16 %v317
    %v1003 = vunpack.c.h.b16 %v317
    %v1004 = vunpack.c.l.b16 %v318
    %v1005 = vunpack.c.h.b16 %v318
    %v1006 = vunpack.c.l.b16 %v319
    %v1007 = vunpack.c.h.b16 %v319
    %v1008 = vunpack.c.l.b16 %v320
    %v1009 = vunpack.c.h.b16 %v320
    %v1010 = vunpack.c.l.b16 %v321
    %v1011 = vunpack.c.h.b16 %v321
    %v1012 = vunpack.c.l.b16 %v322
    %v1013 = vunpack.c.h.b16 %v322
    %v1014 = vunpack.c.l.b16 %v323
    %v1015 = vunpack.c.h.b16 %v323
    %v1016 = vunpack.c.l.b16 %v324
    %v1017 = vunpack.c.h.b16 %v324
    %v1018 = vunpack.c.l.b16 %v325
    %v1019 = vunpack.c.h.b16 %v325
    %v1020 = vunpack.c.l.b16 %v326
    %v1021 = vunpack.c.h.b16 %v326
    %v1022 = vunpack.c.l.b16 %v327
    %v1023 = vunpack.c.h.b16 %v327
    %v1024 = vunpack.c.l.b16 %v328
    %v1025 = vunpack.c.h.b16 %v328
    %v1026 = vunpack.c.l.b16 %v329
    %v1027 = vunpack.c.h.b16 %v329
    %v1028 = vunpack.c.l.b16 %v330
    %v1029 = vunpack.c.h.b16 %v330
    %v1030 = vunpack.c.l.b16 %v331
    %v1031 = vunpack.c.h.b16 %v331
    %v1032 = vunpack.c.l.b16 %v332
    %v1033 = vunpack.c.h.b16 %v332
    %v1034 = vunpack.c.l.b16 %v333
    %v1035 = vunpack.c.h.b16 %v333
    %v1036 = vunpack.c.l.b16 %v334
    %v1037 = vunpack.c.h.b16 %v334
    %v1038 = vunpack.c.l.b16 %v335
    %v1039 = vunpack.c.h.b16 %v335
    %v1040 = vunpack.c.l.b16 %v336
    %v1041 = vunpack.c.h.b16 %v336
    %v1042 = vunpack.c.l.b16 %v337
    %v1043 = vunpack.c.h.b16 %v337
    %v1044 = vunpack.c.l.b16 %v338
    %v1045 = vunpack.c.h.b16 %v338
    %v1046 = vunpack.c.l.b16 %v339
    %v1047 = vunpack.c.h.b16 %v339
    %v1048 = vunpack.c.l.b16 %v340
    %v1049 = vunpack.c.h.b16 %v340
    %v1050 = vunpack.c.l.b16 %v341
    %v1051 = vunpack.c.h.b16 %v341
    %v1052 = vunpack.c.l.b16 %v342
    %v1053 = vunpack.c.h.b16 %v342
    %v1054 = vunpack.c.l.b16 %v343
    %v1055 = vunpack.c.h.b16 %v343
    %v1056 = vunpack.c.l.b16 %v344
    %v1057 = vunpack.c.h.b16 %v344
    %v1058 = vunpack.c.l.b16 %v345
    %v1059 = vunpack.c.h.b16 %v345
    %v1060 = vunpack.c.l.b16 %v346
    %v1061 = vunpack.c.h.b16 %v346
    %v1062 = vunpack.c.l.b16 %v347
    %v1063 = vunpack.c.h.b16 %v347
    %v1064 = vunpack.c.l.b16 %v348
    %v1065 = vunpack.c.h.b16 %v348
    %v1066 = vunpack.c.l.b16 %v349
    %v1067 = vunpack.c.h.b16 %v349
    %v1068 = vunpack.c.l.b16 %v350
    %v1069 = vunpack.c.h.b16 %v350
    %v1070 = vunpack.c.l.b16 %v351
    %v1071 = vunpack.c.h.b16 %v351
    %v1072 = vunpack.c.l.b16 %v352
    %v1073 = vunpack.c.h.b16 %v352
    %v1074 = vunpack.c.l.b16 %v353
    %v1075 = vunpack.c.h.b16 %v353
    %v1076 = vunpack.c.l.b16 %v354
    %v1077 = vunpack.c.h.b16 %v354
    %v1078 = vunpack.c.l.b16 %v355
    %v1079 = vunpack.c.h.b16 %v355
    %v1080 = vunpack.c.l.b16 %v356
    %v1081 = vunpack.c.h.b16 %v356
    %v1082 = vunpack.c.l.b16 %v357
    %v1083 = vunpack.c.h.b16 %v357
    %v1084 = vunpack.c.l.b16 %v358
    %v1085 = vunpack.c.h.b16 %v358
    %v1086 = vunpack.c.l.b16 %v359
    %v1087 = vunpack.c.h.b16 %v359
    %v1088 = vunpack.c.l.b16 %v360
    %v1089 = vunpack.c.h.b16 %v360
    %v1090 = vunpack.c.l.b16 %v361
    %v1091 = vunpack.c.h.b16 %v361
    %v1092 = vunpack.c.l.b16 %v362
    %v1093 = vunpack.c.h.b16 %v362
    %v1094 = vunpack.c.l.b16 %v363
    %v1095 = vunpack.c.h.b16 %v363
    %v1096 = vunpack.c.l.b16 %v364
    %v1097 = vunpack.c.h.b16 %v364
    %v1098 = vunpack.c.l.b16 %v365
    %v1099 = vunpack.c.h.b16 %v365
    %v1100 = vunpack.c.l.b16 %v366
    %v1101 = vunpack.c.h.b16 %v366
    %v1102 = vunpack.c.l.b16 %v367
    %v1103 = vunpack.c.h.b16 %v367
    %v1104 = vunpack.c.l.b16 %v368
    %v1105 = vunpack.c.h.b16 %v368
    %v1106 = vunpack.c.l.b16 %v369
    %v1107 = vunpack.c.h.b16 %v369
    %v1108 = vunpack.c.l.b16 %v370
    %v1109 = vunpack.c.h.b16 %v370
    %v1110 = vunpack.c.l.b16 %v371
    %v1111 = vunpack.c.h.b16 %v371
    %v1112 = vunpack.c.l.b16 %v372
    %v1113 = vunpack.c.h.b16 %v372
    %v1114 = vunpack.c.l.b16 %v373
    %v1115 = vunpack.c.h.b16 %v373
    %v1116 = vunpack.c.l.b16 %v374
    %v1117 = vunpack.c.h.b16 %v374
    %v1118 = vunpack.c.l.b16 %v375
    %v1119 = vunpack.c.h.b16 %v375
    %v1120 = vunpack.c.l.b16 %v376
    %v1121 = vunpack.c.h.b16 %v376
    %v1122 = vunpack.c.l.b16 %v377
    %v1123 = vunpack.c.h.b16 %v377
    %v1124 = vunpack.c.l.b16 %v378
    %v1125 = vunpack.c.h.b16 %v378
    %v1126 = vunpack.c.l.b16 %v379
    %v1127 = vunpack.c.h.b16 %v379
    %v1128 = vunpack.c.l.b16 %v380
    %v1129 = vunpack.c.h.b16 %v380
    %v1130 = vunpack.c.l.b16 %v381
    %v1131 = vunpack.c.h.b16 %v381
    %v1132 = vunpack.c.l.b16 %v382
    %v1133 = vunpack.c.h.b16 %v382
    %v1134 = vunpack.c.l.b16 %v383
    %v1135 = vunpack.c.h.b16 %v383
    %v1136 = vunpack.c.l.b16 %v384
    %v1137 = vunpack.c.h.b16 %v384
    %v1138 = vunpack.c.l.b16 %v385
    %v1139 = vunpack.c.h.b16 %v385
    %v1140 = vunpack.c.l.b16 %v386
    %v1141 = vunpack.c.h.b16 %v386
    %v1142 = vunpack.c.l.b16 %v387
    %v1143 = vunpack.c.h.b16 %v387
    %v1144 = vunpack.c.l.b16 %v388
    %v1145 = vunpack.c.h.b16 %v388
    %v1146 = vunpack.c.l.b16 %v389
    %v1147 = vunpack.c.h.b16 %v389
    %v1148 = vunpack.c.l.b16 %v390
    %v1149 = vunpack.c.h.b16 %v390
    %v1150 = vunpack.c.l.b16 %v391
    %v1151 = vunpack.c.h.b16 %v391
    %v1152 = vunpack.c.l.b16 %v392
    %v1153 = vunpack.c.h.b16 %v392
    %v1154 = vunpack.c.l.b16 %v393
    %v1155 = vunpack.c.h.b16 %v393
    %v1156 = vunpack.c.l.b16 %v394
    %v1157 = vunpack.c.h.b16 %v394
    %v1158 = vunpack.c.l.b16 %v395
    %v1159 = vunpack.c.h.b16 %v395
    %v1160 = vunpack.c.l.b16 %v396
    %v1161 = vunpack.c.h.b16 %v396
    %v1162 = vunpack.c.l.b16 %v397
    %v1163 = vunpack.c.h.b16 %v397
    %v1164 = vunpack.c.l.b16 %v398
    %v1165 = vunpack.c.h.b16 %v398
    %v1166 = vunpack.c.l.b16 %v399
    %v1167 = vunpack.c.h.b16 %v399
    %v1168 = vunpack.c.l.b16 %v400
    %v1169 = vunpack.c.h.b16 %v400
    %v1170 = vunpack.c.l.b16 %v401
    %v1171 = vunpack.c.h.b16 %v401
    %v1172 = vunpack.c.l.b16 %v402
    %v1173 = vunpack.c.h.b16 %v402
    %v1174 = vunpack.c.l.b16 %v403
    %v1175 = vunpack.c.h.b16 %v403
    %v1176 = vunpack.c.l.b16 %v404
    %v1177 = vunpack.c.h.b16 %v404
    %v1178 = vunpack.c.l.b16 %v405
    %v1179 = vunpack.c.h.b16 %v405
    %v1180 = vunpack.c.l.b16 %v406
    %v1181 = vunpack.c.h.b16 %v406
    %v1182 = vunpack.c.l.b16 %v407
    %v1183 = vunpack.c.h.b16 %v407
    %v1184 = vunpack.c.l.b16 %v408
    %v1185 = vunpack.c.h.b16 %v408
    %v1186 = vunpack.c.l.b16 %v409
    %v1187 = vunpack.c.h.b16 %v409
    %v1188 = vunpack.c.l.b16 %v410
    %v1189 = vunpack.c.h.b16 %v410
    %v1190 = vunpack.c.l.b16 %v411
    %v1191 = vunpack.c.h.b16 %v411
    %v1192 = vunpack.c.l.b16 %v412
    %v1193 = vunpack.c.h.b16 %v412
    %v1194 = vunpack.c.l.b16 %v413
    %v1195 = vunpack.c.h.b16 %v413
    %v1196 = vunpack.c.l.b16 %v414
    %v1197 = vunpack.c.h.b16 %v414
    %v1198 = vunpack.c.l.b16 %v415
    %v1199 = vunpack.c.h.b16 %v415
    %v1200 = vunpack.c.l.b16 %v416
    %v1201 = vunpack.c.h.b16 %v416
    %v1202 = vunpack.c.l.b16 %v417
    %v1203 = vunpack.c.h.b16 %v417
    %v1204 = vpack.c.b16 %v700, %v692
    %v1205 = vpack.c.b16 %v701, %v693
    %v1206 = vpack.c.b16 %v702, %v694
    %v1207 = vpack.c.b16 %v703, %v695
    %v1208 = vpack.c.b16 %v704, %v696
    %v1209 = vpack.c.b16 %v705, %v697
    %v1210 = vpack.c.b16 %v706, %v698
    %v1211 = vpack.c.b16 %v707, %v699
    %v1212 = vpack.c.b16 %v716, %v708
    %v1213 = vpack.c.b16 %v717, %v709
    %v1214 = vpack.c.b16 %v718, %v710
    %v1215 = vpack.c.b16 %v719, %v711
    %v1216 = vpack.c.b16 %v720, %v712
    %v1217 = vpack.c.b16 %v721, %v713
    %v1218 = vpack.c.b16 %v722, %v714
    %v1219 = vpack.c.b16 %v723, %v715
    %v1220 = vpack.c.b16 %v732, %v724
    %v1221 = vpack.c.b16 %v733, %v725
    %v1222 = vpack.c.b16 %v734, %v726
    %v1223 = vpack.c.b16 %v735, %v727
    %v1224 = vpack.c.b16 %v736, %v728
    %v1225 = vpack.c.b16 %v737, %v729
    %v1226 = vpack.c.b16 %v738, %v730
    %v1227 = vpack.c.b16 %v739, %v731
    %v1228 = vpack.c.b16 %v748, %v740
    %v1229 = vpack.c.b16 %v749, %v741
    %v1230 = vpack.c.b16 %v750, %v742
    %v1231 = vpack.c.b16 %v751, %v743
    %v1232 = vpack.c.b16 %v752, %v744
    %v1233 = vpack.c.b16 %v753, %v745
    %v1234 = vpack.c.b16 %v754, %v746
    %v1235 = vpack.c.b16 %v755, %v747
    %v1236 = vpack.c.b16 %v764, %v756
    %v1237 = vpack.c.b16 %v765, %v757
    %v1238 = vpack.c.b16 %v766, %v758
    %v1239 = vpack.c.b16 %v767, %v759
    %v1240 = vpack.c.b16 %v768, %v760
    %v1241 = vpack.c.b16 %v769, %v761
    %v1242 = vpack.c.b16 %v770, %v762
    %v1243 = vpack.c.b16 %v771, %v763
    %v1244 = vpack.c.b16 %v780, %v772
    %v1245 = vpack.c.b16 %v781, %v773
    %v1246 = vpack.c.b16 %v782, %v774
    %v1247 = vpack.c.b16 %v783, %v775
    %v1248 = vpack.c.b16 %v784, %v776
    %v1249 = vpack.c.b16 %v785, %v777
    %v1250 = vpack.c.b16 %v786, %v778
    %v1251 = vpack.c.b16 %v787, %v779
    %v1252 = vpack.c.b16 %v796, %v788
    %v1253 = vpack.c.b16 %v797, %v789
    %v1254 = vpack.c.b16 %v798, %v790
    %v1255 = vpack.c.b16 %v799, %v791
    %v1256 = vpack.c.b16 %v800, %v792
    %v1257 = vpack.c.b16 %v801, %v793
    %v1258 = vpack.c.b16 %v802, %v794
    %v1259 = vpack.c.b16 %v803, %v795
    %v1260 = vpack.c.b16 %v812, %v804
    %v1261 = vpack.c.b16 %v813, %v805
    %v1262 = vpack.c.b16 %v814, %v806
    %v1263 = vpack.c.b16 %v815, %v807
    %v1264 = vpack.c.b16 %v816, %v808
    %v1265 = vpack.c.b16 %v817, %v809
    %v1266 = vpack.c.b16 %v818, %v810
    %v1267 = vpack.c.b16 %v819, %v811
    %v1268 = vpack.c.b16 %v828, %v820
    %v1269 = vpack.c.b16 %v829, %v821
    %v1270 = vpack.c.b16 %v830, %v822
    %v1271 = vpack.c.b16 %v831, %v823
    %v1272 = vpack.c.b16 %v832, %v824
    %v1273 = vpack.c.b16 %v833, %v825
    %v1274 = vpack.c.b16 %v834, %v826
    %v1275 = vpack.c.b16 %v835, %v827
    %v1276 = vpack.c.b16 %v844, %v836
    %v1277 = vpack.c.b16 %v845, %v837
    %v1278 = vpack.c.b16 %v846, %v838
    %v1279 = vpack.c.b16 %v847, %v839
    %v1280 = vpack.c.b16 %v848, %v840
    %v1281 = vpack.c.b16 %v849, %v841
    %v1282 = vpack.c.b16 %v850, %v842
    %v1283 = vpack.c.b16 %v851, %v843
    %v1284 = vpack.c.b16 %v860, %v852
    %v1285 = vpack.c.b16 %v861, %v853
    %v1286 = vpack.c.b16 %v862, %v854
    %v1287 = vpack.c.b16 %v863, %v855
    %v1288 = vpack.c.b16 %v864, %v856
    %v1289 = vpack.c.b16 %v865, %v857
    %v1290 = vpack.c.b16 %v866, %v858
    %v1291 = vpack.c.b16 %v867, %v859
    %v1292 = vpack.c.b16 %v876, %v868
    %v1293 = vpack.c.b16 %v877, %v869
    %v1294 = vpack.c.b16 %v878, %v870
    %v1295 = vpack.c.b16 %v879, %v871
    %v1296 = vpack.c.b16 %v880, %v872
    %v1297 = vpack.c.b16 %v881, %v873
    %v1298 = vpack.c.b16 %v882, %v874
    %v1299 = vpack.c.b16 %v883, %v875
    %v1300 = vpack.c.b16 %v892, %v884
    %v1301 = vpack.c.b16 %v893, %v885
    %v1302 = vpack.c.b16 %v894, %v886
    %v1303 = vpack.c.b16 %v895, %v887
    %v1304 = vpack.c.b16 %v896, %v888
    %v1305 = vpack.c.b16 %v897, %v889
    %v1306 = vpack.c.b16 %v898, %v890
    %v1307 = vpack.c.b16 %v899, %v891
    %v1308 = vpack.c.b16 %v908, %v900
    %v1309 = vpack.c.b16 %v909, %v901
    %v1310 = vpack.c.b16 %v910, %v902
    %v1311 = vpack.c.b16 %v911, %v903
    %v1312 = vpack.c.b16 %v912, %v904
    %v1313 = vpack.c.b16 %v913, %v905
    %v1314 = vpack.c.b16 %v914, %v906
    %v1315 = vpack.c.b16 %v915, %v907
    %v1316 = vpack.c.b16 %v924, %v916
    %v1317 = vpack.c.b16 %v925, %v917
    %v1318 = vpack.c.b16 %v926, %v918
    %v1319 = vpack.c.b16 %v927, %v919
    %v1320 = vpack.c.b16 %v928, %v920
    %v1321 = vpack.c.b16 %v929, %v921
    %v1322 = vpack.c.b16 %v930, %v922
    %v1323 = vpack.c.b16 %v931, %v923
    %v1324 = vpack.c.b16 %v940, %v932
    %v1325 = vpack.c.b16 %v941, %v933
    %v1326 = vpack.c.b16 %v942, %v934
    %v1327 = vpack.c.b16 %v943, %v935
    %v1328 = vpack.c.b16 %v944, %v936
    %v1329 = vpack.c.b16 %v945, %v937
    %v1330 = vpack.c.b16 %v946, %v938
    %v1331 = vpack.c.b16 %v947, %v939
    %v1332 = vpack.c.b16 %v956, %v948
    %v1333 = vpack.c.b16 %v957, %v949
    %v1334 = vpack.c.b16 %v958, %v950
    %v1335 = vpack.c.b16 %v959, %v951
    %v1336 = vpack.c.b16 %v960, %v952
    %v1337 = vpack.c.b16 %v961, %v953
    %v1338 = vpack.c.b16 %v962, %v954
    %v1339 = vpack.c.b16 %v963, %v955
    %v1340 = vpack.c.b16 %v972, %v964
    %v1341 = vpack.c.b16 %v973, %v965
    %v1342 = vpack.c.b16 %v974, %v966
    %v1343 = vpack.c.b16 %v975, %v967
    %v1344 = vpack.c.b16 %v976, %v968
    %v1345 = vpack.c.b16 %v977, %v969
    %v1346 = vpack.c.b16 %v978, %v970
    %v1347 = vpack.c.b16 %v979, %v971
    %v1348 = vpack.c.b16 %v988, %v980
    %v1349 = vpack.c.b16 %v989, %v981
    %v1350 = vpack.c.b16 %v990, %v982
    %v1351 = vpack.c.b16 %v991, %v983
    %v1352 = vpack.c.b16 %v992, %v984
    %v1353 = vpack.c.b16 %v993, %v985
    %v1354 = vpack.c.b16 %v994, %v986
    %v1355 = vpack.c.b16 %v995, %v987
    %v1356 = vpack.c.b16 %v1004, %v996
    %v1357 = vpack.c.b16 %v1005, %v997
    %v1358 = vpack.c.b16 %v1006, %v998
    %v1359 = vpack.c.b16 %v1007, %v999
    %v1360 = vpack.c.b16 %v1008, %v1000
    %v1361 = vpack.c.b16 %v1009, %v1001
    %v1362 = vpack.c.b16 %v1010, %v1002
    %v1363 = vpack.c.b16 %v1011, %v1003
    %v1364 = vpack.c.b16 %v1020, %v1012
    %v1365 = vpack.c.b16 %v1021, %v1013
    %v1366 = vpack.c.b16 %v1022, %v1014
    %v1367 = vpack.c.b16 %v1023, %v1015
    %v1368 = vpack.c.b16 %v1024, %v1016
    %v1369 = vpack.c.b16 %v1025, %v1017
    %v1370 = vpack.c.b16 %v1026, %v1018
    %v1371 = vpack.c.b16 %v1027, %v1019
    %v1372 = vpack.c.b16 %v1036, %v1028
    %v1373 = vpack.c.b16 %v1037, %v1029
    %v1374 = vpack.c.b16 %v1038, %v1030
    %v1375 = vpack.c.b16 %v1039, %v1031
    %v1376 = vpack.c.b16 %v1040, %v1032
    %v1377 = vpack.c.b16 %v1041, %v1033
    %v1378 = vpack.c.b16 %v1042, %v1034
    %v1379 = vpack.c.b16 %v1043, %v1035
    %v1380 = vpack.c.b16 %v1052, %v1044
    %v1381 = vpack.c.b16 %v1053, %v1045
    %v1382 = vpack.c.b16 %v1054, %v1046
    %v1383 = vpack.c.b16 %v1055, %v1047
    %v1384 = vpack.c.b16 %v1056, %v1048
    %v1385 = vpack.c.b16 %v1057, %v1049
    %v1386 = vpack.c.b16 %v1058, %v1050
    %v1387 = vpack.c.b16 %v1059, %v1051
    %v1388 = vpack.c.b16 %v1068, %v1060
    %v1389 = vpack.c.b16 %v1069, %v1061
    %v1390 = vpack.c.b16 %v1070, %v1062
    %v1391 = vpack.c.b16 %v1071, %v1063
    %v1392 = vpack.c.b16 %v1072, %v1064
    %v1393 = vpack.c.b16 %v1073, %v1065
    %v1394 = vpack.c.b16 %v1074, %v1066
    %v1395 = vpack.c.b16 %v1075, %v1067
    %v1396 = vpack.c.b16 %v1084, %v1076
    %v1397 = vpack.c.b16 %v1085, %v1077
    %v1398 = vpack.c.b16 %v1086, %v1078
    %v1399 = vpack.c.b16 %v1087, %v1079
    %v1400 = vpack.c.b16 %v1088, %v1080
    %v1401 = vpack.c.b16 %v1089, %v1081
    %v1402 = vpack.c.b16 %v1090, %v1082
    %v1403 = vpack.c.b16 %v1091, %v1083
    %v1404 = vpack.c.b16 %v1100, %v1092
    %v1405 = vpack.c.b16 %v1101, %v1093
    %v1406 = vpack.c.b16 %v1102, %v1094
    %v1407 = vpack.c.b16 %v1103, %v1095
    %v1408 = vpack.c.b16 %v1104, %v1096
    %v1409 = vpack.c.b16 %v1105, %v1097
    %v1410 = vpack.c.b16 %v1106, %v1098
    %v1411 = vpack.c.b16 %v1107, %v1099
    %v1412 = vpack.c.b16 %v1116, %v1108
    %v1413 = vpack.c.b16 %v1117, %v1109
    %v1414 = vpack.c.b16 %v1118, %v1110
    %v1415 = vpack.c.b16 %v1119, %v1111
    %v1416 = vpack.c.b16 %v1120, %v1112
    %v1417 = vpack.c.b16 %v1121, %v1113
    %v1418 = vpack.c.b16 %v1122, %v1114
    %v1419 = vpack.c.b16 %v1123, %v1115
    %v1420 = vpack.c.b16 %v1132, %v1124
    %v1421 = vpack.c.b16 %v1133, %v1125
    %v1422 = vpack.c.b16 %v1134, %v1126
    %v1423 = vpack.c.b16 %v1135, %v1127
    %v1424 = vpack.c.b16 %v1136, %v1128
    %v1425 = vpack.c.b16 %v1137, %v1129
    %v1426 = vpack.c.b16 %v1138, %v1130
    %v1427 = vpack.c.b16 %v1139, %v1131
    %v1428 = vpack.c.b16 %v1148, %v1140
    %v1429 = vpack.c.b16 %v1149, %v1141
    %v1430 = vpack.c.b16 %v1150, %v1142
    %v1431 = vpack.c.b16 %v1151, %v1143
    %v1432 = vpack.c.b16 %v1152, %v1144
    %v1433 = vpack.c.b16 %v1153, %v1145
    %v1434 = vpack.c.b16 %v1154, %v1146
    %v1435 = vpack.c.b16 %v1155, %v1147
    %v1436 = vpack.c.b16 %v1164, %v1156
    %v1437 = vpack.c.b16 %v1165, %v1157
    %v1438 = vpack.c.b16 %v1166, %v1158
    %v1439 = vpack.c.b16 %v1167, %v1159
    %v1440 = vpack.c.b16 %v1168, %v1160
    %v1441 = vpack.c.b16 %v1169, %v1161
    %v1442 = vpack.c.b16 %v1170, %v1162
    %v1443 = vpack.c.b16 %v1171, %v1163
    %v1444 = vpack.c.b16 %v1180, %v1172
    %v1445 = vpack.c.b16 %v1181, %v1173
    %v1446 = vpack.c.b16 %v1182, %v1174
    %v1447 = vpack.c.b16 %v1183, %v1175
    %v1448 = vpack.c.b16 %v1184, %v1176
    %v1449 = vpack.c.b16 %v1185, %v1177
    %v1450 = vpack.c.b16 %v1186, %v1178
    %v1451 = vpack.c.b16 %v1187, %v1179
    %v1452 = vpack.c.b16 %v1196, %v1188
    %v1453 = vpack.c.b16 %v1197, %v1189
    %v1454 = vpack.c.b16 %v1198, %v1190
    %v1455 = vpack.c.b16 %v1199, %v1191
    %v1456 = vpack.c.b16 %v1200, %v1192
    %v1457 = vpack.c.b16 %v1201, %v1193
    %v1458 = vpack.c.b16 %v1202, %v1194
    %v1459 = vpack.c.b16 %v1203, %v1195
    %1716 = vmatpush.bf16.msra.mxu0 %v1260
    %1717 = vmatpush.bf16.msra.mxu0 %v1252
    %1718 = vmatpush.bf16.msra.mxu0 %v1244
    %1719 = vmatpush.bf16.msra.mxu0 %v1236
    %1720 = vmatpush.bf16.msra.mxu0 %v1228
    %1721 = vmatpush.bf16.msra.mxu0 %v1220
    %1722 = vmatpush.bf16.msra.mxu0 %v1212
    %1723 = vmatpush.bf16.msra.mxu0 %v1204
    %1724 = vmatmul.bf16.gmra.mxu0 %v158
    %v1725 = vpop.f32.mrf.mxu0
    %v1726 = vadd.f32 %v420, %v1725
    %v1727 = vpop.f32.mrf.mxu0
    %1728 = vdwg.mxu0
    %1729 = vmatpush.bf16.msra.mxu0 %v1324
    %1730 = vmatpush.bf16.msra.mxu0 %v1316
    %1731 = vmatpush.bf16.msra.mxu0 %v1308
    %1732 = vmatpush.bf16.msra.mxu0 %v1300
    %1733 = vmatpush.bf16.msra.mxu0 %v1292
    %1734 = vmatpush.bf16.msra.mxu0 %v1284
    %1735 = vmatpush.bf16.msra.mxu0 %v1276
    %1736 = vmatpush.bf16.msra.mxu0 %v1268
    %1737 = vmatmul.bf16.gmra.mxu0 %v159
    %v1738 = vpop.f32.mrf.mxu0
    %v1739 = vadd.f32 %v1726, %v1738
    %v1740 = vpop.f32.mrf.mxu0
    %1741 = vdwg.mxu0
    %1742 = vmatpush.bf16.msra.mxu0 %v1388
    %1743 = vmatpush.bf16.msra.mxu0 %v1380
    %1744 = vmatpush.bf16.msra.mxu0 %v1372
    %1745 = vmatpush.bf16.msra.mxu0 %v1364
    %1746 = vmatpush.bf16.msra.mxu0 %v1356
    %1747 = vmatpush.bf16.msra.mxu0 %v1348
    %1748 = vmatpush.bf16.msra.mxu0 %v1340
    %1749 = vmatpush.bf16.msra.mxu0 %v1332
    %1750 = vmatmul.bf16.gmra.mxu0 %v160
    %v1751 = vpop.f32.mrf.mxu0
    %v1752 = vadd.f32 %v1739, %v1751
    %v1753 = vpop.f32.mrf.mxu0
    %1754 = vdwg.mxu0
    %1755 = vmatpush.bf16.msra.mxu0 %v1452
    %1756 = vmatpush.bf16.msra.mxu0 %v1444
    %1757 = vmatpush.bf16.msra.mxu0 %v1436
    %1758 = vmatpush.bf16.msra.mxu0 %v1428
    %1759 = vmatpush.bf16.msra.mxu0 %v1420
    %1760 = vmatpush.bf16.msra.mxu0 %v1412
    %1761 = vmatpush.bf16.msra.mxu0 %v1404
    %1762 = vmatpush.bf16.msra.mxu0 %v1396
    %1763 = vmatmul.bf16.gmra.mxu0 %v161
    %v1764 = vpop.f32.mrf.mxu0
    %v1765 = vadd.f32 %v1752, %v1764
    %v1766 = vpop.f32.mrf.mxu0
    %1767 = vdwg.mxu0
    %1768 = vmatpush.bf16.msra.mxu0 %v1261
    %1769 = vmatpush.bf16.msra.mxu0 %v1253
    %1770 = vmatpush.bf16.msra.mxu0 %v1245
    %1771 = vmatpush.bf16.msra.mxu0 %v1237
    %1772 = vmatpush.bf16.msra.mxu0 %v1229
    %1773 = vmatpush.bf16.msra.mxu0 %v1221
    %1774 = vmatpush.bf16.msra.mxu0 %v1213
    %1775 = vmatpush.bf16.msra.mxu0 %v1205
    %1776 = vmatmul.bf16.gmra.mxu0 %v158
    %v1777 = vpop.f32.mrf.mxu0
    %v1778 = vadd.f32 %v421, %v1777
    %v1779 = vpop.f32.mrf.mxu0
    %1780 = vdwg.mxu0
    %1781 = vmatpush.bf16.msra.mxu0 %v1325
    %1782 = vmatpush.bf16.msra.mxu0 %v1317
    %1783 = vmatpush.bf16.msra.mxu0 %v1309
    %1784 = vmatpush.bf16.msra.mxu0 %v1301
    %1785 = vmatpush.bf16.msra.mxu0 %v1293
    %1786 = vmatpush.bf16.msra.mxu0 %v1285
    %1787 = vmatpush.bf16.msra.mxu0 %v1277
    %1788 = vmatpush.bf16.msra.mxu0 %v1269
    %1789 = vmatmul.bf16.gmra.mxu0 %v159
    %v1790 = vpop.f32.mrf.mxu0
    %v1791 = vadd.f32 %v1778, %v1790
    %v1792 = vpop.f32.mrf.mxu0
    %1793 = vdwg.mxu0
    %1794 = vmatpush.bf16.msra.mxu0 %v1389
    %1795 = vmatpush.bf16.msra.mxu0 %v1381
    %1796 = vmatpush.bf16.msra.mxu0 %v1373
    %1797 = vmatpush.bf16.msra.mxu0 %v1365
    %1798 = vmatpush.bf16.msra.mxu0 %v1357
    %1799 = vmatpush.bf16.msra.mxu0 %v1349
    %1800 = vmatpush.bf16.msra.mxu0 %v1341
    %1801 = vmatpush.bf16.msra.mxu0 %v1333
    %1802 = vmatmul.bf16.gmra.mxu0 %v160
    %v1803 = vpop.f32.mrf.mxu0
    %v1804 = vadd.f32 %v1791, %v1803
    %v1805 = vpop.f32.mrf.mxu0
    %1806 = vdwg.mxu0
    %1807 = vmatpush.bf16.msra.mxu0 %v1453
    %1808 = vmatpush.bf16.msra.mxu0 %v1445
    %1809 = vmatpush.bf16.msra.mxu0 %v1437
    %1810 = vmatpush.bf16.msra.mxu0 %v1429
    %1811 = vmatpush.bf16.msra.mxu0 %v1421
    %1812 = vmatpush.bf16.msra.mxu0 %v1413
    %1813 = vmatpush.bf16.msra.mxu0 %v1405
    %1814 = vmatpush.bf16.msra.mxu0 %v1397
    %1815 = vmatmul.bf16.gmra.mxu0 %v161
    %v1816 = vpop.f32.mrf.mxu0
    %v1817 = vadd.f32 %v1804, %v1816
    %v1818 = vpop.f32.mrf.mxu0
    %1819 = vdwg.mxu0
    %1820 = vmatpush.bf16.msra.mxu0 %v1262
    %1821 = vmatpush.bf16.msra.mxu0 %v1254
    %1822 = vmatpush.bf16.msra.mxu0 %v1246
    %1823 = vmatpush.bf16.msra.mxu0 %v1238
    %1824 = vmatpush.bf16.msra.mxu0 %v1230
    %1825 = vmatpush.bf16.msra.mxu0 %v1222
    %1826 = vmatpush.bf16.msra.mxu0 %v1214
    %1827 = vmatpush.bf16.msra.mxu0 %v1206
    %1828 = vmatmul.bf16.gmra.mxu0 %v158
    %v1829 = vpop.f32.mrf.mxu0
    %v1830 = vadd.f32 %v422, %v1829
    %v1831 = vpop.f32.mrf.mxu0
    %1832 = vdwg.mxu0
    %1833 = vmatpush.bf16.msra.mxu0 %v1326
    %1834 = vmatpush.bf16.msra.mxu0 %v1318
    %1835 = vmatpush.bf16.msra.mxu0 %v1310
    %1836 = vmatpush.bf16.msra.mxu0 %v1302
    %1837 = vmatpush.bf16.msra.mxu0 %v1294
    %1838 = vmatpush.bf16.msra.mxu0 %v1286
    %1839 = vmatpush.bf16.msra.mxu0 %v1278
    %1840 = vmatpush.bf16.msra.mxu0 %v1270
    %1841 = vmatmul.bf16.gmra.mxu0 %v159
    %v1842 = vpop.f32.mrf.mxu0
    %v1843 = vadd.f32 %v1830, %v1842
    %v1844 = vpop.f32.mrf.mxu0
    %1845 = vdwg.mxu0
    %1846 = vmatpush.bf16.msra.mxu0 %v1390
    %1847 = vmatpush.bf16.msra.mxu0 %v1382
    %1848 = vmatpush.bf16.msra.mxu0 %v1374
    %1849 = vmatpush.bf16.msra.mxu0 %v1366
    %1850 = vmatpush.bf16.msra.mxu0 %v1358
    %1851 = vmatpush.bf16.msra.mxu0 %v1350
    %1852 = vmatpush.bf16.msra.mxu0 %v1342
    %1853 = vmatpush.bf16.msra.mxu0 %v1334
    %1854 = vmatmul.bf16.gmra.mxu0 %v160
    %v1855 = vpop.f32.mrf.mxu0
    %v1856 = vadd.f32 %v1843, %v1855
    %v1857 = vpop.f32.mrf.mxu0
    %1858 = vdwg.mxu0
    %1859 = vmatpush.bf16.msra.mxu0 %v1454
    %1860 = vmatpush.bf16.msra.mxu0 %v1446
    %1861 = vmatpush.bf16.msra.mxu0 %v1438
    %1862 = vmatpush.bf16.msra.mxu0 %v1430
    %1863 = vmatpush.bf16.msra.mxu0 %v1422
    %1864 = vmatpush.bf16.msra.mxu0 %v1414
    %1865 = vmatpush.bf16.msra.mxu0 %v1406
    %1866 = vmatpush.bf16.msra.mxu0 %v1398
    %1867 = vmatmul.bf16.gmra.mxu0 %v161
    %v1868 = vpop.f32.mrf.mxu0
    %v1869 = vadd.f32 %v1856, %v1868
    %v1870 = vpop.f32.mrf.mxu0
    %1871 = vdwg.mxu0
    %1872 = vmatpush.bf16.msra.mxu0 %v1263
    %1873 = vmatpush.bf16.msra.mxu0 %v1255
    %1874 = vmatpush.bf16.msra.mxu0 %v1247
    %1875 = vmatpush.bf16.msra.mxu0 %v1239
    %1876 = vmatpush.bf16.msra.mxu0 %v1231
    %1877 = vmatpush.bf16.msra.mxu0 %v1223
    %1878 = vmatpush.bf16.msra.mxu0 %v1215
    %1879 = vmatpush.bf16.msra.mxu0 %v1207
    %1880 = vmatmul.bf16.gmra.mxu0 %v158
    %v1881 = vpop.f32.mrf.mxu0
    %v1882 = vadd.f32 %v423, %v1881
    %v1883 = vpop.f32.mrf.mxu0
    %1884 = vdwg.mxu0
    %1885 = vmatpush.bf16.msra.mxu0 %v1327
    %1886 = vmatpush.bf16.msra.mxu0 %v1319
    %1887 = vmatpush.bf16.msra.mxu0 %v1311
    %1888 = vmatpush.bf16.msra.mxu0 %v1303
    %1889 = vmatpush.bf16.msra.mxu0 %v1295
    %1890 = vmatpush.bf16.msra.mxu0 %v1287
    %1891 = vmatpush.bf16.msra.mxu0 %v1279
    %1892 = vmatpush.bf16.msra.mxu0 %v1271
    %1893 = vmatmul.bf16.gmra.mxu0 %v159
    %v1894 = vpop.f32.mrf.mxu0
    %v1895 = vadd.f32 %v1882, %v1894
    %v1896 = vpop.f32.mrf.mxu0
    %1897 = vdwg.mxu0
    %1898 = vmatpush.bf16.msra.mxu0 %v1391
    %1899 = vmatpush.bf16.msra.mxu0 %v1383
    %1900 = vmatpush.bf16.msra.mxu0 %v1375
    %1901 = vmatpush.bf16.msra.mxu0 %v1367
    %1902 = vmatpush.bf16.msra.mxu0 %v1359
    %1903 = vmatpush.bf16.msra.mxu0 %v1351
    %1904 = vmatpush.bf16.msra.mxu0 %v1343
    %1905 = vmatpush.bf16.msra.mxu0 %v1335
    %1906 = vmatmul.bf16.gmra.mxu0 %v160
    %v1907 = vpop.f32.mrf.mxu0
    %v1908 = vadd.f32 %v1895, %v1907
    %v1909 = vpop.f32.mrf.mxu0
    %1910 = vdwg.mxu0
    %1911 = vmatpush.bf16.msra.mxu0 %v1455
    %1912 = vmatpush.bf16.msra.mxu0 %v1447
    %1913 = vmatpush.bf16.msra.mxu0 %v1439
    %1914 = vmatpush.bf16.msra.mxu0 %v1431
    %1915 = vmatpush.bf16.msra.mxu0 %v1423
    %1916 = vmatpush.bf16.msra.mxu0 %v1415
    %1917 = vmatpush.bf16.msra.mxu0 %v1407
    %1918 = vmatpush.bf16.msra.mxu0 %v1399
    %1919 = vmatmul.bf16.gmra.mxu0 %v161
    %v1920 = vpop.f32.mrf.mxu0
    %v1921 = vadd.f32 %v1908, %v1920
    %v1922 = vpop.f32.mrf.mxu0
    %1923 = vdwg.mxu0
    %1924 = vmatpush.bf16.msra.mxu0 %v1264
    %1925 = vmatpush.bf16.msra.mxu0 %v1256
    %1926 = vmatpush.bf16.msra.mxu0 %v1248
    %1927 = vmatpush.bf16.msra.mxu0 %v1240
    %1928 = vmatpush.bf16.msra.mxu0 %v1232
    %1929 = vmatpush.bf16.msra.mxu0 %v1224
    %1930 = vmatpush.bf16.msra.mxu0 %v1216
    %1931 = vmatpush.bf16.msra.mxu0 %v1208
    %1932 = vmatmul.bf16.gmra.mxu0 %v158
    %v1933 = vpop.f32.mrf.mxu0
    %v1934 = vadd.f32 %v424, %v1933
    %v1935 = vpop.f32.mrf.mxu0
    %1936 = vdwg.mxu0
    %1937 = vmatpush.bf16.msra.mxu0 %v1328
    %1938 = vmatpush.bf16.msra.mxu0 %v1320
    %1939 = vmatpush.bf16.msra.mxu0 %v1312
    %1940 = vmatpush.bf16.msra.mxu0 %v1304
    %1941 = vmatpush.bf16.msra.mxu0 %v1296
    %1942 = vmatpush.bf16.msra.mxu0 %v1288
    %1943 = vmatpush.bf16.msra.mxu0 %v1280
    %1944 = vmatpush.bf16.msra.mxu0 %v1272
    %1945 = vmatmul.bf16.gmra.mxu0 %v159
    %v1946 = vpop.f32.mrf.mxu0
    %v1947 = vadd.f32 %v1934, %v1946
    %v1948 = vpop.f32.mrf.mxu0
    %1949 = vdwg.mxu0
    %1950 = vmatpush.bf16.msra.mxu0 %v1392
    %1951 = vmatpush.bf16.msra.mxu0 %v1384
    %1952 = vmatpush.bf16.msra.mxu0 %v1376
    %1953 = vmatpush.bf16.msra.mxu0 %v1368
    %1954 = vmatpush.bf16.msra.mxu0 %v1360
    %1955 = vmatpush.bf16.msra.mxu0 %v1352
    %1956 = vmatpush.bf16.msra.mxu0 %v1344
    %1957 = vmatpush.bf16.msra.mxu0 %v1336
    %1958 = vmatmul.bf16.gmra.mxu0 %v160
    %v1959 = vpop.f32.mrf.mxu0
    %v1960 = vadd.f32 %v1947, %v1959
    %v1961 = vpop.f32.mrf.mxu0
    %1962 = vdwg.mxu0
    %1963 = vmatpush.bf16.msra.mxu0 %v1456
    %1964 = vmatpush.bf16.msra.mxu0 %v1448
    %1965 = vmatpush.bf16.msra.mxu0 %v1440
    %1966 = vmatpush.bf16.msra.mxu0 %v1432
    %1967 = vmatpush.bf16.msra.mxu0 %v1424
    %1968 = vmatpush.bf16.msra.mxu0 %v1416
    %1969 = vmatpush.bf16.msra.mxu0 %v1408
    %1970 = vmatpush.bf16.msra.mxu0 %v1400
    %1971 = vmatmul.bf16.gmra.mxu0 %v161
    %v1972 = vpop.f32.mrf.mxu0
    %v1973 = vadd.f32 %v1960, %v1972
    %v1974 = vpop.f32.mrf.mxu0
    %1975 = vdwg.mxu0
    %1976 = vmatpush.bf16.msra.mxu0 %v1265
    %1977 = vmatpush.bf16.msra.mxu0 %v1257
    %1978 = vmatpush.bf16.msra.mxu0 %v1249
    %1979 = vmatpush.bf16.msra.mxu0 %v1241
    %1980 = vmatpush.bf16.msra.mxu0 %v1233
    %1981 = vmatpush.bf16.msra.mxu0 %v1225
    %1982 = vmatpush.bf16.msra.mxu0 %v1217
    %1983 = vmatpush.bf16.msra.mxu0 %v1209
    %1984 = vmatmul.bf16.gmra.mxu0 %v158
    %v1985 = vpop.f32.mrf.mxu0
    %v1986 = vadd.f32 %v425, %v1985
    %v1987 = vpop.f32.mrf.mxu0
    %1988 = vdwg.mxu0
    %1989 = vmatpush.bf16.msra.mxu0 %v1329
    %1990 = vmatpush.bf16.msra.mxu0 %v1321
    %1991 = vmatpush.bf16.msra.mxu0 %v1313
    %1992 = vmatpush.bf16.msra.mxu0 %v1305
    %1993 = vmatpush.bf16.msra.mxu0 %v1297
    %1994 = vmatpush.bf16.msra.mxu0 %v1289
    %1995 = vmatpush.bf16.msra.mxu0 %v1281
    %1996 = vmatpush.bf16.msra.mxu0 %v1273
    %1997 = vmatmul.bf16.gmra.mxu0 %v159
    %v1998 = vpop.f32.mrf.mxu0
    %v1999 = vadd.f32 %v1986, %v1998
    %v2000 = vpop.f32.mrf.mxu0
    %2001 = vdwg.mxu0
    %2002 = vmatpush.bf16.msra.mxu0 %v1393
    %2003 = vmatpush.bf16.msra.mxu0 %v1385
    %2004 = vmatpush.bf16.msra.mxu0 %v1377
    %2005 = vmatpush.bf16.msra.mxu0 %v1369
    %2006 = vmatpush.bf16.msra.mxu0 %v1361
    %2007 = vmatpush.bf16.msra.mxu0 %v1353
    %2008 = vmatpush.bf16.msra.mxu0 %v1345
    %2009 = vmatpush.bf16.msra.mxu0 %v1337
    %2010 = vmatmul.bf16.gmra.mxu0 %v160
    %v2011 = vpop.f32.mrf.mxu0
    %v2012 = vadd.f32 %v1999, %v2011
    %v2013 = vpop.f32.mrf.mxu0
    %2014 = vdwg.mxu0
    %2015 = vmatpush.bf16.msra.mxu0 %v1457
    %2016 = vmatpush.bf16.msra.mxu0 %v1449
    %2017 = vmatpush.bf16.msra.mxu0 %v1441
    %2018 = vmatpush.bf16.msra.mxu0 %v1433
    %2019 = vmatpush.bf16.msra.mxu0 %v1425
    %2020 = vmatpush.bf16.msra.mxu0 %v1417
    %2021 = vmatpush.bf16.msra.mxu0 %v1409
    %2022 = vmatpush.bf16.msra.mxu0 %v1401
    %2023 = vmatmul.bf16.gmra.mxu0 %v161
    %v2024 = vpop.f32.mrf.mxu0
    %v2025 = vadd.f32 %v2012, %v2024
    %v2026 = vpop.f32.mrf.mxu0
    %2027 = vdwg.mxu0
    %2028 = vmatpush.bf16.msra.mxu0 %v1266
    %2029 = vmatpush.bf16.msra.mxu0 %v1258
    %2030 = vmatpush.bf16.msra.mxu0 %v1250
    %2031 = vmatpush.bf16.msra.mxu0 %v1242
    %2032 = vmatpush.bf16.msra.mxu0 %v1234
    %2033 = vmatpush.bf16.msra.mxu0 %v1226
    %2034 = vmatpush.bf16.msra.mxu0 %v1218
    %2035 = vmatpush.bf16.msra.mxu0 %v1210
    %2036 = vmatmul.bf16.gmra.mxu0 %v158
    %v2037 = vpop.f32.mrf.mxu0
    %v2038 = vadd.f32 %v426, %v2037
    %v2039 = vpop.f32.mrf.mxu0
    %2040 = vdwg.mxu0
    %2041 = vmatpush.bf16.msra.mxu0 %v1330
    %2042 = vmatpush.bf16.msra.mxu0 %v1322
    %2043 = vmatpush.bf16.msra.mxu0 %v1314
    %2044 = vmatpush.bf16.msra.mxu0 %v1306
    %2045 = vmatpush.bf16.msra.mxu0 %v1298
    %2046 = vmatpush.bf16.msra.mxu0 %v1290
    %2047 = vmatpush.bf16.msra.mxu0 %v1282
    %2048 = vmatpush.bf16.msra.mxu0 %v1274
    %2049 = vmatmul.bf16.gmra.mxu0 %v159
    %v2050 = vpop.f32.mrf.mxu0
    %v2051 = vadd.f32 %v2038, %v2050
    %v2052 = vpop.f32.mrf.mxu0
    %2053 = vdwg.mxu0
    %2054 = vmatpush.bf16.msra.mxu0 %v1394
    %2055 = vmatpush.bf16.msra.mxu0 %v1386
    %2056 = vmatpush.bf16.msra.mxu0 %v1378
    %2057 = vmatpush.bf16.msra.mxu0 %v1370
    %2058 = vmatpush.bf16.msra.mxu0 %v1362
    %2059 = vmatpush.bf16.msra.mxu0 %v1354
    %2060 = vmatpush.bf16.msra.mxu0 %v1346
    %2061 = vmatpush.bf16.msra.mxu0 %v1338
    %2062 = vmatmul.bf16.gmra.mxu0 %v160
    %v2063 = vpop.f32.mrf.mxu0
    %v2064 = vadd.f32 %v2051, %v2063
    %v2065 = vpop.f32.mrf.mxu0
    %2066 = vdwg.mxu0
    %2067 = vmatpush.bf16.msra.mxu0 %v1458
    %2068 = vmatpush.bf16.msra.mxu0 %v1450
    %2069 = vmatpush.bf16.msra.mxu0 %v1442
    %2070 = vmatpush.bf16.msra.mxu0 %v1434
    %2071 = vmatpush.bf16.msra.mxu0 %v1426
    %2072 = vmatpush.bf16.msra.mxu0 %v1418
    %2073 = vmatpush.bf16.msra.mxu0 %v1410
    %2074 = vmatpush.bf16.msra.mxu0 %v1402
    %2075 = vmatmul.bf16.gmra.mxu0 %v161
    %v2076 = vpop.f32.mrf.mxu0
    %v2077 = vadd.f32 %v2064, %v2076
    %v2078 = vpop.f32.mrf.mxu0
    %2079 = vdwg.mxu0
    %2080 = vmatpush.bf16.msra.mxu0 %v1267
    %2081 = vmatpush.bf16.msra.mxu0 %v1259
    %2082 = vmatpush.bf16.msra.mxu0 %v1251
    %2083 = vmatpush.bf16.msra.mxu0 %v1243
    %2084 = vmatpush.bf16.msra.mxu0 %v1235
    %2085 = vmatpush.bf16.msra.mxu0 %v1227
    %2086 = vmatpush.bf16.msra.mxu0 %v1219
    %2087 = vmatpush.bf16.msra.mxu0 %v1211
    %2088 = vmatmul.bf16.gmra.mxu0 %v158
    %v2089 = vpop.f32.mrf.mxu0
    %v2090 = vadd.f32 %v427, %v2089
    %v2091 = vpop.f32.mrf.mxu0
    %2092 = vdwg.mxu0
    %2093 = vmatpush.bf16.msra.mxu0 %v1331
    %2094 = vmatpush.bf16.msra.mxu0 %v1323
    %2095 = vmatpush.bf16.msra.mxu0 %v1315
    %2096 = vmatpush.bf16.msra.mxu0 %v1307
    %2097 = vmatpush.bf16.msra.mxu0 %v1299
    %2098 = vmatpush.bf16.msra.mxu0 %v1291
    %2099 = vmatpush.bf16.msra.mxu0 %v1283
    %2100 = vmatpush.bf16.msra.mxu0 %v1275
    %2101 = vmatmul.bf16.gmra.mxu0 %v159
    %v2102 = vpop.f32.mrf.mxu0
    %v2103 = vadd.f32 %v2090, %v2102
    %v2104 = vpop.f32.mrf.mxu0
    %2105 = vdwg.mxu0
    %2106 = vmatpush.bf16.msra.mxu0 %v1395
    %2107 = vmatpush.bf16.msra.mxu0 %v1387
    %2108 = vmatpush.bf16.msra.mxu0 %v1379
    %2109 = vmatpush.bf16.msra.mxu0 %v1371
    %2110 = vmatpush.bf16.msra.mxu0 %v1363
    %2111 = vmatpush.bf16.msra.mxu0 %v1355
    %2112 = vmatpush.bf16.msra.mxu0 %v1347
    %2113 = vmatpush.bf16.msra.mxu0 %v1339
    %2114 = vmatmul.bf16.gmra.mxu0 %v160
    %v2115 = vpop.f32.mrf.mxu0
    %v2116 = vadd.f32 %v2103, %v2115
    %v2117 = vpop.f32.mrf.mxu0
    %2118 = vdwg.mxu0
    %2119 = vmatpush.bf16.msra.mxu0 %v1459
    %2120 = vmatpush.bf16.msra.mxu0 %v1451
    %2121 = vmatpush.bf16.msra.mxu0 %v1443
    %2122 = vmatpush.bf16.msra.mxu0 %v1435
    %2123 = vmatpush.bf16.msra.mxu0 %v1427
    %2124 = vmatpush.bf16.msra.mxu0 %v1419
    %2125 = vmatpush.bf16.msra.mxu0 %v1411
    %2126 = vmatpush.bf16.msra.mxu0 %v1403
    %2127 = vmatmul.bf16.gmra.mxu0 %v161
    %v2128 = vpop.f32.mrf.mxu0
    %v2129 = vadd.f32 %v2116, %v2128
    %v2130 = vpop.f32.mrf.mxu0
    %2131 = vdwg.mxu0
    %v2132 = vmax.f32 %v1765, 0.0
    %v2133 = vmax.f32 %v1817, 0.0
    %v2134 = vmax.f32 %v1869, 0.0
    %v2135 = vmax.f32 %v1921, 0.0
    %v2136 = vmax.f32 %v1973, 0.0
    %v2137 = vmax.f32 %v2025, 0.0
    %v2138 = vmax.f32 %v2077, 0.0
    %v2139 = vmax.f32 %v2129, 0.0
    %v2140 = vpack.c.bf16 %v2132, %v2132
    %v2141 = vpack.c.bf16 %v2133, %v2133
    %v2142 = vpack.c.bf16 %v2134, %v2134
    %v2143 = vpack.c.bf16 %v2135, %v2135
    %v2144 = vpack.c.bf16 %v2136, %v2136
    %v2145 = vpack.c.bf16 %v2137, %v2137
    %v2146 = vpack.c.bf16 %v2138, %v2138
    %v2147 = vpack.c.bf16 %v2139, %v2139
    %v2148 = vld [vmem:[#allocation6] sm:$0xff]
    %v2149 = vld [vmem:[#allocation6 + $0x8] sm:$0xff]
    %v2150 = vld [vmem:[#allocation6 + $0x10] sm:$0xff]
    %v2151 = vld [vmem:[#allocation6 + $0x18] sm:$0xff]
    %v2152 = vld [vmem:[#allocation6 + $0x20] sm:$0xff]
    %v2153 = vld [vmem:[#allocation6 + $0x28] sm:$0xff]
    %v2154 = vld [vmem:[#allocation6 + $0x30] sm:$0xff]
    %v2155 = vld [vmem:[#allocation6 + $0x38] sm:$0xff]
    %v2156 = vld [vmem:[#allocation6 + $0x40] sm:$0xff]
    %v2157 = vld [vmem:[#allocation6 + $0x48] sm:$0xff]
    %v2158 = vld [vmem:[#allocation6 + $0x50] sm:$0xff]
    %v2159 = vld [vmem:[#allocation6 + $0x58] sm:$0xff]
    %v2160 = vld [vmem:[#allocation6 + $0x60] sm:$0xff]
    %v2161 = vld [vmem:[#allocation6 + $0x68] sm:$0xff]
    %v2162 = vld [vmem:[#allocation6 + $0x70] sm:$0xff]
    %v2163 = vld [vmem:[#allocation6 + $0x78] sm:$0xff]
    %v2164 = vld [vmem:[#allocation6 + $0x80] sm:$0xff]
    %v2165 = vld [vmem:[#allocation6 + $0x88] sm:$0xff]
    %v2166 = vld [vmem:[#allocation6 + $0x90] sm:$0xff]
    %v2167 = vld [vmem:[#allocation6 + $0x98] sm:$0xff]
    %v2168 = vld [vmem:[#allocation6 + $0xa0] sm:$0xff]
    %v2169 = vld [vmem:[#allocation6 + $0xa8] sm:$0xff]
    %v2170 = vld [vmem:[#allocation6 + $0xb0] sm:$0xff]
    %v2171 = vld [vmem:[#allocation6 + $0xb8] sm:$0xff]
    %v2172 = vld [vmem:[#allocation6 + $0xc0] sm:$0xff]
    %v2173 = vld [vmem:[#allocation6 + $0xc8] sm:$0xff]
    %v2174 = vld [vmem:[#allocation6 + $0xd0] sm:$0xff]
    %v2175 = vld [vmem:[#allocation6 + $0xd8] sm:$0xff]
    %v2176 = vld [vmem:[#allocation6 + $0xe0] sm:$0xff]
    %v2177 = vld [vmem:[#allocation6 + $0xe8] sm:$0xff]
    %v2178 = vld [vmem:[#allocation6 + $0xf0] sm:$0xff]
    %v2179 = vld [vmem:[#allocation6 + $0xf8] sm:$0xff]
    %v2180 = vld [vmem:[#allocation6 + $0x100] sm:$0xff]
    %v2181 = vld [vmem:[#allocation6 + $0x108] sm:$0xff]
    %v2182 = vld [vmem:[#allocation6 + $0x110] sm:$0xff]
    %v2183 = vld [vmem:[#allocation6 + $0x118] sm:$0xff]
    %v2184 = vld [vmem:[#allocation6 + $0x120] sm:$0xff]
    %v2185 = vld [vmem:[#allocation6 + $0x128] sm:$0xff]
    %v2186 = vld [vmem:[#allocation6 + $0x130] sm:$0xff]
    %v2187 = vld [vmem:[#allocation6 + $0x138] sm:$0xff]
    %v2188 = vld [vmem:[#allocation6 + $0x140] sm:$0xff]
    %v2189 = vld [vmem:[#allocation6 + $0x148] sm:$0xff]
    %v2190 = vld [vmem:[#allocation6 + $0x150] sm:$0xff]
    %v2191 = vld [vmem:[#allocation6 + $0x158] sm:$0xff]
    %v2192 = vld [vmem:[#allocation6 + $0x160] sm:$0xff]
    %v2193 = vld [vmem:[#allocation6 + $0x168] sm:$0xff]
    %v2194 = vld [vmem:[#allocation6 + $0x170] sm:$0xff]
    %v2195 = vld [vmem:[#allocation6 + $0x178] sm:$0xff]
    %v2196 = vld [vmem:[#allocation6 + $0x180] sm:$0xff]
    %v2197 = vld [vmem:[#allocation6 + $0x188] sm:$0xff]
    %v2198 = vld [vmem:[#allocation6 + $0x190] sm:$0xff]
    %v2199 = vld [vmem:[#allocation6 + $0x198] sm:$0xff]
    %v2200 = vld [vmem:[#allocation6 + $0x1a0] sm:$0xff]
    %v2201 = vld [vmem:[#allocation6 + $0x1a8] sm:$0xff]
    %v2202 = vld [vmem:[#allocation6 + $0x1b0] sm:$0xff]
    %v2203 = vld [vmem:[#allocation6 + $0x1b8] sm:$0xff]
    %v2204 = vld [vmem:[#allocation6 + $0x1c0] sm:$0xff]
    %v2205 = vld [vmem:[#allocation6 + $0x1c8] sm:$0xff]
    %v2206 = vld [vmem:[#allocation6 + $0x1d0] sm:$0xff]
    %v2207 = vld [vmem:[#allocation6 + $0x1d8] sm:$0xff]
    %v2208 = vld [vmem:[#allocation6 + $0x1e0] sm:$0xff]
    %v2209 = vld [vmem:[#allocation6 + $0x1e8] sm:$0xff]
    %v2210 = vld [vmem:[#allocation6 + $0x1f0] sm:$0xff]
    %v2211 = vld [vmem:[#allocation6 + $0x1f8] sm:$0xff]
    %v2212 = vld [vmem:[#allocation6 + $0x200] sm:$0xff]
    %v2213 = vld [vmem:[#allocation6 + $0x208] sm:$0xff]
    %v2214 = vld [vmem:[#allocation6 + $0x210] sm:$0xff]
    %v2215 = vld [vmem:[#allocation6 + $0x218] sm:$0xff]
    %v2216 = vld [vmem:[#allocation6 + $0x220] sm:$0xff]
    %v2217 = vld [vmem:[#allocation6 + $0x228] sm:$0xff]
    %v2218 = vld [vmem:[#allocation6 + $0x230] sm:$0xff]
    %v2219 = vld [vmem:[#allocation6 + $0x238] sm:$0xff]
    %v2220 = vld [vmem:[#allocation6 + $0x240] sm:$0xff]
    %v2221 = vld [vmem:[#allocation6 + $0x248] sm:$0xff]
    %v2222 = vld [vmem:[#allocation6 + $0x250] sm:$0xff]
    %v2223 = vld [vmem:[#allocation6 + $0x258] sm:$0xff]
    %v2224 = vld [vmem:[#allocation6 + $0x260] sm:$0xff]
    %v2225 = vld [vmem:[#allocation6 + $0x268] sm:$0xff]
    %v2226 = vld [vmem:[#allocation6 + $0x270] sm:$0xff]
    %v2227 = vld [vmem:[#allocation6 + $0x278] sm:$0xff]
    %v2228 = vld [vmem:[#allocation6 + $0x280] sm:$0xff]
    %v2229 = vld [vmem:[#allocation6 + $0x288] sm:$0xff]
    %v2230 = vld [vmem:[#allocation6 + $0x290] sm:$0xff]
    %v2231 = vld [vmem:[#allocation6 + $0x298] sm:$0xff]
    %v2232 = vld [vmem:[#allocation6 + $0x2a0] sm:$0xff]
    %v2233 = vld [vmem:[#allocation6 + $0x2a8] sm:$0xff]
    %v2234 = vld [vmem:[#allocation6 + $0x2b0] sm:$0xff]
    %v2235 = vld [vmem:[#allocation6 + $0x2b8] sm:$0xff]
    %v2236 = vld [vmem:[#allocation6 + $0x2c0] sm:$0xff]
    %v2237 = vld [vmem:[#allocation6 + $0x2c8] sm:$0xff]
    %v2238 = vld [vmem:[#allocation6 + $0x2d0] sm:$0xff]
    %v2239 = vld [vmem:[#allocation6 + $0x2d8] sm:$0xff]
    %v2240 = vld [vmem:[#allocation6 + $0x2e0] sm:$0xff]
    %v2241 = vld [vmem:[#allocation6 + $0x2e8] sm:$0xff]
    %v2242 = vld [vmem:[#allocation6 + $0x2f0] sm:$0xff]
    %v2243 = vld [vmem:[#allocation6 + $0x2f8] sm:$0xff]
    %v2244 = vld [vmem:[#allocation6 + $0x300] sm:$0xff]
    %v2245 = vld [vmem:[#allocation6 + $0x308] sm:$0xff]
    %v2246 = vld [vmem:[#allocation6 + $0x310] sm:$0xff]
    %v2247 = vld [vmem:[#allocation6 + $0x318] sm:$0xff]
    %v2248 = vld [vmem:[#allocation6 + $0x320] sm:$0xff]
    %v2249 = vld [vmem:[#allocation6 + $0x328] sm:$0xff]
    %v2250 = vld [vmem:[#allocation6 + $0x330] sm:$0xff]
    %v2251 = vld [vmem:[#allocation6 + $0x338] sm:$0xff]
    %v2252 = vld [vmem:[#allocation6 + $0x340] sm:$0xff]
    %v2253 = vld [vmem:[#allocation6 + $0x348] sm:$0xff]
    %v2254 = vld [vmem:[#allocation6 + $0x350] sm:$0xff]
    %v2255 = vld [vmem:[#allocation6 + $0x358] sm:$0xff]
    %v2256 = vld [vmem:[#allocation6 + $0x360] sm:$0xff]
    %v2257 = vld [vmem:[#allocation6 + $0x368] sm:$0xff]
    %v2258 = vld [vmem:[#allocation6 + $0x370] sm:$0xff]
    %v2259 = vld [vmem:[#allocation6 + $0x378] sm:$0xff]
    %v2260 = vld [vmem:[#allocation6 + $0x380] sm:$0xff]
    %v2261 = vld [vmem:[#allocation6 + $0x388] sm:$0xff]
    %v2262 = vld [vmem:[#allocation6 + $0x390] sm:$0xff]
    %v2263 = vld [vmem:[#allocation6 + $0x398] sm:$0xff]
    %v2264 = vld [vmem:[#allocation6 + $0x3a0] sm:$0xff]
    %v2265 = vld [vmem:[#allocation6 + $0x3a8] sm:$0xff]
    %v2266 = vld [vmem:[#allocation6 + $0x3b0] sm:$0xff]
    %v2267 = vld [vmem:[#allocation6 + $0x3b8] sm:$0xff]
    %v2268 = vld [vmem:[#allocation6 + $0x3c0] sm:$0xff]
    %v2269 = vld [vmem:[#allocation6 + $0x3c8] sm:$0xff]
    %v2270 = vld [vmem:[#allocation6 + $0x3d0] sm:$0xff]
    %v2271 = vld [vmem:[#allocation6 + $0x3d8] sm:$0xff]
    %v2272 = vld [vmem:[#allocation6 + $0x3e0] sm:$0xff]
    %v2273 = vld [vmem:[#allocation6 + $0x3e8] sm:$0xff]
    %v2274 = vld [vmem:[#allocation6 + $0x3f0] sm:$0xff]
    %v2275 = vld [vmem:[#allocation6 + $0x3f8] sm:$0xff]
    %v2276 = vld [vmem:[#allocation6 + $0x400] sm:$0xff]
    %v2277 = vld [vmem:[#allocation6 + $0x408] sm:$0xff]
    %v2278 = vld [vmem:[#allocation6 + $0x410] sm:$0xff]
    %v2279 = vld [vmem:[#allocation6 + $0x418] sm:$0xff]
    %v2280 = vld [vmem:[#allocation6 + $0x420] sm:$0xff]
    %v2281 = vld [vmem:[#allocation6 + $0x428] sm:$0xff]
    %v2282 = vld [vmem:[#allocation6 + $0x430] sm:$0xff]
    %v2283 = vld [vmem:[#allocation6 + $0x438] sm:$0xff]
    %v2284 = vld [vmem:[#allocation6 + $0x440] sm:$0xff]
    %v2285 = vld [vmem:[#allocation6 + $0x448] sm:$0xff]
    %v2286 = vld [vmem:[#allocation6 + $0x450] sm:$0xff]
    %v2287 = vld [vmem:[#allocation6 + $0x458] sm:$0xff]
    %v2288 = vld [vmem:[#allocation6 + $0x460] sm:$0xff]
    %v2289 = vld [vmem:[#allocation6 + $0x468] sm:$0xff]
    %v2290 = vld [vmem:[#allocation6 + $0x470] sm:$0xff]
    %v2291 = vld [vmem:[#allocation6 + $0x478] sm:$0xff]
    %v2292 = vld [vmem:[#allocation6 + $0x480] sm:$0xff]
    %v2293 = vld [vmem:[#allocation6 + $0x488] sm:$0xff]
    %v2294 = vld [vmem:[#allocation6 + $0x490] sm:$0xff]
    %v2295 = vld [vmem:[#allocation6 + $0x498] sm:$0xff]
    %v2296 = vld [vmem:[#allocation6 + $0x4a0] sm:$0xff]
    %v2297 = vld [vmem:[#allocation6 + $0x4a8] sm:$0xff]
    %v2298 = vld [vmem:[#allocation6 + $0x4b0] sm:$0xff]
    %v2299 = vld [vmem:[#allocation6 + $0x4b8] sm:$0xff]
    %v2300 = vld [vmem:[#allocation6 + $0x4c0] sm:$0xff]
    %v2301 = vld [vmem:[#allocation6 + $0x4c8] sm:$0xff]
    %v2302 = vld [vmem:[#allocation6 + $0x4d0] sm:$0xff]
    %v2303 = vld [vmem:[#allocation6 + $0x4d8] sm:$0xff]
    %v2304 = vld [vmem:[#allocation6 + $0x4e0] sm:$0xff]
    %v2305 = vld [vmem:[#allocation6 + $0x4e8] sm:$0xff]
    %v2306 = vld [vmem:[#allocation6 + $0x4f0] sm:$0xff]
    %v2307 = vld [vmem:[#allocation6 + $0x4f8] sm:$0xff]
    %v2308 = vld [vmem:[#allocation6 + $0x500] sm:$0xff]
    %v2309 = vld [vmem:[#allocation6 + $0x508] sm:$0xff]
    %v2310 = vld [vmem:[#allocation6 + $0x510] sm:$0xff]
    %v2311 = vld [vmem:[#allocation6 + $0x518] sm:$0xff]
    %v2312 = vld [vmem:[#allocation6 + $0x520] sm:$0xff]
    %v2313 = vld [vmem:[#allocation6 + $0x528] sm:$0xff]
    %v2314 = vld [vmem:[#allocation6 + $0x530] sm:$0xff]
    %v2315 = vld [vmem:[#allocation6 + $0x538] sm:$0xff]
    %v2316 = vld [vmem:[#allocation6 + $0x540] sm:$0xff]
    %v2317 = vld [vmem:[#allocation6 + $0x548] sm:$0xff]
    %v2318 = vld [vmem:[#allocation6 + $0x550] sm:$0xff]
    %v2319 = vld [vmem:[#allocation6 + $0x558] sm:$0xff]
    %v2320 = vld [vmem:[#allocation6 + $0x560] sm:$0xff]
    %v2321 = vld [vmem:[#allocation6 + $0x568] sm:$0xff]
    %v2322 = vld [vmem:[#allocation6 + $0x570] sm:$0xff]
    %v2323 = vld [vmem:[#allocation6 + $0x578] sm:$0xff]
    %v2324 = vld [vmem:[#allocation6 + $0x580] sm:$0xff]
    %v2325 = vld [vmem:[#allocation6 + $0x588] sm:$0xff]
    %v2326 = vld [vmem:[#allocation6 + $0x590] sm:$0xff]
    %v2327 = vld [vmem:[#allocation6 + $0x598] sm:$0xff]
    %v2328 = vld [vmem:[#allocation6 + $0x5a0] sm:$0xff]
    %v2329 = vld [vmem:[#allocation6 + $0x5a8] sm:$0xff]
    %v2330 = vld [vmem:[#allocation6 + $0x5b0] sm:$0xff]
    %v2331 = vld [vmem:[#allocation6 + $0x5b8] sm:$0xff]
    %v2332 = vld [vmem:[#allocation6 + $0x5c0] sm:$0xff]
    %v2333 = vld [vmem:[#allocation6 + $0x5c8] sm:$0xff]
    %v2334 = vld [vmem:[#allocation6 + $0x5d0] sm:$0xff]
    %v2335 = vld [vmem:[#allocation6 + $0x5d8] sm:$0xff]
    %v2336 = vld [vmem:[#allocation6 + $0x5e0] sm:$0xff]
    %v2337 = vld [vmem:[#allocation6 + $0x5e8] sm:$0xff]
    %v2338 = vld [vmem:[#allocation6 + $0x5f0] sm:$0xff]
    %v2339 = vld [vmem:[#allocation6 + $0x5f8] sm:$0xff]
    %v2340 = vld [vmem:[#allocation6 + $0x600] sm:$0xff]
    %v2341 = vld [vmem:[#allocation6 + $0x608] sm:$0xff]
    %v2342 = vld [vmem:[#allocation6 + $0x610] sm:$0xff]
    %v2343 = vld [vmem:[#allocation6 + $0x618] sm:$0xff]
    %v2344 = vld [vmem:[#allocation6 + $0x620] sm:$0xff]
    %v2345 = vld [vmem:[#allocation6 + $0x628] sm:$0xff]
    %v2346 = vld [vmem:[#allocation6 + $0x630] sm:$0xff]
    %v2347 = vld [vmem:[#allocation6 + $0x638] sm:$0xff]
    %v2348 = vld [vmem:[#allocation6 + $0x640] sm:$0xff]
    %v2349 = vld [vmem:[#allocation6 + $0x648] sm:$0xff]
    %v2350 = vld [vmem:[#allocation6 + $0x650] sm:$0xff]
    %v2351 = vld [vmem:[#allocation6 + $0x658] sm:$0xff]
    %v2352 = vld [vmem:[#allocation6 + $0x660] sm:$0xff]
    %v2353 = vld [vmem:[#allocation6 + $0x668] sm:$0xff]
    %v2354 = vld [vmem:[#allocation6 + $0x670] sm:$0xff]
    %v2355 = vld [vmem:[#allocation6 + $0x678] sm:$0xff]
    %v2356 = vld [vmem:[#allocation6 + $0x680] sm:$0xff]
    %v2357 = vld [vmem:[#allocation6 + $0x688] sm:$0xff]
    %v2358 = vld [vmem:[#allocation6 + $0x690] sm:$0xff]
    %v2359 = vld [vmem:[#allocation6 + $0x698] sm:$0xff]
    %v2360 = vld [vmem:[#allocation6 + $0x6a0] sm:$0xff]
    %v2361 = vld [vmem:[#allocation6 + $0x6a8] sm:$0xff]
    %v2362 = vld [vmem:[#allocation6 + $0x6b0] sm:$0xff]
    %v2363 = vld [vmem:[#allocation6 + $0x6b8] sm:$0xff]
    %v2364 = vld [vmem:[#allocation6 + $0x6c0] sm:$0xff]
    %v2365 = vld [vmem:[#allocation6 + $0x6c8] sm:$0xff]
    %v2366 = vld [vmem:[#allocation6 + $0x6d0] sm:$0xff]
    %v2367 = vld [vmem:[#allocation6 + $0x6d8] sm:$0xff]
    %v2368 = vld [vmem:[#allocation6 + $0x6e0] sm:$0xff]
    %v2369 = vld [vmem:[#allocation6 + $0x6e8] sm:$0xff]
    %v2370 = vld [vmem:[#allocation6 + $0x6f0] sm:$0xff]
    %v2371 = vld [vmem:[#allocation6 + $0x6f8] sm:$0xff]
    %v2372 = vld [vmem:[#allocation6 + $0x700] sm:$0xff]
    %v2373 = vld [vmem:[#allocation6 + $0x708] sm:$0xff]
    %v2374 = vld [vmem:[#allocation6 + $0x710] sm:$0xff]
    %v2375 = vld [vmem:[#allocation6 + $0x718] sm:$0xff]
    %v2376 = vld [vmem:[#allocation6 + $0x720] sm:$0xff]
    %v2377 = vld [vmem:[#allocation6 + $0x728] sm:$0xff]
    %v2378 = vld [vmem:[#allocation6 + $0x730] sm:$0xff]
    %v2379 = vld [vmem:[#allocation6 + $0x738] sm:$0xff]
    %v2380 = vld [vmem:[#allocation6 + $0x740] sm:$0xff]
    %v2381 = vld [vmem:[#allocation6 + $0x748] sm:$0xff]
    %v2382 = vld [vmem:[#allocation6 + $0x750] sm:$0xff]
    %v2383 = vld [vmem:[#allocation6 + $0x758] sm:$0xff]
    %v2384 = vld [vmem:[#allocation6 + $0x760] sm:$0xff]
    %v2385 = vld [vmem:[#allocation6 + $0x768] sm:$0xff]
    %v2386 = vld [vmem:[#allocation6 + $0x770] sm:$0xff]
    %v2387 = vld [vmem:[#allocation6 + $0x778] sm:$0xff]
    %v2388 = vld [vmem:[#allocation6 + $0x780] sm:$0xff]
    %v2389 = vld [vmem:[#allocation6 + $0x788] sm:$0xff]
    %v2390 = vld [vmem:[#allocation6 + $0x790] sm:$0xff]
    %v2391 = vld [vmem:[#allocation6 + $0x798] sm:$0xff]
    %v2392 = vld [vmem:[#allocation6 + $0x7a0] sm:$0xff]
    %v2393 = vld [vmem:[#allocation6 + $0x7a8] sm:$0xff]
    %v2394 = vld [vmem:[#allocation6 + $0x7b0] sm:$0xff]
    %v2395 = vld [vmem:[#allocation6 + $0x7b8] sm:$0xff]
    %v2396 = vld [vmem:[#allocation6 + $0x7c0] sm:$0xff]
    %v2397 = vld [vmem:[#allocation6 + $0x7c8] sm:$0xff]
    %v2398 = vld [vmem:[#allocation6 + $0x7d0] sm:$0xff]
    %v2399 = vld [vmem:[#allocation6 + $0x7d8] sm:$0xff]
    %v2400 = vld [vmem:[#allocation6 + $0x7e0] sm:$0xff]
    %v2401 = vld [vmem:[#allocation6 + $0x7e8] sm:$0xff]
    %v2402 = vld [vmem:[#allocation6 + $0x7f0] sm:$0xff]
    %v2403 = vld [vmem:[#allocation6 + $0x7f8] sm:$0xff]
    %v2404 = vld [vmem:[#allocation6 + $0x800] sm:$0xff]
    %v2405 = vld [vmem:[#allocation6 + $0x808] sm:$0xff]
    %v2406 = vld [vmem:[#allocation6 + $0x810] sm:$0xff]
    %v2407 = vld [vmem:[#allocation6 + $0x818] sm:$0xff]
    %v2408 = vld [vmem:[#allocation6 + $0x820] sm:$0xff]
    %v2409 = vld [vmem:[#allocation6 + $0x828] sm:$0xff]
    %v2410 = vld [vmem:[#allocation6 + $0x830] sm:$0xff]
    %v2411 = vld [vmem:[#allocation6 + $0x838] sm:$0xff]
    %v2412 = vld [vmem:[#allocation6 + $0x840] sm:$0xff]
    %v2413 = vld [vmem:[#allocation6 + $0x848] sm:$0xff]
    %v2414 = vld [vmem:[#allocation6 + $0x850] sm:$0xff]
    %v2415 = vld [vmem:[#allocation6 + $0x858] sm:$0xff]
    %v2416 = vld [vmem:[#allocation6 + $0x860] sm:$0xff]
    %v2417 = vld [vmem:[#allocation6 + $0x868] sm:$0xff]
    %v2418 = vld [vmem:[#allocation6 + $0x870] sm:$0xff]
    %v2419 = vld [vmem:[#allocation6 + $0x878] sm:$0xff]
    %v2420 = vld [vmem:[#allocation6 + $0x880] sm:$0xff]
    %v2421 = vld [vmem:[#allocation6 + $0x888] sm:$0xff]
    %v2422 = vld [vmem:[#allocation6 + $0x890] sm:$0xff]
    %v2423 = vld [vmem:[#allocation6 + $0x898] sm:$0xff]
    %v2424 = vld [vmem:[#allocation6 + $0x8a0] sm:$0xff]
    %v2425 = vld [vmem:[#allocation6 + $0x8a8] sm:$0xff]
    %v2426 = vld [vmem:[#allocation6 + $0x8b0] sm:$0xff]
    %v2427 = vld [vmem:[#allocation6 + $0x8b8] sm:$0xff]
    %v2428 = vld [vmem:[#allocation6 + $0x8c0] sm:$0xff]
    %v2429 = vld [vmem:[#allocation6 + $0x8c8] sm:$0xff]
    %v2430 = vld [vmem:[#allocation6 + $0x8d0] sm:$0xff]
    %v2431 = vld [vmem:[#allocation6 + $0x8d8] sm:$0xff]
    %v2432 = vld [vmem:[#allocation6 + $0x8e0] sm:$0xff]
    %v2433 = vld [vmem:[#allocation6 + $0x8e8] sm:$0xff]
    %v2434 = vld [vmem:[#allocation6 + $0x8f0] sm:$0xff]
    %v2435 = vld [vmem:[#allocation6 + $0x8f8] sm:$0xff]
    %v2436 = vld [vmem:[#allocation6 + $0x900] sm:$0xff]
    %v2437 = vld [vmem:[#allocation6 + $0x908] sm:$0xff]
    %v2438 = vld [vmem:[#allocation6 + $0x910] sm:$0xff]
    %v2439 = vld [vmem:[#allocation6 + $0x918] sm:$0xff]
    %v2440 = vld [vmem:[#allocation6 + $0x920] sm:$0xff]
    %v2441 = vld [vmem:[#allocation6 + $0x928] sm:$0xff]
    %v2442 = vld [vmem:[#allocation6 + $0x930] sm:$0xff]
    %v2443 = vld [vmem:[#allocation6 + $0x938] sm:$0xff]
    %v2444 = vld [vmem:[#allocation6 + $0x940] sm:$0xff]
    %v2445 = vld [vmem:[#allocation6 + $0x948] sm:$0xff]
    %v2446 = vld [vmem:[#allocation6 + $0x950] sm:$0xff]
    %v2447 = vld [vmem:[#allocation6 + $0x958] sm:$0xff]
    %v2448 = vld [vmem:[#allocation6 + $0x960] sm:$0xff]
    %v2449 = vld [vmem:[#allocation6 + $0x968] sm:$0xff]
    %v2450 = vld [vmem:[#allocation6 + $0x970] sm:$0xff]
    %v2451 = vld [vmem:[#allocation6 + $0x978] sm:$0xff]
    %v2452 = vld [vmem:[#allocation6 + $0x980] sm:$0xff]
    %v2453 = vld [vmem:[#allocation6 + $0x988] sm:$0xff]
    %v2454 = vld [vmem:[#allocation6 + $0x990] sm:$0xff]
    %v2455 = vld [vmem:[#allocation6 + $0x998] sm:$0xff]
    %v2456 = vld [vmem:[#allocation6 + $0x9a0] sm:$0xff]
    %v2457 = vld [vmem:[#allocation6 + $0x9a8] sm:$0xff]
    %v2458 = vld [vmem:[#allocation6 + $0x9b0] sm:$0xff]
    %v2459 = vld [vmem:[#allocation6 + $0x9b8] sm:$0xff]
    %v2460 = vld [vmem:[#allocation6 + $0x9c0] sm:$0xff]
    %v2461 = vld [vmem:[#allocation6 + $0x9c8] sm:$0xff]
    %v2462 = vld [vmem:[#allocation6 + $0x9d0] sm:$0xff]
    %v2463 = vld [vmem:[#allocation6 + $0x9d8] sm:$0xff]
    %v2464 = vld [vmem:[#allocation6 + $0x9e0] sm:$0xff]
    %v2465 = vld [vmem:[#allocation6 + $0x9e8] sm:$0xff]
    %v2466 = vld [vmem:[#allocation6 + $0x9f0] sm:$0xff]
    %v2467 = vld [vmem:[#allocation6 + $0x9f8] sm:$0xff]
    %v2468 = vld [vmem:[#allocation6 + $0xa00] sm:$0xff]
    %v2469 = vld [vmem:[#allocation6 + $0xa08] sm:$0xff]
    %v2470 = vld [vmem:[#allocation6 + $0xa10] sm:$0xff]
    %v2471 = vld [vmem:[#allocation6 + $0xa18] sm:$0xff]
    %v2472 = vld [vmem:[#allocation6 + $0xa20] sm:$0xff]
    %v2473 = vld [vmem:[#allocation6 + $0xa28] sm:$0xff]
    %v2474 = vld [vmem:[#allocation6 + $0xa30] sm:$0xff]
    %v2475 = vld [vmem:[#allocation6 + $0xa38] sm:$0xff]
    %v2476 = vld [vmem:[#allocation6 + $0xa40] sm:$0xff]
    %v2477 = vld [vmem:[#allocation6 + $0xa48] sm:$0xff]
    %v2478 = vld [vmem:[#allocation6 + $0xa50] sm:$0xff]
    %v2479 = vld [vmem:[#allocation6 + $0xa58] sm:$0xff]
    %v2480 = vld [vmem:[#allocation6 + $0xa60] sm:$0xff]
    %v2481 = vld [vmem:[#allocation6 + $0xa68] sm:$0xff]
    %v2482 = vld [vmem:[#allocation6 + $0xa70] sm:$0xff]
    %v2483 = vld [vmem:[#allocation6 + $0xa78] sm:$0xff]
    %v2484 = vld [vmem:[#allocation6 + $0xa80] sm:$0xff]
    %v2485 = vld [vmem:[#allocation6 + $0xa88] sm:$0xff]
    %v2486 = vld [vmem:[#allocation6 + $0xa90] sm:$0xff]
    %v2487 = vld [vmem:[#allocation6 + $0xa98] sm:$0xff]
    %v2488 = vld [vmem:[#allocation6 + $0xaa0] sm:$0xff]
    %v2489 = vld [vmem:[#allocation6 + $0xaa8] sm:$0xff]
    %v2490 = vld [vmem:[#allocation6 + $0xab0] sm:$0xff]
    %v2491 = vld [vmem:[#allocation6 + $0xab8] sm:$0xff]
    %v2492 = vld [vmem:[#allocation6 + $0xac0] sm:$0xff]
    %v2493 = vld [vmem:[#allocation6 + $0xac8] sm:$0xff]
    %v2494 = vld [vmem:[#allocation6 + $0xad0] sm:$0xff]
    %v2495 = vld [vmem:[#allocation6 + $0xad8] sm:$0xff]
    %v2496 = vld [vmem:[#allocation6 + $0xae0] sm:$0xff]
    %v2497 = vld [vmem:[#allocation6 + $0xae8] sm:$0xff]
    %v2498 = vld [vmem:[#allocation6 + $0xaf0] sm:$0xff]
    %v2499 = vld [vmem:[#allocation6 + $0xaf8] sm:$0xff]
    %v2500 = vld [vmem:[#allocation6 + $0xb00] sm:$0xff]
    %v2501 = vld [vmem:[#allocation6 + $0xb08] sm:$0xff]
    %v2502 = vld [vmem:[#allocation6 + $0xb10] sm:$0xff]
    %v2503 = vld [vmem:[#allocation6 + $0xb18] sm:$0xff]
    %v2504 = vld [vmem:[#allocation6 + $0xb20] sm:$0xff]
    %v2505 = vld [vmem:[#allocation6 + $0xb28] sm:$0xff]
    %v2506 = vld [vmem:[#allocation6 + $0xb30] sm:$0xff]
    %v2507 = vld [vmem:[#allocation6 + $0xb38] sm:$0xff]
    %v2508 = vld [vmem:[#allocation6 + $0xb40] sm:$0xff]
    %v2509 = vld [vmem:[#allocation6 + $0xb48] sm:$0xff]
    %v2510 = vld [vmem:[#allocation6 + $0xb50] sm:$0xff]
    %v2511 = vld [vmem:[#allocation6 + $0xb58] sm:$0xff]
    %v2512 = vld [vmem:[#allocation6 + $0xb60] sm:$0xff]
    %v2513 = vld [vmem:[#allocation6 + $0xb68] sm:$0xff]
    %v2514 = vld [vmem:[#allocation6 + $0xb70] sm:$0xff]
    %v2515 = vld [vmem:[#allocation6 + $0xb78] sm:$0xff]
    %v2516 = vld [vmem:[#allocation6 + $0xb80] sm:$0xff]
    %v2517 = vld [vmem:[#allocation6 + $0xb88] sm:$0xff]
    %v2518 = vld [vmem:[#allocation6 + $0xb90] sm:$0xff]
    %v2519 = vld [vmem:[#allocation6 + $0xb98] sm:$0xff]
    %v2520 = vld [vmem:[#allocation6 + $0xba0] sm:$0xff]
    %v2521 = vld [vmem:[#allocation6 + $0xba8] sm:$0xff]
    %v2522 = vld [vmem:[#allocation6 + $0xbb0] sm:$0xff]
    %v2523 = vld [vmem:[#allocation6 + $0xbb8] sm:$0xff]
    %v2524 = vld [vmem:[#allocation6 + $0xbc0] sm:$0xff]
    %v2525 = vld [vmem:[#allocation6 + $0xbc8] sm:$0xff]
    %v2526 = vld [vmem:[#allocation6 + $0xbd0] sm:$0xff]
    %v2527 = vld [vmem:[#allocation6 + $0xbd8] sm:$0xff]
    %v2528 = vld [vmem:[#allocation6 + $0xbe0] sm:$0xff]
    %v2529 = vld [vmem:[#allocation6 + $0xbe8] sm:$0xff]
    %v2530 = vld [vmem:[#allocation6 + $0xbf0] sm:$0xff]
    %v2531 = vld [vmem:[#allocation6 + $0xbf8] sm:$0xff]
    %v2532 = vld [vmem:[#allocation6 + $0xc00] sm:$0xff]
    %v2533 = vld [vmem:[#allocation6 + $0xc08] sm:$0xff]
    %v2534 = vld [vmem:[#allocation6 + $0xc10] sm:$0xff]
    %v2535 = vld [vmem:[#allocation6 + $0xc18] sm:$0xff]
    %v2536 = vld [vmem:[#allocation6 + $0xc20] sm:$0xff]
    %v2537 = vld [vmem:[#allocation6 + $0xc28] sm:$0xff]
    %v2538 = vld [vmem:[#allocation6 + $0xc30] sm:$0xff]
    %v2539 = vld [vmem:[#allocation6 + $0xc38] sm:$0xff]
    %v2540 = vld [vmem:[#allocation6 + $0xc40] sm:$0xff]
    %v2541 = vld [vmem:[#allocation6 + $0xc48] sm:$0xff]
    %v2542 = vld [vmem:[#allocation6 + $0xc50] sm:$0xff]
    %v2543 = vld [vmem:[#allocation6 + $0xc58] sm:$0xff]
    %v2544 = vld [vmem:[#allocation6 + $0xc60] sm:$0xff]
    %v2545 = vld [vmem:[#allocation6 + $0xc68] sm:$0xff]
    %v2546 = vld [vmem:[#allocation6 + $0xc70] sm:$0xff]
    %v2547 = vld [vmem:[#allocation6 + $0xc78] sm:$0xff]
    %v2548 = vld [vmem:[#allocation6 + $0xc80] sm:$0xff]
    %v2549 = vld [vmem:[#allocation6 + $0xc88] sm:$0xff]
    %v2550 = vld [vmem:[#allocation6 + $0xc90] sm:$0xff]
    %v2551 = vld [vmem:[#allocation6 + $0xc98] sm:$0xff]
    %v2552 = vld [vmem:[#allocation6 + $0xca0] sm:$0xff]
    %v2553 = vld [vmem:[#allocation6 + $0xca8] sm:$0xff]
    %v2554 = vld [vmem:[#allocation6 + $0xcb0] sm:$0xff]
    %v2555 = vld [vmem:[#allocation6 + $0xcb8] sm:$0xff]
    %v2556 = vld [vmem:[#allocation6 + $0xcc0] sm:$0xff]
    %v2557 = vld [vmem:[#allocation6 + $0xcc8] sm:$0xff]
    %v2558 = vld [vmem:[#allocation6 + $0xcd0] sm:$0xff]
    %v2559 = vld [vmem:[#allocation6 + $0xcd8] sm:$0xff]
    %v2560 = vld [vmem:[#allocation6 + $0xce0] sm:$0xff]
    %v2561 = vld [vmem:[#allocation6 + $0xce8] sm:$0xff]
    %v2562 = vld [vmem:[#allocation6 + $0xcf0] sm:$0xff]
    %v2563 = vld [vmem:[#allocation6 + $0xcf8] sm:$0xff]
    %v2564 = vld [vmem:[#allocation6 + $0xd00] sm:$0xff]
    %v2565 = vld [vmem:[#allocation6 + $0xd08] sm:$0xff]
    %v2566 = vld [vmem:[#allocation6 + $0xd10] sm:$0xff]
    %v2567 = vld [vmem:[#allocation6 + $0xd18] sm:$0xff]
    %v2568 = vld [vmem:[#allocation6 + $0xd20] sm:$0xff]
    %v2569 = vld [vmem:[#allocation6 + $0xd28] sm:$0xff]
    %v2570 = vld [vmem:[#allocation6 + $0xd30] sm:$0xff]
    %v2571 = vld [vmem:[#allocation6 + $0xd38] sm:$0xff]
    %v2572 = vld [vmem:[#allocation6 + $0xd40] sm:$0xff]
    %v2573 = vld [vmem:[#allocation6 + $0xd48] sm:$0xff]
    %v2574 = vld [vmem:[#allocation6 + $0xd50] sm:$0xff]
    %v2575 = vld [vmem:[#allocation6 + $0xd58] sm:$0xff]
    %v2576 = vld [vmem:[#allocation6 + $0xd60] sm:$0xff]
    %v2577 = vld [vmem:[#allocation6 + $0xd68] sm:$0xff]
    %v2578 = vld [vmem:[#allocation6 + $0xd70] sm:$0xff]
    %v2579 = vld [vmem:[#allocation6 + $0xd78] sm:$0xff]
    %v2580 = vld [vmem:[#allocation6 + $0xd80] sm:$0xff]
    %v2581 = vld [vmem:[#allocation6 + $0xd88] sm:$0xff]
    %v2582 = vld [vmem:[#allocation6 + $0xd90] sm:$0xff]
    %v2583 = vld [vmem:[#allocation6 + $0xd98] sm:$0xff]
    %v2584 = vld [vmem:[#allocation6 + $0xda0] sm:$0xff]
    %v2585 = vld [vmem:[#allocation6 + $0xda8] sm:$0xff]
    %v2586 = vld [vmem:[#allocation6 + $0xdb0] sm:$0xff]
    %v2587 = vld [vmem:[#allocation6 + $0xdb8] sm:$0xff]
    %v2588 = vld [vmem:[#allocation6 + $0xdc0] sm:$0xff]
    %v2589 = vld [vmem:[#allocation6 + $0xdc8] sm:$0xff]
    %v2590 = vld [vmem:[#allocation6 + $0xdd0] sm:$0xff]
    %v2591 = vld [vmem:[#allocation6 + $0xdd8] sm:$0xff]
    %v2592 = vld [vmem:[#allocation6 + $0xde0] sm:$0xff]
    %v2593 = vld [vmem:[#allocation6 + $0xde8] sm:$0xff]
    %v2594 = vld [vmem:[#allocation6 + $0xdf0] sm:$0xff]
    %v2595 = vld [vmem:[#allocation6 + $0xdf8] sm:$0xff]
    %v2596 = vld [vmem:[#allocation6 + $0xe00] sm:$0xff]
    %v2597 = vld [vmem:[#allocation6 + $0xe08] sm:$0xff]
    %v2598 = vld [vmem:[#allocation6 + $0xe10] sm:$0xff]
    %v2599 = vld [vmem:[#allocation6 + $0xe18] sm:$0xff]
    %v2600 = vld [vmem:[#allocation6 + $0xe20] sm:$0xff]
    %v2601 = vld [vmem:[#allocation6 + $0xe28] sm:$0xff]
    %v2602 = vld [vmem:[#allocation6 + $0xe30] sm:$0xff]
    %v2603 = vld [vmem:[#allocation6 + $0xe38] sm:$0xff]
    %v2604 = vld [vmem:[#allocation6 + $0xe40] sm:$0xff]
    %v2605 = vld [vmem:[#allocation6 + $0xe48] sm:$0xff]
    %v2606 = vld [vmem:[#allocation6 + $0xe50] sm:$0xff]
    %v2607 = vld [vmem:[#allocation6 + $0xe58] sm:$0xff]
    %v2608 = vld [vmem:[#allocation6 + $0xe60] sm:$0xff]
    %v2609 = vld [vmem:[#allocation6 + $0xe68] sm:$0xff]
    %v2610 = vld [vmem:[#allocation6 + $0xe70] sm:$0xff]
    %v2611 = vld [vmem:[#allocation6 + $0xe78] sm:$0xff]
    %v2612 = vld [vmem:[#allocation6 + $0xe80] sm:$0xff]
    %v2613 = vld [vmem:[#allocation6 + $0xe88] sm:$0xff]
    %v2614 = vld [vmem:[#allocation6 + $0xe90] sm:$0xff]
    %v2615 = vld [vmem:[#allocation6 + $0xe98] sm:$0xff]
    %v2616 = vld [vmem:[#allocation6 + $0xea0] sm:$0xff]
    %v2617 = vld [vmem:[#allocation6 + $0xea8] sm:$0xff]
    %v2618 = vld [vmem:[#allocation6 + $0xeb0] sm:$0xff]
    %v2619 = vld [vmem:[#allocation6 + $0xeb8] sm:$0xff]
    %v2620 = vld [vmem:[#allocation6 + $0xec0] sm:$0xff]
    %v2621 = vld [vmem:[#allocation6 + $0xec8] sm:$0xff]
    %v2622 = vld [vmem:[#allocation6 + $0xed0] sm:$0xff]
    %v2623 = vld [vmem:[#allocation6 + $0xed8] sm:$0xff]
    %v2624 = vld [vmem:[#allocation6 + $0xee0] sm:$0xff]
    %v2625 = vld [vmem:[#allocation6 + $0xee8] sm:$0xff]
    %v2626 = vld [vmem:[#allocation6 + $0xef0] sm:$0xff]
    %v2627 = vld [vmem:[#allocation6 + $0xef8] sm:$0xff]
    %v2628 = vld [vmem:[#allocation6 + $0xf00] sm:$0xff]
    %v2629 = vld [vmem:[#allocation6 + $0xf08] sm:$0xff]
    %v2630 = vld [vmem:[#allocation6 + $0xf10] sm:$0xff]
    %v2631 = vld [vmem:[#allocation6 + $0xf18] sm:$0xff]
    %v2632 = vld [vmem:[#allocation6 + $0xf20] sm:$0xff]
    %v2633 = vld [vmem:[#allocation6 + $0xf28] sm:$0xff]
    %v2634 = vld [vmem:[#allocation6 + $0xf30] sm:$0xff]
    %v2635 = vld [vmem:[#allocation6 + $0xf38] sm:$0xff]
    %v2636 = vld [vmem:[#allocation6 + $0xf40] sm:$0xff]
    %v2637 = vld [vmem:[#allocation6 + $0xf48] sm:$0xff]
    %v2638 = vld [vmem:[#allocation6 + $0xf50] sm:$0xff]
    %v2639 = vld [vmem:[#allocation6 + $0xf58] sm:$0xff]
    %v2640 = vld [vmem:[#allocation6 + $0xf60] sm:$0xff]
    %v2641 = vld [vmem:[#allocation6 + $0xf68] sm:$0xff]
    %v2642 = vld [vmem:[#allocation6 + $0xf70] sm:$0xff]
    %v2643 = vld [vmem:[#allocation6 + $0xf78] sm:$0xff]
    %v2644 = vld [vmem:[#allocation6 + $0xf80] sm:$0xff]
    %v2645 = vld [vmem:[#allocation6 + $0xf88] sm:$0xff]
    %v2646 = vld [vmem:[#allocation6 + $0xf90] sm:$0xff]
    %v2647 = vld [vmem:[#allocation6 + $0xf98] sm:$0xff]
    %v2648 = vld [vmem:[#allocation6 + $0xfa0] sm:$0xff]
    %v2649 = vld [vmem:[#allocation6 + $0xfa8] sm:$0xff]
    %v2650 = vld [vmem:[#allocation6 + $0xfb0] sm:$0xff]
    %v2651 = vld [vmem:[#allocation6 + $0xfb8] sm:$0xff]
    %v2652 = vld [vmem:[#allocation6 + $0xfc0] sm:$0xff]
    %v2653 = vld [vmem:[#allocation6 + $0xfc8] sm:$0xff]
    %v2654 = vld [vmem:[#allocation6 + $0xfd0] sm:$0xff]
    %v2655 = vld [vmem:[#allocation6 + $0xfd8] sm:$0xff]
    %v2656 = vld [vmem:[#allocation6 + $0xfe0] sm:$0xff]
    %v2657 = vld [vmem:[#allocation6 + $0xfe8] sm:$0xff]
    %v2658 = vld [vmem:[#allocation6 + $0xff0] sm:$0xff]
    %v2659 = vld [vmem:[#allocation6 + $0xff8] sm:$0xff]
    %v2660 = vld [vmem:[#allocation7] sm:$0xff]
    %v2662 = vperm.slane %v2660, 0
    %v2663 = vperm.slane %v2660, 1
    %v2664 = vperm.slane %v2660, 2
    %v2665 = vperm.slane %v2660, 3
    %v2666 = vperm.slane %v2660, 4
    %v2667 = vperm.slane %v2660, 5
    %v2668 = vperm.slane %v2660, 6
    %v2669 = vperm.slane %v2660, 7
    %v3190 = vunpack.c.l.b16 %v2148
    %v3191 = vunpack.c.h.b16 %v2148
    %v3192 = vunpack.c.l.b16 %v2149
    %v3193 = vunpack.c.h.b16 %v2149
    %v3194 = vunpack.c.l.b16 %v2150
    %v3195 = vunpack.c.h.b16 %v2150
    %v3196 = vunpack.c.l.b16 %v2151
    %v3197 = vunpack.c.h.b16 %v2151
    %v3198 = vunpack.c.l.b16 %v2152
    %v3199 = vunpack.c.h.b16 %v2152
    %v3200 = vunpack.c.l.b16 %v2153
    %v3201 = vunpack.c.h.b16 %v2153
    %v3202 = vunpack.c.l.b16 %v2154
    %v3203 = vunpack.c.h.b16 %v2154
    %v3204 = vunpack.c.l.b16 %v2155
    %v3205 = vunpack.c.h.b16 %v2155
    %v3206 = vunpack.c.l.b16 %v2156
    %v3207 = vunpack.c.h.b16 %v2156
    %v3208 = vunpack.c.l.b16 %v2157
    %v3209 = vunpack.c.h.b16 %v2157
    %v3210 = vunpack.c.l.b16 %v2158
    %v3211 = vunpack.c.h.b16 %v2158
    %v3212 = vunpack.c.l.b16 %v2159
    %v3213 = vunpack.c.h.b16 %v2159
    %v3214 = vunpack.c.l.b16 %v2160
    %v3215 = vunpack.c.h.b16 %v2160
    %v3216 = vunpack.c.l.b16 %v2161
    %v3217 = vunpack.c.h.b16 %v2161
    %v3218 = vunpack.c.l.b16 %v2162
    %v3219 = vunpack.c.h.b16 %v2162
    %v3220 = vunpack.c.l.b16 %v2163
    %v3221 = vunpack.c.h.b16 %v2163
    %v3222 = vunpack.c.l.b16 %v2164
    %v3223 = vunpack.c.h.b16 %v2164
    %v3224 = vunpack.c.l.b16 %v2165
    %v3225 = vunpack.c.h.b16 %v2165
    %v3226 = vunpack.c.l.b16 %v2166
    %v3227 = vunpack.c.h.b16 %v2166
    %v3228 = vunpack.c.l.b16 %v2167
    %v3229 = vunpack.c.h.b16 %v2167
    %v3230 = vunpack.c.l.b16 %v2168
    %v3231 = vunpack.c.h.b16 %v2168
    %v3232 = vunpack.c.l.b16 %v2169
    %v3233 = vunpack.c.h.b16 %v2169
    %v3234 = vunpack.c.l.b16 %v2170
    %v3235 = vunpack.c.h.b16 %v2170
    %v3236 = vunpack.c.l.b16 %v2171
    %v3237 = vunpack.c.h.b16 %v2171
    %v3238 = vunpack.c.l.b16 %v2172
    %v3239 = vunpack.c.h.b16 %v2172
    %v3240 = vunpack.c.l.b16 %v2173
    %v3241 = vunpack.c.h.b16 %v2173
    %v3242 = vunpack.c.l.b16 %v2174
    %v3243 = vunpack.c.h.b16 %v2174
    %v3244 = vunpack.c.l.b16 %v2175
    %v3245 = vunpack.c.h.b16 %v2175
    %v3246 = vunpack.c.l.b16 %v2176
    %v3247 = vunpack.c.h.b16 %v2176
    %v3248 = vunpack.c.l.b16 %v2177
    %v3249 = vunpack.c.h.b16 %v2177
    %v3250 = vunpack.c.l.b16 %v2178
    %v3251 = vunpack.c.h.b16 %v2178
    %v3252 = vunpack.c.l.b16 %v2179
    %v3253 = vunpack.c.h.b16 %v2179
    %v3254 = vunpack.c.l.b16 %v2180
    %v3255 = vunpack.c.h.b16 %v2180
    %v3256 = vunpack.c.l.b16 %v2181
    %v3257 = vunpack.c.h.b16 %v2181
    %v3258 = vunpack.c.l.b16 %v2182
    %v3259 = vunpack.c.h.b16 %v2182
    %v3260 = vunpack.c.l.b16 %v2183
    %v3261 = vunpack.c.h.b16 %v2183
    %v3262 = vunpack.c.l.b16 %v2184
    %v3263 = vunpack.c.h.b16 %v2184
    %v3264 = vunpack.c.l.b16 %v2185
    %v3265 = vunpack.c.h.b16 %v2185
    %v3266 = vunpack.c.l.b16 %v2186
    %v3267 = vunpack.c.h.b16 %v2186
    %v3268 = vunpack.c.l.b16 %v2187
    %v3269 = vunpack.c.h.b16 %v2187
    %v3270 = vunpack.c.l.b16 %v2188
    %v3271 = vunpack.c.h.b16 %v2188
    %v3272 = vunpack.c.l.b16 %v2189
    %v3273 = vunpack.c.h.b16 %v2189
    %v3274 = vunpack.c.l.b16 %v2190
    %v3275 = vunpack.c.h.b16 %v2190
    %v3276 = vunpack.c.l.b16 %v2191
    %v3277 = vunpack.c.h.b16 %v2191
    %v3278 = vunpack.c.l.b16 %v2192
    %v3279 = vunpack.c.h.b16 %v2192
    %v3280 = vunpack.c.l.b16 %v2193
    %v3281 = vunpack.c.h.b16 %v2193
    %v3282 = vunpack.c.l.b16 %v2194
    %v3283 = vunpack.c.h.b16 %v2194
    %v3284 = vunpack.c.l.b16 %v2195
    %v3285 = vunpack.c.h.b16 %v2195
    %v3286 = vunpack.c.l.b16 %v2196
    %v3287 = vunpack.c.h.b16 %v2196
    %v3288 = vunpack.c.l.b16 %v2197
    %v3289 = vunpack.c.h.b16 %v2197
    %v3290 = vunpack.c.l.b16 %v2198
    %v3291 = vunpack.c.h.b16 %v2198
    %v3292 = vunpack.c.l.b16 %v2199
    %v3293 = vunpack.c.h.b16 %v2199
    %v3294 = vunpack.c.l.b16 %v2200
    %v3295 = vunpack.c.h.b16 %v2200
    %v3296 = vunpack.c.l.b16 %v2201
    %v3297 = vunpack.c.h.b16 %v2201
    %v3298 = vunpack.c.l.b16 %v2202
    %v3299 = vunpack.c.h.b16 %v2202
    %v3300 = vunpack.c.l.b16 %v2203
    %v3301 = vunpack.c.h.b16 %v2203
    %v3302 = vunpack.c.l.b16 %v2204
    %v3303 = vunpack.c.h.b16 %v2204
    %v3304 = vunpack.c.l.b16 %v2205
    %v3305 = vunpack.c.h.b16 %v2205
    %v3306 = vunpack.c.l.b16 %v2206
    %v3307 = vunpack.c.h.b16 %v2206
    %v3308 = vunpack.c.l.b16 %v2207
    %v3309 = vunpack.c.h.b16 %v2207
    %v3310 = vunpack.c.l.b16 %v2208
    %v3311 = vunpack.c.h.b16 %v2208
    %v3312 = vunpack.c.l.b16 %v2209
    %v3313 = vunpack.c.h.b16 %v2209
    %v3314 = vunpack.c.l.b16 %v2210
    %v3315 = vunpack.c.h.b16 %v2210
    %v3316 = vunpack.c.l.b16 %v2211
    %v3317 = vunpack.c.h.b16 %v2211
    %v3318 = vunpack.c.l.b16 %v2212
    %v3319 = vunpack.c.h.b16 %v2212
    %v3320 = vunpack.c.l.b16 %v2213
    %v3321 = vunpack.c.h.b16 %v2213
    %v3322 = vunpack.c.l.b16 %v2214
    %v3323 = vunpack.c.h.b16 %v2214
    %v3324 = vunpack.c.l.b16 %v2215
    %v3325 = vunpack.c.h.b16 %v2215
    %v3326 = vunpack.c.l.b16 %v2216
    %v3327 = vunpack.c.h.b16 %v2216
    %v3328 = vunpack.c.l.b16 %v2217
    %v3329 = vunpack.c.h.b16 %v2217
    %v3330 = vunpack.c.l.b16 %v2218
    %v3331 = vunpack.c.h.b16 %v2218
    %v3332 = vunpack.c.l.b16 %v2219
    %v3333 = vunpack.c.h.b16 %v2219
    %v3334 = vunpack.c.l.b16 %v2220
    %v3335 = vunpack.c.h.b16 %v2220
    %v3336 = vunpack.c.l.b16 %v2221
    %v3337 = vunpack.c.h.b16 %v2221
    %v3338 = vunpack.c.l.b16 %v2222
    %v3339 = vunpack.c.h.b16 %v2222
    %v3340 = vunpack.c.l.b16 %v2223
    %v3341 = vunpack.c.h.b16 %v2223
    %v3342 = vunpack.c.l.b16 %v2224
    %v3343 = vunpack.c.h.b16 %v2224
    %v3344 = vunpack.c.l.b16 %v2225
    %v3345 = vunpack.c.h.b16 %v2225
    %v3346 = vunpack.c.l.b16 %v2226
    %v3347 = vunpack.c.h.b16 %v2226
    %v3348 = vunpack.c.l.b16 %v2227
    %v3349 = vunpack.c.h.b16 %v2227
    %v3350 = vunpack.c.l.b16 %v2228
    %v3351 = vunpack.c.h.b16 %v2228
    %v3352 = vunpack.c.l.b16 %v2229
    %v3353 = vunpack.c.h.b16 %v2229
    %v3354 = vunpack.c.l.b16 %v2230
    %v3355 = vunpack.c.h.b16 %v2230
    %v3356 = vunpack.c.l.b16 %v2231
    %v3357 = vunpack.c.h.b16 %v2231
    %v3358 = vunpack.c.l.b16 %v2232
    %v3359 = vunpack.c.h.b16 %v2232
    %v3360 = vunpack.c.l.b16 %v2233
    %v3361 = vunpack.c.h.b16 %v2233
    %v3362 = vunpack.c.l.b16 %v2234
    %v3363 = vunpack.c.h.b16 %v2234
    %v3364 = vunpack.c.l.b16 %v2235
    %v3365 = vunpack.c.h.b16 %v2235
    %v3366 = vunpack.c.l.b16 %v2236
    %v3367 = vunpack.c.h.b16 %v2236
    %v3368 = vunpack.c.l.b16 %v2237
    %v3369 = vunpack.c.h.b16 %v2237
    %v3370 = vunpack.c.l.b16 %v2238
    %v3371 = vunpack.c.h.b16 %v2238
    %v3372 = vunpack.c.l.b16 %v2239
    %v3373 = vunpack.c.h.b16 %v2239
    %v3374 = vunpack.c.l.b16 %v2240
    %v3375 = vunpack.c.h.b16 %v2240
    %v3376 = vunpack.c.l.b16 %v2241
    %v3377 = vunpack.c.h.b16 %v2241
    %v3378 = vunpack.c.l.b16 %v2242
    %v3379 = vunpack.c.h.b16 %v2242
    %v3380 = vunpack.c.l.b16 %v2243
    %v3381 = vunpack.c.h.b16 %v2243
    %v3382 = vunpack.c.l.b16 %v2244
    %v3383 = vunpack.c.h.b16 %v2244
    %v3384 = vunpack.c.l.b16 %v2245
    %v3385 = vunpack.c.h.b16 %v2245
    %v3386 = vunpack.c.l.b16 %v2246
    %v3387 = vunpack.c.h.b16 %v2246
    %v3388 = vunpack.c.l.b16 %v2247
    %v3389 = vunpack.c.h.b16 %v2247
    %v3390 = vunpack.c.l.b16 %v2248
    %v3391 = vunpack.c.h.b16 %v2248
    %v3392 = vunpack.c.l.b16 %v2249
    %v3393 = vunpack.c.h.b16 %v2249
    %v3394 = vunpack.c.l.b16 %v2250
    %v3395 = vunpack.c.h.b16 %v2250
    %v3396 = vunpack.c.l.b16 %v2251
    %v3397 = vunpack.c.h.b16 %v2251
    %v3398 = vunpack.c.l.b16 %v2252
    %v3399 = vunpack.c.h.b16 %v2252
    %v3400 = vunpack.c.l.b16 %v2253
    %v3401 = vunpack.c.h.b16 %v2253
    %v3402 = vunpack.c.l.b16 %v2254
    %v3403 = vunpack.c.h.b16 %v2254
    %v3404 = vunpack.c.l.b16 %v2255
    %v3405 = vunpack.c.h.b16 %v2255
    %v3406 = vunpack.c.l.b16 %v2256
    %v3407 = vunpack.c.h.b16 %v2256
    %v3408 = vunpack.c.l.b16 %v2257
    %v3409 = vunpack.c.h.b16 %v2257
    %v3410 = vunpack.c.l.b16 %v2258
    %v3411 = vunpack.c.h.b16 %v2258
    %v3412 = vunpack.c.l.b16 %v2259
    %v3413 = vunpack.c.h.b16 %v2259
    %v3414 = vunpack.c.l.b16 %v2260
    %v3415 = vunpack.c.h.b16 %v2260
    %v3416 = vunpack.c.l.b16 %v2261
    %v3417 = vunpack.c.h.b16 %v2261
    %v3418 = vunpack.c.l.b16 %v2262
    %v3419 = vunpack.c.h.b16 %v2262
    %v3420 = vunpack.c.l.b16 %v2263
    %v3421 = vunpack.c.h.b16 %v2263
    %v3422 = vunpack.c.l.b16 %v2264
    %v3423 = vunpack.c.h.b16 %v2264
    %v3424 = vunpack.c.l.b16 %v2265
    %v3425 = vunpack.c.h.b16 %v2265
    %v3426 = vunpack.c.l.b16 %v2266
    %v3427 = vunpack.c.h.b16 %v2266
    %v3428 = vunpack.c.l.b16 %v2267
    %v3429 = vunpack.c.h.b16 %v2267
    %v3430 = vunpack.c.l.b16 %v2268
    %v3431 = vunpack.c.h.b16 %v2268
    %v3432 = vunpack.c.l.b16 %v2269
    %v3433 = vunpack.c.h.b16 %v2269
    %v3434 = vunpack.c.l.b16 %v2270
    %v3435 = vunpack.c.h.b16 %v2270
    %v3436 = vunpack.c.l.b16 %v2271
    %v3437 = vunpack.c.h.b16 %v2271
    %v3438 = vunpack.c.l.b16 %v2272
    %v3439 = vunpack.c.h.b16 %v2272
    %v3440 = vunpack.c.l.b16 %v2273
    %v3441 = vunpack.c.h.b16 %v2273
    %v3442 = vunpack.c.l.b16 %v2274
    %v3443 = vunpack.c.h.b16 %v2274
    %v3444 = vunpack.c.l.b16 %v2275
    %v3445 = vunpack.c.h.b16 %v2275
    %v3446 = vunpack.c.l.b16 %v2276
    %v3447 = vunpack.c.h.b16 %v2276
    %v3448 = vunpack.c.l.b16 %v2277
    %v3449 = vunpack.c.h.b16 %v2277
    %v3450 = vunpack.c.l.b16 %v2278
    %v3451 = vunpack.c.h.b16 %v2278
    %v3452 = vunpack.c.l.b16 %v2279
    %v3453 = vunpack.c.h.b16 %v2279
    %v3454 = vunpack.c.l.b16 %v2280
    %v3455 = vunpack.c.h.b16 %v2280
    %v3456 = vunpack.c.l.b16 %v2281
    %v3457 = vunpack.c.h.b16 %v2281
    %v3458 = vunpack.c.l.b16 %v2282
    %v3459 = vunpack.c.h.b16 %v2282
    %v3460 = vunpack.c.l.b16 %v2283
    %v3461 = vunpack.c.h.b16 %v2283
    %v3462 = vunpack.c.l.b16 %v2284
    %v3463 = vunpack.c.h.b16 %v2284
    %v3464 = vunpack.c.l.b16 %v2285
    %v3465 = vunpack.c.h.b16 %v2285
    %v3466 = vunpack.c.l.b16 %v2286
    %v3467 = vunpack.c.h.b16 %v2286
    %v3468 = vunpack.c.l.b16 %v2287
    %v3469 = vunpack.c.h.b16 %v2287
    %v3470 = vunpack.c.l.b16 %v2288
    %v3471 = vunpack.c.h.b16 %v2288
    %v3472 = vunpack.c.l.b16 %v2289
    %v3473 = vunpack.c.h.b16 %v2289
    %v3474 = vunpack.c.l.b16 %v2290
    %v3475 = vunpack.c.h.b16 %v2290
    %v3476 = vunpack.c.l.b16 %v2291
    %v3477 = vunpack.c.h.b16 %v2291
    %v3478 = vunpack.c.l.b16 %v2292
    %v3479 = vunpack.c.h.b16 %v2292
    %v3480 = vunpack.c.l.b16 %v2293
    %v3481 = vunpack.c.h.b16 %v2293
    %v3482 = vunpack.c.l.b16 %v2294
    %v3483 = vunpack.c.h.b16 %v2294
    %v3484 = vunpack.c.l.b16 %v2295
    %v3485 = vunpack.c.h.b16 %v2295
    %v3486 = vunpack.c.l.b16 %v2296
    %v3487 = vunpack.c.h.b16 %v2296
    %v3488 = vunpack.c.l.b16 %v2297
    %v3489 = vunpack.c.h.b16 %v2297
    %v3490 = vunpack.c.l.b16 %v2298
    %v3491 = vunpack.c.h.b16 %v2298
    %v3492 = vunpack.c.l.b16 %v2299
    %v3493 = vunpack.c.h.b16 %v2299
    %v3494 = vunpack.c.l.b16 %v2300
    %v3495 = vunpack.c.h.b16 %v2300
    %v3496 = vunpack.c.l.b16 %v2301
    %v3497 = vunpack.c.h.b16 %v2301
    %v3498 = vunpack.c.l.b16 %v2302
    %v3499 = vunpack.c.h.b16 %v2302
    %v3500 = vunpack.c.l.b16 %v2303
    %v3501 = vunpack.c.h.b16 %v2303
    %v3502 = vunpack.c.l.b16 %v2304
    %v3503 = vunpack.c.h.b16 %v2304
    %v3504 = vunpack.c.l.b16 %v2305
    %v3505 = vunpack.c.h.b16 %v2305
    %v3506 = vunpack.c.l.b16 %v2306
    %v3507 = vunpack.c.h.b16 %v2306
    %v3508 = vunpack.c.l.b16 %v2307
    %v3509 = vunpack.c.h.b16 %v2307
    %v3510 = vunpack.c.l.b16 %v2308
    %v3511 = vunpack.c.h.b16 %v2308
    %v3512 = vunpack.c.l.b16 %v2309
    %v3513 = vunpack.c.h.b16 %v2309
    %v3514 = vunpack.c.l.b16 %v2310
    %v3515 = vunpack.c.h.b16 %v2310
    %v3516 = vunpack.c.l.b16 %v2311
    %v3517 = vunpack.c.h.b16 %v2311
    %v3518 = vunpack.c.l.b16 %v2312
    %v3519 = vunpack.c.h.b16 %v2312
    %v3520 = vunpack.c.l.b16 %v2313
    %v3521 = vunpack.c.h.b16 %v2313
    %v3522 = vunpack.c.l.b16 %v2314
    %v3523 = vunpack.c.h.b16 %v2314
    %v3524 = vunpack.c.l.b16 %v2315
    %v3525 = vunpack.c.h.b16 %v2315
    %v3526 = vunpack.c.l.b16 %v2316
    %v3527 = vunpack.c.h.b16 %v2316
    %v3528 = vunpack.c.l.b16 %v2317
    %v3529 = vunpack.c.h.b16 %v2317
    %v3530 = vunpack.c.l.b16 %v2318
    %v3531 = vunpack.c.h.b16 %v2318
    %v3532 = vunpack.c.l.b16 %v2319
    %v3533 = vunpack.c.h.b16 %v2319
    %v3534 = vunpack.c.l.b16 %v2320
    %v3535 = vunpack.c.h.b16 %v2320
    %v3536 = vunpack.c.l.b16 %v2321
    %v3537 = vunpack.c.h.b16 %v2321
    %v3538 = vunpack.c.l.b16 %v2322
    %v3539 = vunpack.c.h.b16 %v2322
    %v3540 = vunpack.c.l.b16 %v2323
    %v3541 = vunpack.c.h.b16 %v2323
    %v3542 = vunpack.c.l.b16 %v2324
    %v3543 = vunpack.c.h.b16 %v2324
    %v3544 = vunpack.c.l.b16 %v2325
    %v3545 = vunpack.c.h.b16 %v2325
    %v3546 = vunpack.c.l.b16 %v2326
    %v3547 = vunpack.c.h.b16 %v2326
    %v3548 = vunpack.c.l.b16 %v2327
    %v3549 = vunpack.c.h.b16 %v2327
    %v3550 = vunpack.c.l.b16 %v2328
    %v3551 = vunpack.c.h.b16 %v2328
    %v3552 = vunpack.c.l.b16 %v2329
    %v3553 = vunpack.c.h.b16 %v2329
    %v3554 = vunpack.c.l.b16 %v2330
    %v3555 = vunpack.c.h.b16 %v2330
    %v3556 = vunpack.c.l.b16 %v2331
    %v3557 = vunpack.c.h.b16 %v2331
    %v3558 = vunpack.c.l.b16 %v2332
    %v3559 = vunpack.c.h.b16 %v2332
    %v3560 = vunpack.c.l.b16 %v2333
    %v3561 = vunpack.c.h.b16 %v2333
    %v3562 = vunpack.c.l.b16 %v2334
    %v3563 = vunpack.c.h.b16 %v2334
    %v3564 = vunpack.c.l.b16 %v2335
    %v3565 = vunpack.c.h.b16 %v2335
    %v3566 = vunpack.c.l.b16 %v2336
    %v3567 = vunpack.c.h.b16 %v2336
    %v3568 = vunpack.c.l.b16 %v2337
    %v3569 = vunpack.c.h.b16 %v2337
    %v3570 = vunpack.c.l.b16 %v2338
    %v3571 = vunpack.c.h.b16 %v2338
    %v3572 = vunpack.c.l.b16 %v2339
    %v3573 = vunpack.c.h.b16 %v2339
    %v3574 = vunpack.c.l.b16 %v2340
    %v3575 = vunpack.c.h.b16 %v2340
    %v3576 = vunpack.c.l.b16 %v2341
    %v3577 = vunpack.c.h.b16 %v2341
    %v3578 = vunpack.c.l.b16 %v2342
    %v3579 = vunpack.c.h.b16 %v2342
    %v3580 = vunpack.c.l.b16 %v2343
    %v3581 = vunpack.c.h.b16 %v2343
    %v3582 = vunpack.c.l.b16 %v2344
    %v3583 = vunpack.c.h.b16 %v2344
    %v3584 = vunpack.c.l.b16 %v2345
    %v3585 = vunpack.c.h.b16 %v2345
    %v3586 = vunpack.c.l.b16 %v2346
    %v3587 = vunpack.c.h.b16 %v2346
    %v3588 = vunpack.c.l.b16 %v2347
    %v3589 = vunpack.c.h.b16 %v2347
    %v3590 = vunpack.c.l.b16 %v2348
    %v3591 = vunpack.c.h.b16 %v2348
    %v3592 = vunpack.c.l.b16 %v2349
    %v3593 = vunpack.c.h.b16 %v2349
    %v3594 = vunpack.c.l.b16 %v2350
    %v3595 = vunpack.c.h.b16 %v2350
    %v3596 = vunpack.c.l.b16 %v2351
    %v3597 = vunpack.c.h.b16 %v2351
    %v3598 = vunpack.c.l.b16 %v2352
    %v3599 = vunpack.c.h.b16 %v2352
    %v3600 = vunpack.c.l.b16 %v2353
    %v3601 = vunpack.c.h.b16 %v2353
    %v3602 = vunpack.c.l.b16 %v2354
    %v3603 = vunpack.c.h.b16 %v2354
    %v3604 = vunpack.c.l.b16 %v2355
    %v3605 = vunpack.c.h.b16 %v2355
    %v3606 = vunpack.c.l.b16 %v2356
    %v3607 = vunpack.c.h.b16 %v2356
    %v3608 = vunpack.c.l.b16 %v2357
    %v3609 = vunpack.c.h.b16 %v2357
    %v3610 = vunpack.c.l.b16 %v2358
    %v3611 = vunpack.c.h.b16 %v2358
    %v3612 = vunpack.c.l.b16 %v2359
    %v3613 = vunpack.c.h.b16 %v2359
    %v3614 = vunpack.c.l.b16 %v2360
    %v3615 = vunpack.c.h.b16 %v2360
    %v3616 = vunpack.c.l.b16 %v2361
    %v3617 = vunpack.c.h.b16 %v2361
    %v3618 = vunpack.c.l.b16 %v2362
    %v3619 = vunpack.c.h.b16 %v2362
    %v3620 = vunpack.c.l.b16 %v2363
    %v3621 = vunpack.c.h.b16 %v2363
    %v3622 = vunpack.c.l.b16 %v2364
    %v3623 = vunpack.c.h.b16 %v2364
    %v3624 = vunpack.c.l.b16 %v2365
    %v3625 = vunpack.c.h.b16 %v2365
    %v3626 = vunpack.c.l.b16 %v2366
    %v3627 = vunpack.c.h.b16 %v2366
    %v3628 = vunpack.c.l.b16 %v2367
    %v3629 = vunpack.c.h.b16 %v2367
    %v3630 = vunpack.c.l.b16 %v2368
    %v3631 = vunpack.c.h.b16 %v2368
    %v3632 = vunpack.c.l.b16 %v2369
    %v3633 = vunpack.c.h.b16 %v2369
    %v3634 = vunpack.c.l.b16 %v2370
    %v3635 = vunpack.c.h.b16 %v2370
    %v3636 = vunpack.c.l.b16 %v2371
    %v3637 = vunpack.c.h.b16 %v2371
    %v3638 = vunpack.c.l.b16 %v2372
    %v3639 = vunpack.c.h.b16 %v2372
    %v3640 = vunpack.c.l.b16 %v2373
    %v3641 = vunpack.c.h.b16 %v2373
    %v3642 = vunpack.c.l.b16 %v2374
    %v3643 = vunpack.c.h.b16 %v2374
    %v3644 = vunpack.c.l.b16 %v2375
    %v3645 = vunpack.c.h.b16 %v2375
    %v3646 = vunpack.c.l.b16 %v2376
    %v3647 = vunpack.c.h.b16 %v2376
    %v3648 = vunpack.c.l.b16 %v2377
    %v3649 = vunpack.c.h.b16 %v2377
    %v3650 = vunpack.c.l.b16 %v2378
    %v3651 = vunpack.c.h.b16 %v2378
    %v3652 = vunpack.c.l.b16 %v2379
    %v3653 = vunpack.c.h.b16 %v2379
    %v3654 = vunpack.c.l.b16 %v2380
    %v3655 = vunpack.c.h.b16 %v2380
    %v3656 = vunpack.c.l.b16 %v2381
    %v3657 = vunpack.c.h.b16 %v2381
    %v3658 = vunpack.c.l.b16 %v2382
    %v3659 = vunpack.c.h.b16 %v2382
    %v3660 = vunpack.c.l.b16 %v2383
    %v3661 = vunpack.c.h.b16 %v2383
    %v3662 = vunpack.c.l.b16 %v2384
    %v3663 = vunpack.c.h.b16 %v2384
    %v3664 = vunpack.c.l.b16 %v2385
    %v3665 = vunpack.c.h.b16 %v2385
    %v3666 = vunpack.c.l.b16 %v2386
    %v3667 = vunpack.c.h.b16 %v2386
    %v3668 = vunpack.c.l.b16 %v2387
    %v3669 = vunpack.c.h.b16 %v2387
    %v3670 = vunpack.c.l.b16 %v2388
    %v3671 = vunpack.c.h.b16 %v2388
    %v3672 = vunpack.c.l.b16 %v2389
    %v3673 = vunpack.c.h.b16 %v2389
    %v3674 = vunpack.c.l.b16 %v2390
    %v3675 = vunpack.c.h.b16 %v2390
    %v3676 = vunpack.c.l.b16 %v2391
    %v3677 = vunpack.c.h.b16 %v2391
    %v3678 = vunpack.c.l.b16 %v2392
    %v3679 = vunpack.c.h.b16 %v2392
    %v3680 = vunpack.c.l.b16 %v2393
    %v3681 = vunpack.c.h.b16 %v2393
    %v3682 = vunpack.c.l.b16 %v2394
    %v3683 = vunpack.c.h.b16 %v2394
    %v3684 = vunpack.c.l.b16 %v2395
    %v3685 = vunpack.c.h.b16 %v2395
    %v3686 = vunpack.c.l.b16 %v2396
    %v3687 = vunpack.c.h.b16 %v2396
    %v3688 = vunpack.c.l.b16 %v2397
    %v3689 = vunpack.c.h.b16 %v2397
    %v3690 = vunpack.c.l.b16 %v2398
    %v3691 = vunpack.c.h.b16 %v2398
    %v3692 = vunpack.c.l.b16 %v2399
    %v3693 = vunpack.c.h.b16 %v2399
    %v3694 = vunpack.c.l.b16 %v2400
    %v3695 = vunpack.c.h.b16 %v2400
    %v3696 = vunpack.c.l.b16 %v2401
    %v3697 = vunpack.c.h.b16 %v2401
    %v3698 = vunpack.c.l.b16 %v2402
    %v3699 = vunpack.c.h.b16 %v2402
    %v3700 = vunpack.c.l.b16 %v2403
    %v3701 = vunpack.c.h.b16 %v2403
    %v3702 = vunpack.c.l.b16 %v2404
    %v3703 = vunpack.c.h.b16 %v2404
    %v3704 = vunpack.c.l.b16 %v2405
    %v3705 = vunpack.c.h.b16 %v2405
    %v3706 = vunpack.c.l.b16 %v2406
    %v3707 = vunpack.c.h.b16 %v2406
    %v3708 = vunpack.c.l.b16 %v2407
    %v3709 = vunpack.c.h.b16 %v2407
    %v3710 = vunpack.c.l.b16 %v2408
    %v3711 = vunpack.c.h.b16 %v2408
    %v3712 = vunpack.c.l.b16 %v2409
    %v3713 = vunpack.c.h.b16 %v2409
    %v3714 = vunpack.c.l.b16 %v2410
    %v3715 = vunpack.c.h.b16 %v2410
    %v3716 = vunpack.c.l.b16 %v2411
    %v3717 = vunpack.c.h.b16 %v2411
    %v3718 = vunpack.c.l.b16 %v2412
    %v3719 = vunpack.c.h.b16 %v2412
    %v3720 = vunpack.c.l.b16 %v2413
    %v3721 = vunpack.c.h.b16 %v2413
    %v3722 = vunpack.c.l.b16 %v2414
    %v3723 = vunpack.c.h.b16 %v2414
    %v3724 = vunpack.c.l.b16 %v2415
    %v3725 = vunpack.c.h.b16 %v2415
    %v3726 = vunpack.c.l.b16 %v2416
    %v3727 = vunpack.c.h.b16 %v2416
    %v3728 = vunpack.c.l.b16 %v2417
    %v3729 = vunpack.c.h.b16 %v2417
    %v3730 = vunpack.c.l.b16 %v2418
    %v3731 = vunpack.c.h.b16 %v2418
    %v3732 = vunpack.c.l.b16 %v2419
    %v3733 = vunpack.c.h.b16 %v2419
    %v3734 = vunpack.c.l.b16 %v2420
    %v3735 = vunpack.c.h.b16 %v2420
    %v3736 = vunpack.c.l.b16 %v2421
    %v3737 = vunpack.c.h.b16 %v2421
    %v3738 = vunpack.c.l.b16 %v2422
    %v3739 = vunpack.c.h.b16 %v2422
    %v3740 = vunpack.c.l.b16 %v2423
    %v3741 = vunpack.c.h.b16 %v2423
    %v3742 = vunpack.c.l.b16 %v2424
    %v3743 = vunpack.c.h.b16 %v2424
    %v3744 = vunpack.c.l.b16 %v2425
    %v3745 = vunpack.c.h.b16 %v2425
    %v3746 = vunpack.c.l.b16 %v2426
    %v3747 = vunpack.c.h.b16 %v2426
    %v3748 = vunpack.c.l.b16 %v2427
    %v3749 = vunpack.c.h.b16 %v2427
    %v3750 = vunpack.c.l.b16 %v2428
    %v3751 = vunpack.c.h.b16 %v2428
    %v3752 = vunpack.c.l.b16 %v2429
    %v3753 = vunpack.c.h.b16 %v2429
    %v3754 = vunpack.c.l.b16 %v2430
    %v3755 = vunpack.c.h.b16 %v2430
    %v3756 = vunpack.c.l.b16 %v2431
    %v3757 = vunpack.c.h.b16 %v2431
    %v3758 = vunpack.c.l.b16 %v2432
    %v3759 = vunpack.c.h.b16 %v2432
    %v3760 = vunpack.c.l.b16 %v2433
    %v3761 = vunpack.c.h.b16 %v2433
    %v3762 = vunpack.c.l.b16 %v2434
    %v3763 = vunpack.c.h.b16 %v2434
    %v3764 = vunpack.c.l.b16 %v2435
    %v3765 = vunpack.c.h.b16 %v2435
    %v3766 = vunpack.c.l.b16 %v2436
    %v3767 = vunpack.c.h.b16 %v2436
    %v3768 = vunpack.c.l.b16 %v2437
    %v3769 = vunpack.c.h.b16 %v2437
    %v3770 = vunpack.c.l.b16 %v2438
    %v3771 = vunpack.c.h.b16 %v2438
    %v3772 = vunpack.c.l.b16 %v2439
    %v3773 = vunpack.c.h.b16 %v2439
    %v3774 = vunpack.c.l.b16 %v2440
    %v3775 = vunpack.c.h.b16 %v2440
    %v3776 = vunpack.c.l.b16 %v2441
    %v3777 = vunpack.c.h.b16 %v2441
    %v3778 = vunpack.c.l.b16 %v2442
    %v3779 = vunpack.c.h.b16 %v2442
    %v3780 = vunpack.c.l.b16 %v2443
    %v3781 = vunpack.c.h.b16 %v2443
    %v3782 = vunpack.c.l.b16 %v2444
    %v3783 = vunpack.c.h.b16 %v2444
    %v3784 = vunpack.c.l.b16 %v2445
    %v3785 = vunpack.c.h.b16 %v2445
    %v3786 = vunpack.c.l.b16 %v2446
    %v3787 = vunpack.c.h.b16 %v2446
    %v3788 = vunpack.c.l.b16 %v2447
    %v3789 = vunpack.c.h.b16 %v2447
    %v3790 = vunpack.c.l.b16 %v2448
    %v3791 = vunpack.c.h.b16 %v2448
    %v3792 = vunpack.c.l.b16 %v2449
    %v3793 = vunpack.c.h.b16 %v2449
    %v3794 = vunpack.c.l.b16 %v2450
    %v3795 = vunpack.c.h.b16 %v2450
    %v3796 = vunpack.c.l.b16 %v2451
    %v3797 = vunpack.c.h.b16 %v2451
    %v3798 = vunpack.c.l.b16 %v2452
    %v3799 = vunpack.c.h.b16 %v2452
    %v3800 = vunpack.c.l.b16 %v2453
    %v3801 = vunpack.c.h.b16 %v2453
    %v3802 = vunpack.c.l.b16 %v2454
    %v3803 = vunpack.c.h.b16 %v2454
    %v3804 = vunpack.c.l.b16 %v2455
    %v3805 = vunpack.c.h.b16 %v2455
    %v3806 = vunpack.c.l.b16 %v2456
    %v3807 = vunpack.c.h.b16 %v2456
    %v3808 = vunpack.c.l.b16 %v2457
    %v3809 = vunpack.c.h.b16 %v2457
    %v3810 = vunpack.c.l.b16 %v2458
    %v3811 = vunpack.c.h.b16 %v2458
    %v3812 = vunpack.c.l.b16 %v2459
    %v3813 = vunpack.c.h.b16 %v2459
    %v3814 = vunpack.c.l.b16 %v2460
    %v3815 = vunpack.c.h.b16 %v2460
    %v3816 = vunpack.c.l.b16 %v2461
    %v3817 = vunpack.c.h.b16 %v2461
    %v3818 = vunpack.c.l.b16 %v2462
    %v3819 = vunpack.c.h.b16 %v2462
    %v3820 = vunpack.c.l.b16 %v2463
    %v3821 = vunpack.c.h.b16 %v2463
    %v3822 = vunpack.c.l.b16 %v2464
    %v3823 = vunpack.c.h.b16 %v2464
    %v3824 = vunpack.c.l.b16 %v2465
    %v3825 = vunpack.c.h.b16 %v2465
    %v3826 = vunpack.c.l.b16 %v2466
    %v3827 = vunpack.c.h.b16 %v2466
    %v3828 = vunpack.c.l.b16 %v2467
    %v3829 = vunpack.c.h.b16 %v2467
    %v3830 = vunpack.c.l.b16 %v2468
    %v3831 = vunpack.c.h.b16 %v2468
    %v3832 = vunpack.c.l.b16 %v2469
    %v3833 = vunpack.c.h.b16 %v2469
    %v3834 = vunpack.c.l.b16 %v2470
    %v3835 = vunpack.c.h.b16 %v2470
    %v3836 = vunpack.c.l.b16 %v2471
    %v3837 = vunpack.c.h.b16 %v2471
    %v3838 = vunpack.c.l.b16 %v2472
    %v3839 = vunpack.c.h.b16 %v2472
    %v3840 = vunpack.c.l.b16 %v2473
    %v3841 = vunpack.c.h.b16 %v2473
    %v3842 = vunpack.c.l.b16 %v2474
    %v3843 = vunpack.c.h.b16 %v2474
    %v3844 = vunpack.c.l.b16 %v2475
    %v3845 = vunpack.c.h.b16 %v2475
    %v3846 = vunpack.c.l.b16 %v2476
    %v3847 = vunpack.c.h.b16 %v2476
    %v3848 = vunpack.c.l.b16 %v2477
    %v3849 = vunpack.c.h.b16 %v2477
    %v3850 = vunpack.c.l.b16 %v2478
    %v3851 = vunpack.c.h.b16 %v2478
    %v3852 = vunpack.c.l.b16 %v2479
    %v3853 = vunpack.c.h.b16 %v2479
    %v3854 = vunpack.c.l.b16 %v2480
    %v3855 = vunpack.c.h.b16 %v2480
    %v3856 = vunpack.c.l.b16 %v2481
    %v3857 = vunpack.c.h.b16 %v2481
    %v3858 = vunpack.c.l.b16 %v2482
    %v3859 = vunpack.c.h.b16 %v2482
    %v3860 = vunpack.c.l.b16 %v2483
    %v3861 = vunpack.c.h.b16 %v2483
    %v3862 = vunpack.c.l.b16 %v2484
    %v3863 = vunpack.c.h.b16 %v2484
    %v3864 = vunpack.c.l.b16 %v2485
    %v3865 = vunpack.c.h.b16 %v2485
    %v3866 = vunpack.c.l.b16 %v2486
    %v3867 = vunpack.c.h.b16 %v2486
    %v3868 = vunpack.c.l.b16 %v2487
    %v3869 = vunpack.c.h.b16 %v2487
    %v3870 = vunpack.c.l.b16 %v2488
    %v3871 = vunpack.c.h.b16 %v2488
    %v3872 = vunpack.c.l.b16 %v2489
    %v3873 = vunpack.c.h.b16 %v2489
    %v3874 = vunpack.c.l.b16 %v2490
    %v3875 = vunpack.c.h.b16 %v2490
    %v3876 = vunpack.c.l.b16 %v2491
    %v3877 = vunpack.c.h.b16 %v2491
    %v3878 = vunpack.c.l.b16 %v2492
    %v3879 = vunpack.c.h.b16 %v2492
    %v3880 = vunpack.c.l.b16 %v2493
    %v3881 = vunpack.c.h.b16 %v2493
    %v3882 = vunpack.c.l.b16 %v2494
    %v3883 = vunpack.c.h.b16 %v2494
    %v3884 = vunpack.c.l.b16 %v2495
    %v3885 = vunpack.c.h.b16 %v2495
    %v3886 = vunpack.c.l.b16 %v2496
    %v3887 = vunpack.c.h.b16 %v2496
    %v3888 = vunpack.c.l.b16 %v2497
    %v3889 = vunpack.c.h.b16 %v2497
    %v3890 = vunpack.c.l.b16 %v2498
    %v3891 = vunpack.c.h.b16 %v2498
    %v3892 = vunpack.c.l.b16 %v2499
    %v3893 = vunpack.c.h.b16 %v2499
    %v3894 = vunpack.c.l.b16 %v2500
    %v3895 = vunpack.c.h.b16 %v2500
    %v3896 = vunpack.c.l.b16 %v2501
    %v3897 = vunpack.c.h.b16 %v2501
    %v3898 = vunpack.c.l.b16 %v2502
    %v3899 = vunpack.c.h.b16 %v2502
    %v3900 = vunpack.c.l.b16 %v2503
    %v3901 = vunpack.c.h.b16 %v2503
    %v3902 = vunpack.c.l.b16 %v2504
    %v3903 = vunpack.c.h.b16 %v2504
    %v3904 = vunpack.c.l.b16 %v2505
    %v3905 = vunpack.c.h.b16 %v2505
    %v3906 = vunpack.c.l.b16 %v2506
    %v3907 = vunpack.c.h.b16 %v2506
    %v3908 = vunpack.c.l.b16 %v2507
    %v3909 = vunpack.c.h.b16 %v2507
    %v3910 = vunpack.c.l.b16 %v2508
    %v3911 = vunpack.c.h.b16 %v2508
    %v3912 = vunpack.c.l.b16 %v2509
    %v3913 = vunpack.c.h.b16 %v2509
    %v3914 = vunpack.c.l.b16 %v2510
    %v3915 = vunpack.c.h.b16 %v2510
    %v3916 = vunpack.c.l.b16 %v2511
    %v3917 = vunpack.c.h.b16 %v2511
    %v3918 = vunpack.c.l.b16 %v2512
    %v3919 = vunpack.c.h.b16 %v2512
    %v3920 = vunpack.c.l.b16 %v2513
    %v3921 = vunpack.c.h.b16 %v2513
    %v3922 = vunpack.c.l.b16 %v2514
    %v3923 = vunpack.c.h.b16 %v2514
    %v3924 = vunpack.c.l.b16 %v2515
    %v3925 = vunpack.c.h.b16 %v2515
    %v3926 = vunpack.c.l.b16 %v2516
    %v3927 = vunpack.c.h.b16 %v2516
    %v3928 = vunpack.c.l.b16 %v2517
    %v3929 = vunpack.c.h.b16 %v2517
    %v3930 = vunpack.c.l.b16 %v2518
    %v3931 = vunpack.c.h.b16 %v2518
    %v3932 = vunpack.c.l.b16 %v2519
    %v3933 = vunpack.c.h.b16 %v2519
    %v3934 = vunpack.c.l.b16 %v2520
    %v3935 = vunpack.c.h.b16 %v2520
    %v3936 = vunpack.c.l.b16 %v2521
    %v3937 = vunpack.c.h.b16 %v2521
    %v3938 = vunpack.c.l.b16 %v2522
    %v3939 = vunpack.c.h.b16 %v2522
    %v3940 = vunpack.c.l.b16 %v2523
    %v3941 = vunpack.c.h.b16 %v2523
    %v3942 = vunpack.c.l.b16 %v2524
    %v3943 = vunpack.c.h.b16 %v2524
    %v3944 = vunpack.c.l.b16 %v2525
    %v3945 = vunpack.c.h.b16 %v2525
    %v3946 = vunpack.c.l.b16 %v2526
    %v3947 = vunpack.c.h.b16 %v2526
    %v3948 = vunpack.c.l.b16 %v2527
    %v3949 = vunpack.c.h.b16 %v2527
    %v3950 = vunpack.c.l.b16 %v2528
    %v3951 = vunpack.c.h.b16 %v2528
    %v3952 = vunpack.c.l.b16 %v2529
    %v3953 = vunpack.c.h.b16 %v2529
    %v3954 = vunpack.c.l.b16 %v2530
    %v3955 = vunpack.c.h.b16 %v2530
    %v3956 = vunpack.c.l.b16 %v2531
    %v3957 = vunpack.c.h.b16 %v2531
    %v3958 = vunpack.c.l.b16 %v2532
    %v3959 = vunpack.c.h.b16 %v2532
    %v3960 = vunpack.c.l.b16 %v2533
    %v3961 = vunpack.c.h.b16 %v2533
    %v3962 = vunpack.c.l.b16 %v2534
    %v3963 = vunpack.c.h.b16 %v2534
    %v3964 = vunpack.c.l.b16 %v2535
    %v3965 = vunpack.c.h.b16 %v2535
    %v3966 = vunpack.c.l.b16 %v2536
    %v3967 = vunpack.c.h.b16 %v2536
    %v3968 = vunpack.c.l.b16 %v2537
    %v3969 = vunpack.c.h.b16 %v2537
    %v3970 = vunpack.c.l.b16 %v2538
    %v3971 = vunpack.c.h.b16 %v2538
    %v3972 = vunpack.c.l.b16 %v2539
    %v3973 = vunpack.c.h.b16 %v2539
    %v3974 = vunpack.c.l.b16 %v2540
    %v3975 = vunpack.c.h.b16 %v2540
    %v3976 = vunpack.c.l.b16 %v2541
    %v3977 = vunpack.c.h.b16 %v2541
    %v3978 = vunpack.c.l.b16 %v2542
    %v3979 = vunpack.c.h.b16 %v2542
    %v3980 = vunpack.c.l.b16 %v2543
    %v3981 = vunpack.c.h.b16 %v2543
    %v3982 = vunpack.c.l.b16 %v2544
    %v3983 = vunpack.c.h.b16 %v2544
    %v3984 = vunpack.c.l.b16 %v2545
    %v3985 = vunpack.c.h.b16 %v2545
    %v3986 = vunpack.c.l.b16 %v2546
    %v3987 = vunpack.c.h.b16 %v2546
    %v3988 = vunpack.c.l.b16 %v2547
    %v3989 = vunpack.c.h.b16 %v2547
    %v3990 = vunpack.c.l.b16 %v2548
    %v3991 = vunpack.c.h.b16 %v2548
    %v3992 = vunpack.c.l.b16 %v2549
    %v3993 = vunpack.c.h.b16 %v2549
    %v3994 = vunpack.c.l.b16 %v2550
    %v3995 = vunpack.c.h.b16 %v2550
    %v3996 = vunpack.c.l.b16 %v2551
    %v3997 = vunpack.c.h.b16 %v2551
    %v3998 = vunpack.c.l.b16 %v2552
    %v3999 = vunpack.c.h.b16 %v2552
    %v4000 = vunpack.c.l.b16 %v2553
    %v4001 = vunpack.c.h.b16 %v2553
    %v4002 = vunpack.c.l.b16 %v2554
    %v4003 = vunpack.c.h.b16 %v2554
    %v4004 = vunpack.c.l.b16 %v2555
    %v4005 = vunpack.c.h.b16 %v2555
    %v4006 = vunpack.c.l.b16 %v2556
    %v4007 = vunpack.c.h.b16 %v2556
    %v4008 = vunpack.c.l.b16 %v2557
    %v4009 = vunpack.c.h.b16 %v2557
    %v4010 = vunpack.c.l.b16 %v2558
    %v4011 = vunpack.c.h.b16 %v2558
    %v4012 = vunpack.c.l.b16 %v2559
    %v4013 = vunpack.c.h.b16 %v2559
    %v4014 = vunpack.c.l.b16 %v2560
    %v4015 = vunpack.c.h.b16 %v2560
    %v4016 = vunpack.c.l.b16 %v2561
    %v4017 = vunpack.c.h.b16 %v2561
    %v4018 = vunpack.c.l.b16 %v2562
    %v4019 = vunpack.c.h.b16 %v2562
    %v4020 = vunpack.c.l.b16 %v2563
    %v4021 = vunpack.c.h.b16 %v2563
    %v4022 = vunpack.c.l.b16 %v2564
    %v4023 = vunpack.c.h.b16 %v2564
    %v4024 = vunpack.c.l.b16 %v2565
    %v4025 = vunpack.c.h.b16 %v2565
    %v4026 = vunpack.c.l.b16 %v2566
    %v4027 = vunpack.c.h.b16 %v2566
    %v4028 = vunpack.c.l.b16 %v2567
    %v4029 = vunpack.c.h.b16 %v2567
    %v4030 = vunpack.c.l.b16 %v2568
    %v4031 = vunpack.c.h.b16 %v2568
    %v4032 = vunpack.c.l.b16 %v2569
    %v4033 = vunpack.c.h.b16 %v2569
    %v4034 = vunpack.c.l.b16 %v2570
    %v4035 = vunpack.c.h.b16 %v2570
    %v4036 = vunpack.c.l.b16 %v2571
    %v4037 = vunpack.c.h.b16 %v2571
    %v4038 = vunpack.c.l.b16 %v2572
    %v4039 = vunpack.c.h.b16 %v2572
    %v4040 = vunpack.c.l.b16 %v2573
    %v4041 = vunpack.c.h.b16 %v2573
    %v4042 = vunpack.c.l.b16 %v2574
    %v4043 = vunpack.c.h.b16 %v2574
    %v4044 = vunpack.c.l.b16 %v2575
    %v4045 = vunpack.c.h.b16 %v2575
    %v4046 = vunpack.c.l.b16 %v2576
    %v4047 = vunpack.c.h.b16 %v2576
    %v4048 = vunpack.c.l.b16 %v2577
    %v4049 = vunpack.c.h.b16 %v2577
    %v4050 = vunpack.c.l.b16 %v2578
    %v4051 = vunpack.c.h.b16 %v2578
    %v4052 = vunpack.c.l.b16 %v2579
    %v4053 = vunpack.c.h.b16 %v2579
    %v4054 = vunpack.c.l.b16 %v2580
    %v4055 = vunpack.c.h.b16 %v2580
    %v4056 = vunpack.c.l.b16 %v2581
    %v4057 = vunpack.c.h.b16 %v2581
    %v4058 = vunpack.c.l.b16 %v2582
    %v4059 = vunpack.c.h.b16 %v2582
    %v4060 = vunpack.c.l.b16 %v2583
    %v4061 = vunpack.c.h.b16 %v2583
    %v4062 = vunpack.c.l.b16 %v2584
    %v4063 = vunpack.c.h.b16 %v2584
    %v4064 = vunpack.c.l.b16 %v2585
    %v4065 = vunpack.c.h.b16 %v2585
    %v4066 = vunpack.c.l.b16 %v2586
    %v4067 = vunpack.c.h.b16 %v2586
    %v4068 = vunpack.c.l.b16 %v2587
    %v4069 = vunpack.c.h.b16 %v2587
    %v4070 = vunpack.c.l.b16 %v2588
    %v4071 = vunpack.c.h.b16 %v2588
    %v4072 = vunpack.c.l.b16 %v2589
    %v4073 = vunpack.c.h.b16 %v2589
    %v4074 = vunpack.c.l.b16 %v2590
    %v4075 = vunpack.c.h.b16 %v2590
    %v4076 = vunpack.c.l.b16 %v2591
    %v4077 = vunpack.c.h.b16 %v2591
    %v4078 = vunpack.c.l.b16 %v2592
    %v4079 = vunpack.c.h.b16 %v2592
    %v4080 = vunpack.c.l.b16 %v2593
    %v4081 = vunpack.c.h.b16 %v2593
    %v4082 = vunpack.c.l.b16 %v2594
    %v4083 = vunpack.c.h.b16 %v2594
    %v4084 = vunpack.c.l.b16 %v2595
    %v4085 = vunpack.c.h.b16 %v2595
    %v4086 = vunpack.c.l.b16 %v2596
    %v4087 = vunpack.c.h.b16 %v2596
    %v4088 = vunpack.c.l.b16 %v2597
    %v4089 = vunpack.c.h.b16 %v2597
    %v4090 = vunpack.c.l.b16 %v2598
    %v4091 = vunpack.c.h.b16 %v2598
    %v4092 = vunpack.c.l.b16 %v2599
    %v4093 = vunpack.c.h.b16 %v2599
    %v4094 = vunpack.c.l.b16 %v2600
    %v4095 = vunpack.c.h.b16 %v2600
    %v4096 = vunpack.c.l.b16 %v2601
    %v4097 = vunpack.c.h.b16 %v2601
    %v4098 = vunpack.c.l.b16 %v2602
    %v4099 = vunpack.c.h.b16 %v2602
    %v4100 = vunpack.c.l.b16 %v2603
    %v4101 = vunpack.c.h.b16 %v2603
    %v4102 = vunpack.c.l.b16 %v2604
    %v4103 = vunpack.c.h.b16 %v2604
    %v4104 = vunpack.c.l.b16 %v2605
    %v4105 = vunpack.c.h.b16 %v2605
    %v4106 = vunpack.c.l.b16 %v2606
    %v4107 = vunpack.c.h.b16 %v2606
    %v4108 = vunpack.c.l.b16 %v2607
    %v4109 = vunpack.c.h.b16 %v2607
    %v4110 = vunpack.c.l.b16 %v2608
    %v4111 = vunpack.c.h.b16 %v2608
    %v4112 = vunpack.c.l.b16 %v2609
    %v4113 = vunpack.c.h.b16 %v2609
    %v4114 = vunpack.c.l.b16 %v2610
    %v4115 = vunpack.c.h.b16 %v2610
    %v4116 = vunpack.c.l.b16 %v2611
    %v4117 = vunpack.c.h.b16 %v2611
    %v4118 = vunpack.c.l.b16 %v2612
    %v4119 = vunpack.c.h.b16 %v2612
    %v4120 = vunpack.c.l.b16 %v2613
    %v4121 = vunpack.c.h.b16 %v2613
    %v4122 = vunpack.c.l.b16 %v2614
    %v4123 = vunpack.c.h.b16 %v2614
    %v4124 = vunpack.c.l.b16 %v2615
    %v4125 = vunpack.c.h.b16 %v2615
    %v4126 = vunpack.c.l.b16 %v2616
    %v4127 = vunpack.c.h.b16 %v2616
    %v4128 = vunpack.c.l.b16 %v2617
    %v4129 = vunpack.c.h.b16 %v2617
    %v4130 = vunpack.c.l.b16 %v2618
    %v4131 = vunpack.c.h.b16 %v2618
    %v4132 = vunpack.c.l.b16 %v2619
    %v4133 = vunpack.c.h.b16 %v2619
    %v4134 = vunpack.c.l.b16 %v2620
    %v4135 = vunpack.c.h.b16 %v2620
    %v4136 = vunpack.c.l.b16 %v2621
    %v4137 = vunpack.c.h.b16 %v2621
    %v4138 = vunpack.c.l.b16 %v2622
    %v4139 = vunpack.c.h.b16 %v2622
    %v4140 = vunpack.c.l.b16 %v2623
    %v4141 = vunpack.c.h.b16 %v2623
    %v4142 = vunpack.c.l.b16 %v2624
    %v4143 = vunpack.c.h.b16 %v2624
    %v4144 = vunpack.c.l.b16 %v2625
    %v4145 = vunpack.c.h.b16 %v2625
    %v4146 = vunpack.c.l.b16 %v2626
    %v4147 = vunpack.c.h.b16 %v2626
    %v4148 = vunpack.c.l.b16 %v2627
    %v4149 = vunpack.c.h.b16 %v2627
    %v4150 = vunpack.c.l.b16 %v2628
    %v4151 = vunpack.c.h.b16 %v2628
    %v4152 = vunpack.c.l.b16 %v2629
    %v4153 = vunpack.c.h.b16 %v2629
    %v4154 = vunpack.c.l.b16 %v2630
    %v4155 = vunpack.c.h.b16 %v2630
    %v4156 = vunpack.c.l.b16 %v2631
    %v4157 = vunpack.c.h.b16 %v2631
    %v4158 = vunpack.c.l.b16 %v2632
    %v4159 = vunpack.c.h.b16 %v2632
    %v4160 = vunpack.c.l.b16 %v2633
    %v4161 = vunpack.c.h.b16 %v2633
    %v4162 = vunpack.c.l.b16 %v2634
    %v4163 = vunpack.c.h.b16 %v2634
    %v4164 = vunpack.c.l.b16 %v2635
    %v4165 = vunpack.c.h.b16 %v2635
    %v4166 = vunpack.c.l.b16 %v2636
    %v4167 = vunpack.c.h.b16 %v2636
    %v4168 = vunpack.c.l.b16 %v2637
    %v4169 = vunpack.c.h.b16 %v2637
    %v4170 = vunpack.c.l.b16 %v2638
    %v4171 = vunpack.c.h.b16 %v2638
    %v4172 = vunpack.c.l.b16 %v2639
    %v4173 = vunpack.c.h.b16 %v2639
    %v4174 = vunpack.c.l.b16 %v2640
    %v4175 = vunpack.c.h.b16 %v2640
    %v4176 = vunpack.c.l.b16 %v2641
    %v4177 = vunpack.c.h.b16 %v2641
    %v4178 = vunpack.c.l.b16 %v2642
    %v4179 = vunpack.c.h.b16 %v2642
    %v4180 = vunpack.c.l.b16 %v2643
    %v4181 = vunpack.c.h.b16 %v2643
    %v4182 = vunpack.c.l.b16 %v2644
    %v4183 = vunpack.c.h.b16 %v2644
    %v4184 = vunpack.c.l.b16 %v2645
    %v4185 = vunpack.c.h.b16 %v2645
    %v4186 = vunpack.c.l.b16 %v2646
    %v4187 = vunpack.c.h.b16 %v2646
    %v4188 = vunpack.c.l.b16 %v2647
    %v4189 = vunpack.c.h.b16 %v2647
    %v4190 = vunpack.c.l.b16 %v2648
    %v4191 = vunpack.c.h.b16 %v2648
    %v4192 = vunpack.c.l.b16 %v2649
    %v4193 = vunpack.c.h.b16 %v2649
    %v4194 = vunpack.c.l.b16 %v2650
    %v4195 = vunpack.c.h.b16 %v2650
    %v4196 = vunpack.c.l.b16 %v2651
    %v4197 = vunpack.c.h.b16 %v2651
    %v4198 = vunpack.c.l.b16 %v2652
    %v4199 = vunpack.c.h.b16 %v2652
    %v4200 = vunpack.c.l.b16 %v2653
    %v4201 = vunpack.c.h.b16 %v2653
    %v4202 = vunpack.c.l.b16 %v2654
    %v4203 = vunpack.c.h.b16 %v2654
    %v4204 = vunpack.c.l.b16 %v2655
    %v4205 = vunpack.c.h.b16 %v2655
    %v4206 = vunpack.c.l.b16 %v2656
    %v4207 = vunpack.c.h.b16 %v2656
    %v4208 = vunpack.c.l.b16 %v2657
    %v4209 = vunpack.c.h.b16 %v2657
    %v4210 = vunpack.c.l.b16 %v2658
    %v4211 = vunpack.c.h.b16 %v2658
    %v4212 = vunpack.c.l.b16 %v2659
    %v4213 = vunpack.c.h.b16 %v2659
    %v4214 = vpack.c.b16 %v3198, %v3190
    %v4215 = vpack.c.b16 %v3199, %v3191
    %v4216 = vpack.c.b16 %v3200, %v3192
    %v4217 = vpack.c.b16 %v3201, %v3193
    %v4218 = vpack.c.b16 %v3202, %v3194
    %v4219 = vpack.c.b16 %v3203, %v3195
    %v4220 = vpack.c.b16 %v3204, %v3196
    %v4221 = vpack.c.b16 %v3205, %v3197
    %v4222 = vpack.c.b16 %v3214, %v3206
    %v4223 = vpack.c.b16 %v3215, %v3207
    %v4224 = vpack.c.b16 %v3216, %v3208
    %v4225 = vpack.c.b16 %v3217, %v3209
    %v4226 = vpack.c.b16 %v3218, %v3210
    %v4227 = vpack.c.b16 %v3219, %v3211
    %v4228 = vpack.c.b16 %v3220, %v3212
    %v4229 = vpack.c.b16 %v3221, %v3213
    %v4230 = vpack.c.b16 %v3230, %v3222
    %v4231 = vpack.c.b16 %v3231, %v3223
    %v4232 = vpack.c.b16 %v3232, %v3224
    %v4233 = vpack.c.b16 %v3233, %v3225
    %v4234 = vpack.c.b16 %v3234, %v3226
    %v4235 = vpack.c.b16 %v3235, %v3227
    %v4236 = vpack.c.b16 %v3236, %v3228
    %v4237 = vpack.c.b16 %v3237, %v3229
    %v4238 = vpack.c.b16 %v3246, %v3238
    %v4239 = vpack.c.b16 %v3247, %v3239
    %v4240 = vpack.c.b16 %v3248, %v3240
    %v4241 = vpack.c.b16 %v3249, %v3241
    %v4242 = vpack.c.b16 %v3250, %v3242
    %v4243 = vpack.c.b16 %v3251, %v3243
    %v4244 = vpack.c.b16 %v3252, %v3244
    %v4245 = vpack.c.b16 %v3253, %v3245
    %v4246 = vpack.c.b16 %v3262, %v3254
    %v4247 = vpack.c.b16 %v3263, %v3255
    %v4248 = vpack.c.b16 %v3264, %v3256
    %v4249 = vpack.c.b16 %v3265, %v3257
    %v4250 = vpack.c.b16 %v3266, %v3258
    %v4251 = vpack.c.b16 %v3267, %v3259
    %v4252 = vpack.c.b16 %v3268, %v3260
    %v4253 = vpack.c.b16 %v3269, %v3261
    %v4254 = vpack.c.b16 %v3278, %v3270
    %v4255 = vpack.c.b16 %v3279, %v3271
    %v4256 = vpack.c.b16 %v3280, %v3272
    %v4257 = vpack.c.b16 %v3281, %v3273
    %v4258 = vpack.c.b16 %v3282, %v3274
    %v4259 = vpack.c.b16 %v3283, %v3275
    %v4260 = vpack.c.b16 %v3284, %v3276
    %v4261 = vpack.c.b16 %v3285, %v3277
    %v4262 = vpack.c.b16 %v3294, %v3286
    %v4263 = vpack.c.b16 %v3295, %v3287
    %v4264 = vpack.c.b16 %v3296, %v3288
    %v4265 = vpack.c.b16 %v3297, %v3289
    %v4266 = vpack.c.b16 %v3298, %v3290
    %v4267 = vpack.c.b16 %v3299, %v3291
    %v4268 = vpack.c.b16 %v3300, %v3292
    %v4269 = vpack.c.b16 %v3301, %v3293
    %v4270 = vpack.c.b16 %v3310, %v3302
    %v4271 = vpack.c.b16 %v3311, %v3303
    %v4272 = vpack.c.b16 %v3312, %v3304
    %v4273 = vpack.c.b16 %v3313, %v3305
    %v4274 = vpack.c.b16 %v3314, %v3306
    %v4275 = vpack.c.b16 %v3315, %v3307
    %v4276 = vpack.c.b16 %v3316, %v3308
    %v4277 = vpack.c.b16 %v3317, %v3309
    %v4278 = vpack.c.b16 %v3326, %v3318
    %v4279 = vpack.c.b16 %v3327, %v3319
    %v4280 = vpack.c.b16 %v3328, %v3320
    %v4281 = vpack.c.b16 %v3329, %v3321
    %v4282 = vpack.c.b16 %v3330, %v3322
    %v4283 = vpack.c.b16 %v3331, %v3323
    %v4284 = vpack.c.b16 %v3332, %v3324
    %v4285 = vpack.c.b16 %v3333, %v3325
    %v4286 = vpack.c.b16 %v3342, %v3334
    %v4287 = vpack.c.b16 %v3343, %v3335
    %v4288 = vpack.c.b16 %v3344, %v3336
    %v4289 = vpack.c.b16 %v3345, %v3337
    %v4290 = vpack.c.b16 %v3346, %v3338
    %v4291 = vpack.c.b16 %v3347, %v3339
    %v4292 = vpack.c.b16 %v3348, %v3340
    %v4293 = vpack.c.b16 %v3349, %v3341
    %v4294 = vpack.c.b16 %v3358, %v3350
    %v4295 = vpack.c.b16 %v3359, %v3351
    %v4296 = vpack.c.b16 %v3360, %v3352
    %v4297 = vpack.c.b16 %v3361, %v3353
    %v4298 = vpack.c.b16 %v3362, %v3354
    %v4299 = vpack.c.b16 %v3363, %v3355
    %v4300 = vpack.c.b16 %v3364, %v3356
    %v4301 = vpack.c.b16 %v3365, %v3357
    %v4302 = vpack.c.b16 %v3374, %v3366
    %v4303 = vpack.c.b16 %v3375, %v3367
    %v4304 = vpack.c.b16 %v3376, %v3368
    %v4305 = vpack.c.b16 %v3377, %v3369
    %v4306 = vpack.c.b16 %v3378, %v3370
    %v4307 = vpack.c.b16 %v3379, %v3371
    %v4308 = vpack.c.b16 %v3380, %v3372
    %v4309 = vpack.c.b16 %v3381, %v3373
    %v4310 = vpack.c.b16 %v3390, %v3382
    %v4311 = vpack.c.b16 %v3391, %v3383
    %v4312 = vpack.c.b16 %v3392, %v3384
    %v4313 = vpack.c.b16 %v3393, %v3385
    %v4314 = vpack.c.b16 %v3394, %v3386
    %v4315 = vpack.c.b16 %v3395, %v3387
    %v4316 = vpack.c.b16 %v3396, %v3388
    %v4317 = vpack.c.b16 %v3397, %v3389
    %v4318 = vpack.c.b16 %v3406, %v3398
    %v4319 = vpack.c.b16 %v3407, %v3399
    %v4320 = vpack.c.b16 %v3408, %v3400
    %v4321 = vpack.c.b16 %v3409, %v3401
    %v4322 = vpack.c.b16 %v3410, %v3402
    %v4323 = vpack.c.b16 %v3411, %v3403
    %v4324 = vpack.c.b16 %v3412, %v3404
    %v4325 = vpack.c.b16 %v3413, %v3405
    %v4326 = vpack.c.b16 %v3422, %v3414
    %v4327 = vpack.c.b16 %v3423, %v3415
    %v4328 = vpack.c.b16 %v3424, %v3416
    %v4329 = vpack.c.b16 %v3425, %v3417
    %v4330 = vpack.c.b16 %v3426, %v3418
    %v4331 = vpack.c.b16 %v3427, %v3419
    %v4332 = vpack.c.b16 %v3428, %v3420
    %v4333 = vpack.c.b16 %v3429, %v3421
    %v4334 = vpack.c.b16 %v3438, %v3430
    %v4335 = vpack.c.b16 %v3439, %v3431
    %v4336 = vpack.c.b16 %v3440, %v3432
    %v4337 = vpack.c.b16 %v3441, %v3433
    %v4338 = vpack.c.b16 %v3442, %v3434
    %v4339 = vpack.c.b16 %v3443, %v3435
    %v4340 = vpack.c.b16 %v3444, %v3436
    %v4341 = vpack.c.b16 %v3445, %v3437
    %v4342 = vpack.c.b16 %v3454, %v3446
    %v4343 = vpack.c.b16 %v3455, %v3447
    %v4344 = vpack.c.b16 %v3456, %v3448
    %v4345 = vpack.c.b16 %v3457, %v3449
    %v4346 = vpack.c.b16 %v3458, %v3450
    %v4347 = vpack.c.b16 %v3459, %v3451
    %v4348 = vpack.c.b16 %v3460, %v3452
    %v4349 = vpack.c.b16 %v3461, %v3453
    %v4350 = vpack.c.b16 %v3470, %v3462
    %v4351 = vpack.c.b16 %v3471, %v3463
    %v4352 = vpack.c.b16 %v3472, %v3464
    %v4353 = vpack.c.b16 %v3473, %v3465
    %v4354 = vpack.c.b16 %v3474, %v3466
    %v4355 = vpack.c.b16 %v3475, %v3467
    %v4356 = vpack.c.b16 %v3476, %v3468
    %v4357 = vpack.c.b16 %v3477, %v3469
    %v4358 = vpack.c.b16 %v3486, %v3478
    %v4359 = vpack.c.b16 %v3487, %v3479
    %v4360 = vpack.c.b16 %v3488, %v3480
    %v4361 = vpack.c.b16 %v3489, %v3481
    %v4362 = vpack.c.b16 %v3490, %v3482
    %v4363 = vpack.c.b16 %v3491, %v3483
    %v4364 = vpack.c.b16 %v3492, %v3484
    %v4365 = vpack.c.b16 %v3493, %v3485
    %v4366 = vpack.c.b16 %v3502, %v3494
    %v4367 = vpack.c.b16 %v3503, %v3495
    %v4368 = vpack.c.b16 %v3504, %v3496
    %v4369 = vpack.c.b16 %v3505, %v3497
    %v4370 = vpack.c.b16 %v3506, %v3498
    %v4371 = vpack.c.b16 %v3507, %v3499
    %v4372 = vpack.c.b16 %v3508, %v3500
    %v4373 = vpack.c.b16 %v3509, %v3501
    %v4374 = vpack.c.b16 %v3518, %v3510
    %v4375 = vpack.c.b16 %v3519, %v3511
    %v4376 = vpack.c.b16 %v3520, %v3512
    %v4377 = vpack.c.b16 %v3521, %v3513
    %v4378 = vpack.c.b16 %v3522, %v3514
    %v4379 = vpack.c.b16 %v3523, %v3515
    %v4380 = vpack.c.b16 %v3524, %v3516
    %v4381 = vpack.c.b16 %v3525, %v3517
    %v4382 = vpack.c.b16 %v3534, %v3526
    %v4383 = vpack.c.b16 %v3535, %v3527
    %v4384 = vpack.c.b16 %v3536, %v3528
    %v4385 = vpack.c.b16 %v3537, %v3529
    %v4386 = vpack.c.b16 %v3538, %v3530
    %v4387 = vpack.c.b16 %v3539, %v3531
    %v4388 = vpack.c.b16 %v3540, %v3532
    %v4389 = vpack.c.b16 %v3541, %v3533
    %v4390 = vpack.c.b16 %v3550, %v3542
    %v4391 = vpack.c.b16 %v3551, %v3543
    %v4392 = vpack.c.b16 %v3552, %v3544
    %v4393 = vpack.c.b16 %v3553, %v3545
    %v4394 = vpack.c.b16 %v3554, %v3546
    %v4395 = vpack.c.b16 %v3555, %v3547
    %v4396 = vpack.c.b16 %v3556, %v3548
    %v4397 = vpack.c.b16 %v3557, %v3549
    %v4398 = vpack.c.b16 %v3566, %v3558
    %v4399 = vpack.c.b16 %v3567, %v3559
    %v4400 = vpack.c.b16 %v3568, %v3560
    %v4401 = vpack.c.b16 %v3569, %v3561
    %v4402 = vpack.c.b16 %v3570, %v3562
    %v4403 = vpack.c.b16 %v3571, %v3563
    %v4404 = vpack.c.b16 %v3572, %v3564
    %v4405 = vpack.c.b16 %v3573, %v3565
    %v4406 = vpack.c.b16 %v3582, %v3574
    %v4407 = vpack.c.b16 %v3583, %v3575
    %v4408 = vpack.c.b16 %v3584, %v3576
    %v4409 = vpack.c.b16 %v3585, %v3577
    %v4410 = vpack.c.b16 %v3586, %v3578
    %v4411 = vpack.c.b16 %v3587, %v3579
    %v4412 = vpack.c.b16 %v3588, %v3580
    %v4413 = vpack.c.b16 %v3589, %v3581
    %v4414 = vpack.c.b16 %v3598, %v3590
    %v4415 = vpack.c.b16 %v3599, %v3591
    %v4416 = vpack.c.b16 %v3600, %v3592
    %v4417 = vpack.c.b16 %v3601, %v3593
    %v4418 = vpack.c.b16 %v3602, %v3594
    %v4419 = vpack.c.b16 %v3603, %v3595
    %v4420 = vpack.c.b16 %v3604, %v3596
    %v4421 = vpack.c.b16 %v3605, %v3597
    %v4422 = vpack.c.b16 %v3614, %v3606
    %v4423 = vpack.c.b16 %v3615, %v3607
    %v4424 = vpack.c.b16 %v3616, %v3608
    %v4425 = vpack.c.b16 %v3617, %v3609
    %v4426 = vpack.c.b16 %v3618, %v3610
    %v4427 = vpack.c.b16 %v3619, %v3611
    %v4428 = vpack.c.b16 %v3620, %v3612
    %v4429 = vpack.c.b16 %v3621, %v3613
    %v4430 = vpack.c.b16 %v3630, %v3622
    %v4431 = vpack.c.b16 %v3631, %v3623
    %v4432 = vpack.c.b16 %v3632, %v3624
    %v4433 = vpack.c.b16 %v3633, %v3625
    %v4434 = vpack.c.b16 %v3634, %v3626
    %v4435 = vpack.c.b16 %v3635, %v3627
    %v4436 = vpack.c.b16 %v3636, %v3628
    %v4437 = vpack.c.b16 %v3637, %v3629
    %v4438 = vpack.c.b16 %v3646, %v3638
    %v4439 = vpack.c.b16 %v3647, %v3639
    %v4440 = vpack.c.b16 %v3648, %v3640
    %v4441 = vpack.c.b16 %v3649, %v3641
    %v4442 = vpack.c.b16 %v3650, %v3642
    %v4443 = vpack.c.b16 %v3651, %v3643
    %v4444 = vpack.c.b16 %v3652, %v3644
    %v4445 = vpack.c.b16 %v3653, %v3645
    %v4446 = vpack.c.b16 %v3662, %v3654
    %v4447 = vpack.c.b16 %v3663, %v3655
    %v4448 = vpack.c.b16 %v3664, %v3656
    %v4449 = vpack.c.b16 %v3665, %v3657
    %v4450 = vpack.c.b16 %v3666, %v3658
    %v4451 = vpack.c.b16 %v3667, %v3659
    %v4452 = vpack.c.b16 %v3668, %v3660
    %v4453 = vpack.c.b16 %v3669, %v3661
    %v4454 = vpack.c.b16 %v3678, %v3670
    %v4455 = vpack.c.b16 %v3679, %v3671
    %v4456 = vpack.c.b16 %v3680, %v3672
    %v4457 = vpack.c.b16 %v3681, %v3673
    %v4458 = vpack.c.b16 %v3682, %v3674
    %v4459 = vpack.c.b16 %v3683, %v3675
    %v4460 = vpack.c.b16 %v3684, %v3676
    %v4461 = vpack.c.b16 %v3685, %v3677
    %v4462 = vpack.c.b16 %v3694, %v3686
    %v4463 = vpack.c.b16 %v3695, %v3687
    %v4464 = vpack.c.b16 %v3696, %v3688
    %v4465 = vpack.c.b16 %v3697, %v3689
    %v4466 = vpack.c.b16 %v3698, %v3690
    %v4467 = vpack.c.b16 %v3699, %v3691
    %v4468 = vpack.c.b16 %v3700, %v3692
    %v4469 = vpack.c.b16 %v3701, %v3693
    %v4470 = vpack.c.b16 %v3710, %v3702
    %v4471 = vpack.c.b16 %v3711, %v3703
    %v4472 = vpack.c.b16 %v3712, %v3704
    %v4473 = vpack.c.b16 %v3713, %v3705
    %v4474 = vpack.c.b16 %v3714, %v3706
    %v4475 = vpack.c.b16 %v3715, %v3707
    %v4476 = vpack.c.b16 %v3716, %v3708
    %v4477 = vpack.c.b16 %v3717, %v3709
    %v4478 = vpack.c.b16 %v3726, %v3718
    %v4479 = vpack.c.b16 %v3727, %v3719
    %v4480 = vpack.c.b16 %v3728, %v3720
    %v4481 = vpack.c.b16 %v3729, %v3721
    %v4482 = vpack.c.b16 %v3730, %v3722
    %v4483 = vpack.c.b16 %v3731, %v3723
    %v4484 = vpack.c.b16 %v3732, %v3724
    %v4485 = vpack.c.b16 %v3733, %v3725
    %v4486 = vpack.c.b16 %v3742, %v3734
    %v4487 = vpack.c.b16 %v3743, %v3735
    %v4488 = vpack.c.b16 %v3744, %v3736
    %v4489 = vpack.c.b16 %v3745, %v3737
    %v4490 = vpack.c.b16 %v3746, %v3738
    %v4491 = vpack.c.b16 %v3747, %v3739
    %v4492 = vpack.c.b16 %v3748, %v3740
    %v4493 = vpack.c.b16 %v3749, %v3741
    %v4494 = vpack.c.b16 %v3758, %v3750
    %v4495 = vpack.c.b16 %v3759, %v3751
    %v4496 = vpack.c.b16 %v3760, %v3752
    %v4497 = vpack.c.b16 %v3761, %v3753
    %v4498 = vpack.c.b16 %v3762, %v3754
    %v4499 = vpack.c.b16 %v3763, %v3755
    %v4500 = vpack.c.b16 %v3764, %v3756
    %v4501 = vpack.c.b16 %v3765, %v3757
    %v4502 = vpack.c.b16 %v3774, %v3766
    %v4503 = vpack.c.b16 %v3775, %v3767
    %v4504 = vpack.c.b16 %v3776, %v3768
    %v4505 = vpack.c.b16 %v3777, %v3769
    %v4506 = vpack.c.b16 %v3778, %v3770
    %v4507 = vpack.c.b16 %v3779, %v3771
    %v4508 = vpack.c.b16 %v3780, %v3772
    %v4509 = vpack.c.b16 %v3781, %v3773
    %v4510 = vpack.c.b16 %v3790, %v3782
    %v4511 = vpack.c.b16 %v3791, %v3783
    %v4512 = vpack.c.b16 %v3792, %v3784
    %v4513 = vpack.c.b16 %v3793, %v3785
    %v4514 = vpack.c.b16 %v3794, %v3786
    %v4515 = vpack.c.b16 %v3795, %v3787
    %v4516 = vpack.c.b16 %v3796, %v3788
    %v4517 = vpack.c.b16 %v3797, %v3789
    %v4518 = vpack.c.b16 %v3806, %v3798
    %v4519 = vpack.c.b16 %v3807, %v3799
    %v4520 = vpack.c.b16 %v3808, %v3800
    %v4521 = vpack.c.b16 %v3809, %v3801
    %v4522 = vpack.c.b16 %v3810, %v3802
    %v4523 = vpack.c.b16 %v3811, %v3803
    %v4524 = vpack.c.b16 %v3812, %v3804
    %v4525 = vpack.c.b16 %v3813, %v3805
    %v4526 = vpack.c.b16 %v3822, %v3814
    %v4527 = vpack.c.b16 %v3823, %v3815
    %v4528 = vpack.c.b16 %v3824, %v3816
    %v4529 = vpack.c.b16 %v3825, %v3817
    %v4530 = vpack.c.b16 %v3826, %v3818
    %v4531 = vpack.c.b16 %v3827, %v3819
    %v4532 = vpack.c.b16 %v3828, %v3820
    %v4533 = vpack.c.b16 %v3829, %v3821
    %v4534 = vpack.c.b16 %v3838, %v3830
    %v4535 = vpack.c.b16 %v3839, %v3831
    %v4536 = vpack.c.b16 %v3840, %v3832
    %v4537 = vpack.c.b16 %v3841, %v3833
    %v4538 = vpack.c.b16 %v3842, %v3834
    %v4539 = vpack.c.b16 %v3843, %v3835
    %v4540 = vpack.c.b16 %v3844, %v3836
    %v4541 = vpack.c.b16 %v3845, %v3837
    %v4542 = vpack.c.b16 %v3854, %v3846
    %v4543 = vpack.c.b16 %v3855, %v3847
    %v4544 = vpack.c.b16 %v3856, %v3848
    %v4545 = vpack.c.b16 %v3857, %v3849
    %v4546 = vpack.c.b16 %v3858, %v3850
    %v4547 = vpack.c.b16 %v3859, %v3851
    %v4548 = vpack.c.b16 %v3860, %v3852
    %v4549 = vpack.c.b16 %v3861, %v3853
    %v4550 = vpack.c.b16 %v3870, %v3862
    %v4551 = vpack.c.b16 %v3871, %v3863
    %v4552 = vpack.c.b16 %v3872, %v3864
    %v4553 = vpack.c.b16 %v3873, %v3865
    %v4554 = vpack.c.b16 %v3874, %v3866
    %v4555 = vpack.c.b16 %v3875, %v3867
    %v4556 = vpack.c.b16 %v3876, %v3868
    %v4557 = vpack.c.b16 %v3877, %v3869
    %v4558 = vpack.c.b16 %v3886, %v3878
    %v4559 = vpack.c.b16 %v3887, %v3879
    %v4560 = vpack.c.b16 %v3888, %v3880
    %v4561 = vpack.c.b16 %v3889, %v3881
    %v4562 = vpack.c.b16 %v3890, %v3882
    %v4563 = vpack.c.b16 %v3891, %v3883
    %v4564 = vpack.c.b16 %v3892, %v3884
    %v4565 = vpack.c.b16 %v3893, %v3885
    %v4566 = vpack.c.b16 %v3902, %v3894
    %v4567 = vpack.c.b16 %v3903, %v3895
    %v4568 = vpack.c.b16 %v3904, %v3896
    %v4569 = vpack.c.b16 %v3905, %v3897
    %v4570 = vpack.c.b16 %v3906, %v3898
    %v4571 = vpack.c.b16 %v3907, %v3899
    %v4572 = vpack.c.b16 %v3908, %v3900
    %v4573 = vpack.c.b16 %v3909, %v3901
    %v4574 = vpack.c.b16 %v3918, %v3910
    %v4575 = vpack.c.b16 %v3919, %v3911
    %v4576 = vpack.c.b16 %v3920, %v3912
    %v4577 = vpack.c.b16 %v3921, %v3913
    %v4578 = vpack.c.b16 %v3922, %v3914
    %v4579 = vpack.c.b16 %v3923, %v3915
    %v4580 = vpack.c.b16 %v3924, %v3916
    %v4581 = vpack.c.b16 %v3925, %v3917
    %v4582 = vpack.c.b16 %v3934, %v3926
    %v4583 = vpack.c.b16 %v3935, %v3927
    %v4584 = vpack.c.b16 %v3936, %v3928
    %v4585 = vpack.c.b16 %v3937, %v3929
    %v4586 = vpack.c.b16 %v3938, %v3930
    %v4587 = vpack.c.b16 %v3939, %v3931
    %v4588 = vpack.c.b16 %v3940, %v3932
    %v4589 = vpack.c.b16 %v3941, %v3933
    %v4590 = vpack.c.b16 %v3950, %v3942
    %v4591 = vpack.c.b16 %v3951, %v3943
    %v4592 = vpack.c.b16 %v3952, %v3944
    %v4593 = vpack.c.b16 %v3953, %v3945
    %v4594 = vpack.c.b16 %v3954, %v3946
    %v4595 = vpack.c.b16 %v3955, %v3947
    %v4596 = vpack.c.b16 %v3956, %v3948
    %v4597 = vpack.c.b16 %v3957, %v3949
    %v4598 = vpack.c.b16 %v3966, %v3958
    %v4599 = vpack.c.b16 %v3967, %v3959
    %v4600 = vpack.c.b16 %v3968, %v3960
    %v4601 = vpack.c.b16 %v3969, %v3961
    %v4602 = vpack.c.b16 %v3970, %v3962
    %v4603 = vpack.c.b16 %v3971, %v3963
    %v4604 = vpack.c.b16 %v3972, %v3964
    %v4605 = vpack.c.b16 %v3973, %v3965
    %v4606 = vpack.c.b16 %v3982, %v3974
    %v4607 = vpack.c.b16 %v3983, %v3975
    %v4608 = vpack.c.b16 %v3984, %v3976
    %v4609 = vpack.c.b16 %v3985, %v3977
    %v4610 = vpack.c.b16 %v3986, %v3978
    %v4611 = vpack.c.b16 %v3987, %v3979
    %v4612 = vpack.c.b16 %v3988, %v3980
    %v4613 = vpack.c.b16 %v3989, %v3981
    %v4614 = vpack.c.b16 %v3998, %v3990
    %v4615 = vpack.c.b16 %v3999, %v3991
    %v4616 = vpack.c.b16 %v4000, %v3992
    %v4617 = vpack.c.b16 %v4001, %v3993
    %v4618 = vpack.c.b16 %v4002, %v3994
    %v4619 = vpack.c.b16 %v4003, %v3995
    %v4620 = vpack.c.b16 %v4004, %v3996
    %v4621 = vpack.c.b16 %v4005, %v3997
    %v4622 = vpack.c.b16 %v4014, %v4006
    %v4623 = vpack.c.b16 %v4015, %v4007
    %v4624 = vpack.c.b16 %v4016, %v4008
    %v4625 = vpack.c.b16 %v4017, %v4009
    %v4626 = vpack.c.b16 %v4018, %v4010
    %v4627 = vpack.c.b16 %v4019, %v4011
    %v4628 = vpack.c.b16 %v4020, %v4012
    %v4629 = vpack.c.b16 %v4021, %v4013
    %v4630 = vpack.c.b16 %v4030, %v4022
    %v4631 = vpack.c.b16 %v4031, %v4023
    %v4632 = vpack.c.b16 %v4032, %v4024
    %v4633 = vpack.c.b16 %v4033, %v4025
    %v4634 = vpack.c.b16 %v4034, %v4026
    %v4635 = vpack.c.b16 %v4035, %v4027
    %v4636 = vpack.c.b16 %v4036, %v4028
    %v4637 = vpack.c.b16 %v4037, %v4029
    %v4638 = vpack.c.b16 %v4046, %v4038
    %v4639 = vpack.c.b16 %v4047, %v4039
    %v4640 = vpack.c.b16 %v4048, %v4040
    %v4641 = vpack.c.b16 %v4049, %v4041
    %v4642 = vpack.c.b16 %v4050, %v4042
    %v4643 = vpack.c.b16 %v4051, %v4043
    %v4644 = vpack.c.b16 %v4052, %v4044
    %v4645 = vpack.c.b16 %v4053, %v4045
    %v4646 = vpack.c.b16 %v4062, %v4054
    %v4647 = vpack.c.b16 %v4063, %v4055
    %v4648 = vpack.c.b16 %v4064, %v4056
    %v4649 = vpack.c.b16 %v4065, %v4057
    %v4650 = vpack.c.b16 %v4066, %v4058
    %v4651 = vpack.c.b16 %v4067, %v4059
    %v4652 = vpack.c.b16 %v4068, %v4060
    %v4653 = vpack.c.b16 %v4069, %v4061
    %v4654 = vpack.c.b16 %v4078, %v4070
    %v4655 = vpack.c.b16 %v4079, %v4071
    %v4656 = vpack.c.b16 %v4080, %v4072
    %v4657 = vpack.c.b16 %v4081, %v4073
    %v4658 = vpack.c.b16 %v4082, %v4074
    %v4659 = vpack.c.b16 %v4083, %v4075
    %v4660 = vpack.c.b16 %v4084, %v4076
    %v4661 = vpack.c.b16 %v4085, %v4077
    %v4662 = vpack.c.b16 %v4094, %v4086
    %v4663 = vpack.c.b16 %v4095, %v4087
    %v4664 = vpack.c.b16 %v4096, %v4088
    %v4665 = vpack.c.b16 %v4097, %v4089
    %v4666 = vpack.c.b16 %v4098, %v4090
    %v4667 = vpack.c.b16 %v4099, %v4091
    %v4668 = vpack.c.b16 %v4100, %v4092
    %v4669 = vpack.c.b16 %v4101, %v4093
    %v4670 = vpack.c.b16 %v4110, %v4102
    %v4671 = vpack.c.b16 %v4111, %v4103
    %v4672 = vpack.c.b16 %v4112, %v4104
    %v4673 = vpack.c.b16 %v4113, %v4105
    %v4674 = vpack.c.b16 %v4114, %v4106
    %v4675 = vpack.c.b16 %v4115, %v4107
    %v4676 = vpack.c.b16 %v4116, %v4108
    %v4677 = vpack.c.b16 %v4117, %v4109
    %v4678 = vpack.c.b16 %v4126, %v4118
    %v4679 = vpack.c.b16 %v4127, %v4119
    %v4680 = vpack.c.b16 %v4128, %v4120
    %v4681 = vpack.c.b16 %v4129, %v4121
    %v4682 = vpack.c.b16 %v4130, %v4122
    %v4683 = vpack.c.b16 %v4131, %v4123
    %v4684 = vpack.c.b16 %v4132, %v4124
    %v4685 = vpack.c.b16 %v4133, %v4125
    %v4686 = vpack.c.b16 %v4142, %v4134
    %v4687 = vpack.c.b16 %v4143, %v4135
    %v4688 = vpack.c.b16 %v4144, %v4136
    %v4689 = vpack.c.b16 %v4145, %v4137
    %v4690 = vpack.c.b16 %v4146, %v4138
    %v4691 = vpack.c.b16 %v4147, %v4139
    %v4692 = vpack.c.b16 %v4148, %v4140
    %v4693 = vpack.c.b16 %v4149, %v4141
    %v4694 = vpack.c.b16 %v4158, %v4150
    %v4695 = vpack.c.b16 %v4159, %v4151
    %v4696 = vpack.c.b16 %v4160, %v4152
    %v4697 = vpack.c.b16 %v4161, %v4153
    %v4698 = vpack.c.b16 %v4162, %v4154
    %v4699 = vpack.c.b16 %v4163, %v4155
    %v4700 = vpack.c.b16 %v4164, %v4156
    %v4701 = vpack.c.b16 %v4165, %v4157
    %v4702 = vpack.c.b16 %v4174, %v4166
    %v4703 = vpack.c.b16 %v4175, %v4167
    %v4704 = vpack.c.b16 %v4176, %v4168
    %v4705 = vpack.c.b16 %v4177, %v4169
    %v4706 = vpack.c.b16 %v4178, %v4170
    %v4707 = vpack.c.b16 %v4179, %v4171
    %v4708 = vpack.c.b16 %v4180, %v4172
    %v4709 = vpack.c.b16 %v4181, %v4173
    %v4710 = vpack.c.b16 %v4190, %v4182
    %v4711 = vpack.c.b16 %v4191, %v4183
    %v4712 = vpack.c.b16 %v4192, %v4184
    %v4713 = vpack.c.b16 %v4193, %v4185
    %v4714 = vpack.c.b16 %v4194, %v4186
    %v4715 = vpack.c.b16 %v4195, %v4187
    %v4716 = vpack.c.b16 %v4196, %v4188
    %v4717 = vpack.c.b16 %v4197, %v4189
    %v4718 = vpack.c.b16 %v4206, %v4198
    %v4719 = vpack.c.b16 %v4207, %v4199
    %v4720 = vpack.c.b16 %v4208, %v4200
    %v4721 = vpack.c.b16 %v4209, %v4201
    %v4722 = vpack.c.b16 %v4210, %v4202
    %v4723 = vpack.c.b16 %v4211, %v4203
    %v4724 = vpack.c.b16 %v4212, %v4204
    %v4725 = vpack.c.b16 %v4213, %v4205
    %5238 = vmatpush.bf16.msra.mxu0 %v4270
    %5239 = vmatpush.bf16.msra.mxu0 %v4262
    %5240 = vmatpush.bf16.msra.mxu0 %v4254
    %5241 = vmatpush.bf16.msra.mxu0 %v4246
    %5242 = vmatpush.bf16.msra.mxu0 %v4238
    %5243 = vmatpush.bf16.msra.mxu0 %v4230
    %5244 = vmatpush.bf16.msra.mxu0 %v4222
    %5245 = vmatpush.bf16.msra.mxu0 %v4214
    %5246 = vmatmul.bf16.gmra.mxu0 %v2140
    %v5247 = vpop.f32.mrf.mxu0
    %v5248 = vadd.f32 %v2662, %v5247
    %v5249 = vpop.f32.mrf.mxu0
    %5250 = vdwg.mxu0
    %5251 = vmatpush.bf16.msra.mxu0 %v4334
    %5252 = vmatpush.bf16.msra.mxu0 %v4326
    %5253 = vmatpush.bf16.msra.mxu0 %v4318
    %5254 = vmatpush.bf16.msra.mxu0 %v4310
    %5255 = vmatpush.bf16.msra.mxu0 %v4302
    %5256 = vmatpush.bf16.msra.mxu0 %v4294
    %5257 = vmatpush.bf16.msra.mxu0 %v4286
    %5258 = vmatpush.bf16.msra.mxu0 %v4278
    %5259 = vmatmul.bf16.gmra.mxu0 %v2141
    %v5260 = vpop.f32.mrf.mxu0
    %v5261 = vadd.f32 %v5248, %v5260
    %v5262 = vpop.f32.mrf.mxu0
    %5263 = vdwg.mxu0
    %5264 = vmatpush.bf16.msra.mxu0 %v4398
    %5265 = vmatpush.bf16.msra.mxu0 %v4390
    %5266 = vmatpush.bf16.msra.mxu0 %v4382
    %5267 = vmatpush.bf16.msra.mxu0 %v4374
    %5268 = vmatpush.bf16.msra.mxu0 %v4366
    %5269 = vmatpush.bf16.msra.mxu0 %v4358
    %5270 = vmatpush.bf16.msra.mxu0 %v4350
    %5271 = vmatpush.bf16.msra.mxu0 %v4342
    %5272 = vmatmul.bf16.gmra.mxu0 %v2142
    %v5273 = vpop.f32.mrf.mxu0
    %v5274 = vadd.f32 %v5261, %v5273
    %v5275 = vpop.f32.mrf.mxu0
    %5276 = vdwg.mxu0
    %5277 = vmatpush.bf16.msra.mxu0 %v4462
    %5278 = vmatpush.bf16.msra.mxu0 %v4454
    %5279 = vmatpush.bf16.msra.mxu0 %v4446
    %5280 = vmatpush.bf16.msra.mxu0 %v4438
    %5281 = vmatpush.bf16.msra.mxu0 %v4430
    %5282 = vmatpush.bf16.msra.mxu0 %v4422
    %5283 = vmatpush.bf16.msra.mxu0 %v4414
    %5284 = vmatpush.bf16.msra.mxu0 %v4406
    %5285 = vmatmul.bf16.gmra.mxu0 %v2143
    %v5286 = vpop.f32.mrf.mxu0
    %v5287 = vadd.f32 %v5274, %v5286
    %v5288 = vpop.f32.mrf.mxu0
    %5289 = vdwg.mxu0
    %5290 = vmatpush.bf16.msra.mxu0 %v4526
    %5291 = vmatpush.bf16.msra.mxu0 %v4518
    %5292 = vmatpush.bf16.msra.mxu0 %v4510
    %5293 = vmatpush.bf16.msra.mxu0 %v4502
    %5294 = vmatpush.bf16.msra.mxu0 %v4494
    %5295 = vmatpush.bf16.msra.mxu0 %v4486
    %5296 = vmatpush.bf16.msra.mxu0 %v4478
    %5297 = vmatpush.bf16.msra.mxu0 %v4470
    %5298 = vmatmul.bf16.gmra.mxu0 %v2144
    %v5299 = vpop.f32.mrf.mxu0
    %v5300 = vadd.f32 %v5287, %v5299
    %v5301 = vpop.f32.mrf.mxu0
    %5302 = vdwg.mxu0
    %5303 = vmatpush.bf16.msra.mxu0 %v4590
    %5304 = vmatpush.bf16.msra.mxu0 %v4582
    %5305 = vmatpush.bf16.msra.mxu0 %v4574
    %5306 = vmatpush.bf16.msra.mxu0 %v4566
    %5307 = vmatpush.bf16.msra.mxu0 %v4558
    %5308 = vmatpush.bf16.msra.mxu0 %v4550
    %5309 = vmatpush.bf16.msra.mxu0 %v4542
    %5310 = vmatpush.bf16.msra.mxu0 %v4534
    %5311 = vmatmul.bf16.gmra.mxu0 %v2145
    %v5312 = vpop.f32.mrf.mxu0
    %v5313 = vadd.f32 %v5300, %v5312
    %v5314 = vpop.f32.mrf.mxu0
    %5315 = vdwg.mxu0
    %5316 = vmatpush.bf16.msra.mxu0 %v4654
    %5317 = vmatpush.bf16.msra.mxu0 %v4646
    %5318 = vmatpush.bf16.msra.mxu0 %v4638
    %5319 = vmatpush.bf16.msra.mxu0 %v4630
    %5320 = vmatpush.bf16.msra.mxu0 %v4622
    %5321 = vmatpush.bf16.msra.mxu0 %v4614
    %5322 = vmatpush.bf16.msra.mxu0 %v4606
    %5323 = vmatpush.bf16.msra.mxu0 %v4598
    %5324 = vmatmul.bf16.gmra.mxu0 %v2146
    %v5325 = vpop.f32.mrf.mxu0
    %v5326 = vadd.f32 %v5313, %v5325
    %v5327 = vpop.f32.mrf.mxu0
    %5328 = vdwg.mxu0
    %5329 = vmatpush.bf16.msra.mxu0 %v4718
    %5330 = vmatpush.bf16.msra.mxu0 %v4710
    %5331 = vmatpush.bf16.msra.mxu0 %v4702
    %5332 = vmatpush.bf16.msra.mxu0 %v4694
    %5333 = vmatpush.bf16.msra.mxu0 %v4686
    %5334 = vmatpush.bf16.msra.mxu0 %v4678
    %5335 = vmatpush.bf16.msra.mxu0 %v4670
    %5336 = vmatpush.bf16.msra.mxu0 %v4662
    %5337 = vmatmul.bf16.gmra.mxu0 %v2147
    %v5338 = vpop.f32.mrf.mxu0
    %v5339 = vadd.f32 %v5326, %v5338
    %v5340 = vpop.f32.mrf.mxu0
    %5341 = vdwg.mxu0
    %5342 = vmatpush.bf16.msra.mxu0 %v4271
    %5343 = vmatpush.bf16.msra.mxu0 %v4263
    %5344 = vmatpush.bf16.msra.mxu0 %v4255
    %5345 = vmatpush.bf16.msra.mxu0 %v4247
    %5346 = vmatpush.bf16.msra.mxu0 %v4239
    %5347 = vmatpush.bf16.msra.mxu0 %v4231
    %5348 = vmatpush.bf16.msra.mxu0 %v4223
    %5349 = vmatpush.bf16.msra.mxu0 %v4215
    %5350 = vmatmul.bf16.gmra.mxu0 %v2140
    %v5351 = vpop.f32.mrf.mxu0
    %v5352 = vadd.f32 %v2663, %v5351
    %v5353 = vpop.f32.mrf.mxu0
    %5354 = vdwg.mxu0
    %5355 = vmatpush.bf16.msra.mxu0 %v4335
    %5356 = vmatpush.bf16.msra.mxu0 %v4327
    %5357 = vmatpush.bf16.msra.mxu0 %v4319
    %5358 = vmatpush.bf16.msra.mxu0 %v4311
    %5359 = vmatpush.bf16.msra.mxu0 %v4303
    %5360 = vmatpush.bf16.msra.mxu0 %v4295
    %5361 = vmatpush.bf16.msra.mxu0 %v4287
    %5362 = vmatpush.bf16.msra.mxu0 %v4279
    %5363 = vmatmul.bf16.gmra.mxu0 %v2141
    %v5364 = vpop.f32.mrf.mxu0
    %v5365 = vadd.f32 %v5352, %v5364
    %v5366 = vpop.f32.mrf.mxu0
    %5367 = vdwg.mxu0
    %5368 = vmatpush.bf16.msra.mxu0 %v4399
    %5369 = vmatpush.bf16.msra.mxu0 %v4391
    %5370 = vmatpush.bf16.msra.mxu0 %v4383
    %5371 = vmatpush.bf16.msra.mxu0 %v4375
    %5372 = vmatpush.bf16.msra.mxu0 %v4367
    %5373 = vmatpush.bf16.msra.mxu0 %v4359
    %5374 = vmatpush.bf16.msra.mxu0 %v4351
    %5375 = vmatpush.bf16.msra.mxu0 %v4343
    %5376 = vmatmul.bf16.gmra.mxu0 %v2142
    %v5377 = vpop.f32.mrf.mxu0
    %v5378 = vadd.f32 %v5365, %v5377
    %v5379 = vpop.f32.mrf.mxu0
    %5380 = vdwg.mxu0
    %5381 = vmatpush.bf16.msra.mxu0 %v4463
    %5382 = vmatpush.bf16.msra.mxu0 %v4455
    %5383 = vmatpush.bf16.msra.mxu0 %v4447
    %5384 = vmatpush.bf16.msra.mxu0 %v4439
    %5385 = vmatpush.bf16.msra.mxu0 %v4431
    %5386 = vmatpush.bf16.msra.mxu0 %v4423
    %5387 = vmatpush.bf16.msra.mxu0 %v4415
    %5388 = vmatpush.bf16.msra.mxu0 %v4407
    %5389 = vmatmul.bf16.gmra.mxu0 %v2143
    %v5390 = vpop.f32.mrf.mxu0
    %v5391 = vadd.f32 %v5378, %v5390
    %v5392 = vpop.f32.mrf.mxu0
    %5393 = vdwg.mxu0
    %5394 = vmatpush.bf16.msra.mxu0 %v4527
    %5395 = vmatpush.bf16.msra.mxu0 %v4519
    %5396 = vmatpush.bf16.msra.mxu0 %v4511
    %5397 = vmatpush.bf16.msra.mxu0 %v4503
    %5398 = vmatpush.bf16.msra.mxu0 %v4495
    %5399 = vmatpush.bf16.msra.mxu0 %v4487
    %5400 = vmatpush.bf16.msra.mxu0 %v4479
    %5401 = vmatpush.bf16.msra.mxu0 %v4471
    %5402 = vmatmul.bf16.gmra.mxu0 %v2144
    %v5403 = vpop.f32.mrf.mxu0
    %v5404 = vadd.f32 %v5391, %v5403
    %v5405 = vpop.f32.mrf.mxu0
    %5406 = vdwg.mxu0
    %5407 = vmatpush.bf16.msra.mxu0 %v4591
    %5408 = vmatpush.bf16.msra.mxu0 %v4583
    %5409 = vmatpush.bf16.msra.mxu0 %v4575
    %5410 = vmatpush.bf16.msra.mxu0 %v4567
    %5411 = vmatpush.bf16.msra.mxu0 %v4559
    %5412 = vmatpush.bf16.msra.mxu0 %v4551
    %5413 = vmatpush.bf16.msra.mxu0 %v4543
    %5414 = vmatpush.bf16.msra.mxu0 %v4535
    %5415 = vmatmul.bf16.gmra.mxu0 %v2145
    %v5416 = vpop.f32.mrf.mxu0
    %v5417 = vadd.f32 %v5404, %v5416
    %v5418 = vpop.f32.mrf.mxu0
    %5419 = vdwg.mxu0
    %5420 = vmatpush.bf16.msra.mxu0 %v4655
    %5421 = vmatpush.bf16.msra.mxu0 %v4647
    %5422 = vmatpush.bf16.msra.mxu0 %v4639
    %5423 = vmatpush.bf16.msra.mxu0 %v4631
    %5424 = vmatpush.bf16.msra.mxu0 %v4623
    %5425 = vmatpush.bf16.msra.mxu0 %v4615
    %5426 = vmatpush.bf16.msra.mxu0 %v4607
    %5427 = vmatpush.bf16.msra.mxu0 %v4599
    %5428 = vmatmul.bf16.gmra.mxu0 %v2146
    %v5429 = vpop.f32.mrf.mxu0
    %v5430 = vadd.f32 %v5417, %v5429
    %v5431 = vpop.f32.mrf.mxu0
    %5432 = vdwg.mxu0
    %5433 = vmatpush.bf16.msra.mxu0 %v4719
    %5434 = vmatpush.bf16.msra.mxu0 %v4711
    %5435 = vmatpush.bf16.msra.mxu0 %v4703
    %5436 = vmatpush.bf16.msra.mxu0 %v4695
    %5437 = vmatpush.bf16.msra.mxu0 %v4687
    %5438 = vmatpush.bf16.msra.mxu0 %v4679
    %5439 = vmatpush.bf16.msra.mxu0 %v4671
    %5440 = vmatpush.bf16.msra.mxu0 %v4663
    %5441 = vmatmul.bf16.gmra.mxu0 %v2147
    %v5442 = vpop.f32.mrf.mxu0
    %v5443 = vadd.f32 %v5430, %v5442
    %v5444 = vpop.f32.mrf.mxu0
    %5445 = vdwg.mxu0
    %5446 = vmatpush.bf16.msra.mxu0 %v4272
    %5447 = vmatpush.bf16.msra.mxu0 %v4264
    %5448 = vmatpush.bf16.msra.mxu0 %v4256
    %5449 = vmatpush.bf16.msra.mxu0 %v4248
    %5450 = vmatpush.bf16.msra.mxu0 %v4240
    %5451 = vmatpush.bf16.msra.mxu0 %v4232
    %5452 = vmatpush.bf16.msra.mxu0 %v4224
    %5453 = vmatpush.bf16.msra.mxu0 %v4216
    %5454 = vmatmul.bf16.gmra.mxu0 %v2140
    %v5455 = vpop.f32.mrf.mxu0
    %v5456 = vadd.f32 %v2664, %v5455
    %v5457 = vpop.f32.mrf.mxu0
    %5458 = vdwg.mxu0
    %5459 = vmatpush.bf16.msra.mxu0 %v4336
    %5460 = vmatpush.bf16.msra.mxu0 %v4328
    %5461 = vmatpush.bf16.msra.mxu0 %v4320
    %5462 = vmatpush.bf16.msra.mxu0 %v4312
    %5463 = vmatpush.bf16.msra.mxu0 %v4304
    %5464 = vmatpush.bf16.msra.mxu0 %v4296
    %5465 = vmatpush.bf16.msra.mxu0 %v4288
    %5466 = vmatpush.bf16.msra.mxu0 %v4280
    %5467 = vmatmul.bf16.gmra.mxu0 %v2141
    %v5468 = vpop.f32.mrf.mxu0
    %v5469 = vadd.f32 %v5456, %v5468
    %v5470 = vpop.f32.mrf.mxu0
    %5471 = vdwg.mxu0
    %5472 = vmatpush.bf16.msra.mxu0 %v4400
    %5473 = vmatpush.bf16.msra.mxu0 %v4392
    %5474 = vmatpush.bf16.msra.mxu0 %v4384
    %5475 = vmatpush.bf16.msra.mxu0 %v4376
    %5476 = vmatpush.bf16.msra.mxu0 %v4368
    %5477 = vmatpush.bf16.msra.mxu0 %v4360
    %5478 = vmatpush.bf16.msra.mxu0 %v4352
    %5479 = vmatpush.bf16.msra.mxu0 %v4344
    %5480 = vmatmul.bf16.gmra.mxu0 %v2142
    %v5481 = vpop.f32.mrf.mxu0
    %v5482 = vadd.f32 %v5469, %v5481
    %v5483 = vpop.f32.mrf.mxu0
    %5484 = vdwg.mxu0
    %5485 = vmatpush.bf16.msra.mxu0 %v4464
    %5486 = vmatpush.bf16.msra.mxu0 %v4456
    %5487 = vmatpush.bf16.msra.mxu0 %v4448
    %5488 = vmatpush.bf16.msra.mxu0 %v4440
    %5489 = vmatpush.bf16.msra.mxu0 %v4432
    %5490 = vmatpush.bf16.msra.mxu0 %v4424
    %5491 = vmatpush.bf16.msra.mxu0 %v4416
    %5492 = vmatpush.bf16.msra.mxu0 %v4408
    %5493 = vmatmul.bf16.gmra.mxu0 %v2143
    %v5494 = vpop.f32.mrf.mxu0
    %v5495 = vadd.f32 %v5482, %v5494
    %v5496 = vpop.f32.mrf.mxu0
    %5497 = vdwg.mxu0
    %5498 = vmatpush.bf16.msra.mxu0 %v4528
    %5499 = vmatpush.bf16.msra.mxu0 %v4520
    %5500 = vmatpush.bf16.msra.mxu0 %v4512
    %5501 = vmatpush.bf16.msra.mxu0 %v4504
    %5502 = vmatpush.bf16.msra.mxu0 %v4496
    %5503 = vmatpush.bf16.msra.mxu0 %v4488
    %5504 = vmatpush.bf16.msra.mxu0 %v4480
    %5505 = vmatpush.bf16.msra.mxu0 %v4472
    %5506 = vmatmul.bf16.gmra.mxu0 %v2144
    %v5507 = vpop.f32.mrf.mxu0
    %v5508 = vadd.f32 %v5495, %v5507
    %v5509 = vpop.f32.mrf.mxu0
    %5510 = vdwg.mxu0
    %5511 = vmatpush.bf16.msra.mxu0 %v4592
    %5512 = vmatpush.bf16.msra.mxu0 %v4584
    %5513 = vmatpush.bf16.msra.mxu0 %v4576
    %5514 = vmatpush.bf16.msra.mxu0 %v4568
    %5515 = vmatpush.bf16.msra.mxu0 %v4560
    %5516 = vmatpush.bf16.msra.mxu0 %v4552
    %5517 = vmatpush.bf16.msra.mxu0 %v4544
    %5518 = vmatpush.bf16.msra.mxu0 %v4536
    %5519 = vmatmul.bf16.gmra.mxu0 %v2145
    %v5520 = vpop.f32.mrf.mxu0
    %v5521 = vadd.f32 %v5508, %v5520
    %v5522 = vpop.f32.mrf.mxu0
    %5523 = vdwg.mxu0
    %5524 = vmatpush.bf16.msra.mxu0 %v4656
    %5525 = vmatpush.bf16.msra.mxu0 %v4648
    %5526 = vmatpush.bf16.msra.mxu0 %v4640
    %5527 = vmatpush.bf16.msra.mxu0 %v4632
    %5528 = vmatpush.bf16.msra.mxu0 %v4624
    %5529 = vmatpush.bf16.msra.mxu0 %v4616
    %5530 = vmatpush.bf16.msra.mxu0 %v4608
    %5531 = vmatpush.bf16.msra.mxu0 %v4600
    %5532 = vmatmul.bf16.gmra.mxu0 %v2146
    %v5533 = vpop.f32.mrf.mxu0
    %v5534 = vadd.f32 %v5521, %v5533
    %v5535 = vpop.f32.mrf.mxu0
    %5536 = vdwg.mxu0
    %5537 = vmatpush.bf16.msra.mxu0 %v4720
    %5538 = vmatpush.bf16.msra.mxu0 %v4712
    %5539 = vmatpush.bf16.msra.mxu0 %v4704
    %5540 = vmatpush.bf16.msra.mxu0 %v4696
    %5541 = vmatpush.bf16.msra.mxu0 %v4688
    %5542 = vmatpush.bf16.msra.mxu0 %v4680
    %5543 = vmatpush.bf16.msra.mxu0 %v4672
    %5544 = vmatpush.bf16.msra.mxu0 %v4664
    %5545 = vmatmul.bf16.gmra.mxu0 %v2147
    %v5546 = vpop.f32.mrf.mxu0
    %v5547 = vadd.f32 %v5534, %v5546
    %v5548 = vpop.f32.mrf.mxu0
    %5549 = vdwg.mxu0
    %5550 = vmatpush.bf16.msra.mxu0 %v4273
    %5551 = vmatpush.bf16.msra.mxu0 %v4265
    %5552 = vmatpush.bf16.msra.mxu0 %v4257
    %5553 = vmatpush.bf16.msra.mxu0 %v4249
    %5554 = vmatpush.bf16.msra.mxu0 %v4241
    %5555 = vmatpush.bf16.msra.mxu0 %v4233
    %5556 = vmatpush.bf16.msra.mxu0 %v4225
    %5557 = vmatpush.bf16.msra.mxu0 %v4217
    %5558 = vmatmul.bf16.gmra.mxu0 %v2140
    %v5559 = vpop.f32.mrf.mxu0
    %v5560 = vadd.f32 %v2665, %v5559
    %v5561 = vpop.f32.mrf.mxu0
    %5562 = vdwg.mxu0
    %5563 = vmatpush.bf16.msra.mxu0 %v4337
    %5564 = vmatpush.bf16.msra.mxu0 %v4329
    %5565 = vmatpush.bf16.msra.mxu0 %v4321
    %5566 = vmatpush.bf16.msra.mxu0 %v4313
    %5567 = vmatpush.bf16.msra.mxu0 %v4305
    %5568 = vmatpush.bf16.msra.mxu0 %v4297
    %5569 = vmatpush.bf16.msra.mxu0 %v4289
    %5570 = vmatpush.bf16.msra.mxu0 %v4281
    %5571 = vmatmul.bf16.gmra.mxu0 %v2141
    %v5572 = vpop.f32.mrf.mxu0
    %v5573 = vadd.f32 %v5560, %v5572
    %v5574 = vpop.f32.mrf.mxu0
    %5575 = vdwg.mxu0
    %5576 = vmatpush.bf16.msra.mxu0 %v4401
    %5577 = vmatpush.bf16.msra.mxu0 %v4393
    %5578 = vmatpush.bf16.msra.mxu0 %v4385
    %5579 = vmatpush.bf16.msra.mxu0 %v4377
    %5580 = vmatpush.bf16.msra.mxu0 %v4369
    %5581 = vmatpush.bf16.msra.mxu0 %v4361
    %5582 = vmatpush.bf16.msra.mxu0 %v4353
    %5583 = vmatpush.bf16.msra.mxu0 %v4345
    %5584 = vmatmul.bf16.gmra.mxu0 %v2142
    %v5585 = vpop.f32.mrf.mxu0
    %v5586 = vadd.f32 %v5573, %v5585
    %v5587 = vpop.f32.mrf.mxu0
    %5588 = vdwg.mxu0
    %5589 = vmatpush.bf16.msra.mxu0 %v4465
    %5590 = vmatpush.bf16.msra.mxu0 %v4457
    %5591 = vmatpush.bf16.msra.mxu0 %v4449
    %5592 = vmatpush.bf16.msra.mxu0 %v4441
    %5593 = vmatpush.bf16.msra.mxu0 %v4433
    %5594 = vmatpush.bf16.msra.mxu0 %v4425
    %5595 = vmatpush.bf16.msra.mxu0 %v4417
    %5596 = vmatpush.bf16.msra.mxu0 %v4409
    %5597 = vmatmul.bf16.gmra.mxu0 %v2143
    %v5598 = vpop.f32.mrf.mxu0
    %v5599 = vadd.f32 %v5586, %v5598
    %v5600 = vpop.f32.mrf.mxu0
    %5601 = vdwg.mxu0
    %5602 = vmatpush.bf16.msra.mxu0 %v4529
    %5603 = vmatpush.bf16.msra.mxu0 %v4521
    %5604 = vmatpush.bf16.msra.mxu0 %v4513
    %5605 = vmatpush.bf16.msra.mxu0 %v4505
    %5606 = vmatpush.bf16.msra.mxu0 %v4497
    %5607 = vmatpush.bf16.msra.mxu0 %v4489
    %5608 = vmatpush.bf16.msra.mxu0 %v4481
    %5609 = vmatpush.bf16.msra.mxu0 %v4473
    %5610 = vmatmul.bf16.gmra.mxu0 %v2144
    %v5611 = vpop.f32.mrf.mxu0
    %v5612 = vadd.f32 %v5599, %v5611
    %v5613 = vpop.f32.mrf.mxu0
    %5614 = vdwg.mxu0
    %5615 = vmatpush.bf16.msra.mxu0 %v4593
    %5616 = vmatpush.bf16.msra.mxu0 %v4585
    %5617 = vmatpush.bf16.msra.mxu0 %v4577
    %5618 = vmatpush.bf16.msra.mxu0 %v4569
    %5619 = vmatpush.bf16.msra.mxu0 %v4561
    %5620 = vmatpush.bf16.msra.mxu0 %v4553
    %5621 = vmatpush.bf16.msra.mxu0 %v4545
    %5622 = vmatpush.bf16.msra.mxu0 %v4537
    %5623 = vmatmul.bf16.gmra.mxu0 %v2145
    %v5624 = vpop.f32.mrf.mxu0
    %v5625 = vadd.f32 %v5612, %v5624
    %v5626 = vpop.f32.mrf.mxu0
    %5627 = vdwg.mxu0
    %5628 = vmatpush.bf16.msra.mxu0 %v4657
    %5629 = vmatpush.bf16.msra.mxu0 %v4649
    %5630 = vmatpush.bf16.msra.mxu0 %v4641
    %5631 = vmatpush.bf16.msra.mxu0 %v4633
    %5632 = vmatpush.bf16.msra.mxu0 %v4625
    %5633 = vmatpush.bf16.msra.mxu0 %v4617
    %5634 = vmatpush.bf16.msra.mxu0 %v4609
    %5635 = vmatpush.bf16.msra.mxu0 %v4601
    %5636 = vmatmul.bf16.gmra.mxu0 %v2146
    %v5637 = vpop.f32.mrf.mxu0
    %v5638 = vadd.f32 %v5625, %v5637
    %v5639 = vpop.f32.mrf.mxu0
    %5640 = vdwg.mxu0
    %5641 = vmatpush.bf16.msra.mxu0 %v4721
    %5642 = vmatpush.bf16.msra.mxu0 %v4713
    %5643 = vmatpush.bf16.msra.mxu0 %v4705
    %5644 = vmatpush.bf16.msra.mxu0 %v4697
    %5645 = vmatpush.bf16.msra.mxu0 %v4689
    %5646 = vmatpush.bf16.msra.mxu0 %v4681
    %5647 = vmatpush.bf16.msra.mxu0 %v4673
    %5648 = vmatpush.bf16.msra.mxu0 %v4665
    %5649 = vmatmul.bf16.gmra.mxu0 %v2147
    %v5650 = vpop.f32.mrf.mxu0
    %v5651 = vadd.f32 %v5638, %v5650
    %v5652 = vpop.f32.mrf.mxu0
    %5653 = vdwg.mxu0
    %5654 = vmatpush.bf16.msra.mxu0 %v4274
    %5655 = vmatpush.bf16.msra.mxu0 %v4266
    %5656 = vmatpush.bf16.msra.mxu0 %v4258
    %5657 = vmatpush.bf16.msra.mxu0 %v4250
    %5658 = vmatpush.bf16.msra.mxu0 %v4242
    %5659 = vmatpush.bf16.msra.mxu0 %v4234
    %5660 = vmatpush.bf16.msra.mxu0 %v4226
    %5661 = vmatpush.bf16.msra.mxu0 %v4218
    %5662 = vmatmul.bf16.gmra.mxu0 %v2140
    %v5663 = vpop.f32.mrf.mxu0
    %v5664 = vadd.f32 %v2666, %v5663
    %v5665 = vpop.f32.mrf.mxu0
    %5666 = vdwg.mxu0
    %5667 = vmatpush.bf16.msra.mxu0 %v4338
    %5668 = vmatpush.bf16.msra.mxu0 %v4330
    %5669 = vmatpush.bf16.msra.mxu0 %v4322
    %5670 = vmatpush.bf16.msra.mxu0 %v4314
    %5671 = vmatpush.bf16.msra.mxu0 %v4306
    %5672 = vmatpush.bf16.msra.mxu0 %v4298
    %5673 = vmatpush.bf16.msra.mxu0 %v4290
    %5674 = vmatpush.bf16.msra.mxu0 %v4282
    %5675 = vmatmul.bf16.gmra.mxu0 %v2141
    %v5676 = vpop.f32.mrf.mxu0
    %v5677 = vadd.f32 %v5664, %v5676
    %v5678 = vpop.f32.mrf.mxu0
    %5679 = vdwg.mxu0
    %5680 = vmatpush.bf16.msra.mxu0 %v4402
    %5681 = vmatpush.bf16.msra.mxu0 %v4394
    %5682 = vmatpush.bf16.msra.mxu0 %v4386
    %5683 = vmatpush.bf16.msra.mxu0 %v4378
    %5684 = vmatpush.bf16.msra.mxu0 %v4370
    %5685 = vmatpush.bf16.msra.mxu0 %v4362
    %5686 = vmatpush.bf16.msra.mxu0 %v4354
    %5687 = vmatpush.bf16.msra.mxu0 %v4346
    %5688 = vmatmul.bf16.gmra.mxu0 %v2142
    %v5689 = vpop.f32.mrf.mxu0
    %v5690 = vadd.f32 %v5677, %v5689
    %v5691 = vpop.f32.mrf.mxu0
    %5692 = vdwg.mxu0
    %5693 = vmatpush.bf16.msra.mxu0 %v4466
    %5694 = vmatpush.bf16.msra.mxu0 %v4458
    %5695 = vmatpush.bf16.msra.mxu0 %v4450
    %5696 = vmatpush.bf16.msra.mxu0 %v4442
    %5697 = vmatpush.bf16.msra.mxu0 %v4434
    %5698 = vmatpush.bf16.msra.mxu0 %v4426
    %5699 = vmatpush.bf16.msra.mxu0 %v4418
    %5700 = vmatpush.bf16.msra.mxu0 %v4410
    %5701 = vmatmul.bf16.gmra.mxu0 %v2143
    %v5702 = vpop.f32.mrf.mxu0
    %v5703 = vadd.f32 %v5690, %v5702
    %v5704 = vpop.f32.mrf.mxu0
    %5705 = vdwg.mxu0
    %5706 = vmatpush.bf16.msra.mxu0 %v4530
    %5707 = vmatpush.bf16.msra.mxu0 %v4522
    %5708 = vmatpush.bf16.msra.mxu0 %v4514
    %5709 = vmatpush.bf16.msra.mxu0 %v4506
    %5710 = vmatpush.bf16.msra.mxu0 %v4498
    %5711 = vmatpush.bf16.msra.mxu0 %v4490
    %5712 = vmatpush.bf16.msra.mxu0 %v4482
    %5713 = vmatpush.bf16.msra.mxu0 %v4474
    %5714 = vmatmul.bf16.gmra.mxu0 %v2144
    %v5715 = vpop.f32.mrf.mxu0
    %v5716 = vadd.f32 %v5703, %v5715
    %v5717 = vpop.f32.mrf.mxu0
    %5718 = vdwg.mxu0
    %5719 = vmatpush.bf16.msra.mxu0 %v4594
    %5720 = vmatpush.bf16.msra.mxu0 %v4586
    %5721 = vmatpush.bf16.msra.mxu0 %v4578
    %5722 = vmatpush.bf16.msra.mxu0 %v4570
    %5723 = vmatpush.bf16.msra.mxu0 %v4562
    %5724 = vmatpush.bf16.msra.mxu0 %v4554
    %5725 = vmatpush.bf16.msra.mxu0 %v4546
    %5726 = vmatpush.bf16.msra.mxu0 %v4538
    %5727 = vmatmul.bf16.gmra.mxu0 %v2145
    %v5728 = vpop.f32.mrf.mxu0
    %v5729 = vadd.f32 %v5716, %v5728
    %v5730 = vpop.f32.mrf.mxu0
    %5731 = vdwg.mxu0
    %5732 = vmatpush.bf16.msra.mxu0 %v4658
    %5733 = vmatpush.bf16.msra.mxu0 %v4650
    %5734 = vmatpush.bf16.msra.mxu0 %v4642
    %5735 = vmatpush.bf16.msra.mxu0 %v4634
    %5736 = vmatpush.bf16.msra.mxu0 %v4626
    %5737 = vmatpush.bf16.msra.mxu0 %v4618
    %5738 = vmatpush.bf16.msra.mxu0 %v4610
    %5739 = vmatpush.bf16.msra.mxu0 %v4602
    %5740 = vmatmul.bf16.gmra.mxu0 %v2146
    %v5741 = vpop.f32.mrf.mxu0
    %v5742 = vadd.f32 %v5729, %v5741
    %v5743 = vpop.f32.mrf.mxu0
    %5744 = vdwg.mxu0
    %5745 = vmatpush.bf16.msra.mxu0 %v4722
    %5746 = vmatpush.bf16.msra.mxu0 %v4714
    %5747 = vmatpush.bf16.msra.mxu0 %v4706
    %5748 = vmatpush.bf16.msra.mxu0 %v4698
    %5749 = vmatpush.bf16.msra.mxu0 %v4690
    %5750 = vmatpush.bf16.msra.mxu0 %v4682
    %5751 = vmatpush.bf16.msra.mxu0 %v4674
    %5752 = vmatpush.bf16.msra.mxu0 %v4666
    %5753 = vmatmul.bf16.gmra.mxu0 %v2147
    %v5754 = vpop.f32.mrf.mxu0
    %v5755 = vadd.f32 %v5742, %v5754
    %v5756 = vpop.f32.mrf.mxu0
    %5757 = vdwg.mxu0
    %5758 = vmatpush.bf16.msra.mxu0 %v4275
    %5759 = vmatpush.bf16.msra.mxu0 %v4267
    %5760 = vmatpush.bf16.msra.mxu0 %v4259
    %5761 = vmatpush.bf16.msra.mxu0 %v4251
    %5762 = vmatpush.bf16.msra.mxu0 %v4243
    %5763 = vmatpush.bf16.msra.mxu0 %v4235
    %5764 = vmatpush.bf16.msra.mxu0 %v4227
    %5765 = vmatpush.bf16.msra.mxu0 %v4219
    %5766 = vmatmul.bf16.gmra.mxu0 %v2140
    %v5767 = vpop.f32.mrf.mxu0
    %v5768 = vadd.f32 %v2667, %v5767
    %v5769 = vpop.f32.mrf.mxu0
    %5770 = vdwg.mxu0
    %5771 = vmatpush.bf16.msra.mxu0 %v4339
    %5772 = vmatpush.bf16.msra.mxu0 %v4331
    %5773 = vmatpush.bf16.msra.mxu0 %v4323
    %5774 = vmatpush.bf16.msra.mxu0 %v4315
    %5775 = vmatpush.bf16.msra.mxu0 %v4307
    %5776 = vmatpush.bf16.msra.mxu0 %v4299
    %5777 = vmatpush.bf16.msra.mxu0 %v4291
    %5778 = vmatpush.bf16.msra.mxu0 %v4283
    %5779 = vmatmul.bf16.gmra.mxu0 %v2141
    %v5780 = vpop.f32.mrf.mxu0
    %v5781 = vadd.f32 %v5768, %v5780
    %v5782 = vpop.f32.mrf.mxu0
    %5783 = vdwg.mxu0
    %5784 = vmatpush.bf16.msra.mxu0 %v4403
    %5785 = vmatpush.bf16.msra.mxu0 %v4395
    %5786 = vmatpush.bf16.msra.mxu0 %v4387
    %5787 = vmatpush.bf16.msra.mxu0 %v4379
    %5788 = vmatpush.bf16.msra.mxu0 %v4371
    %5789 = vmatpush.bf16.msra.mxu0 %v4363
    %5790 = vmatpush.bf16.msra.mxu0 %v4355
    %5791 = vmatpush.bf16.msra.mxu0 %v4347
    %5792 = vmatmul.bf16.gmra.mxu0 %v2142
    %v5793 = vpop.f32.mrf.mxu0
    %v5794 = vadd.f32 %v5781, %v5793
    %v5795 = vpop.f32.mrf.mxu0
    %5796 = vdwg.mxu0
    %5797 = vmatpush.bf16.msra.mxu0 %v4467
    %5798 = vmatpush.bf16.msra.mxu0 %v4459
    %5799 = vmatpush.bf16.msra.mxu0 %v4451
    %5800 = vmatpush.bf16.msra.mxu0 %v4443
    %5801 = vmatpush.bf16.msra.mxu0 %v4435
    %5802 = vmatpush.bf16.msra.mxu0 %v4427
    %5803 = vmatpush.bf16.msra.mxu0 %v4419
    %5804 = vmatpush.bf16.msra.mxu0 %v4411
    %5805 = vmatmul.bf16.gmra.mxu0 %v2143
    %v5806 = vpop.f32.mrf.mxu0
    %v5807 = vadd.f32 %v5794, %v5806
    %v5808 = vpop.f32.mrf.mxu0
    %5809 = vdwg.mxu0
    %5810 = vmatpush.bf16.msra.mxu0 %v4531
    %5811 = vmatpush.bf16.msra.mxu0 %v4523
    %5812 = vmatpush.bf16.msra.mxu0 %v4515
    %5813 = vmatpush.bf16.msra.mxu0 %v4507
    %5814 = vmatpush.bf16.msra.mxu0 %v4499
    %5815 = vmatpush.bf16.msra.mxu0 %v4491
    %5816 = vmatpush.bf16.msra.mxu0 %v4483
    %5817 = vmatpush.bf16.msra.mxu0 %v4475
    %5818 = vmatmul.bf16.gmra.mxu0 %v2144
    %v5819 = vpop.f32.mrf.mxu0
    %v5820 = vadd.f32 %v5807, %v5819
    %v5821 = vpop.f32.mrf.mxu0
    %5822 = vdwg.mxu0
    %5823 = vmatpush.bf16.msra.mxu0 %v4595
    %5824 = vmatpush.bf16.msra.mxu0 %v4587
    %5825 = vmatpush.bf16.msra.mxu0 %v4579
    %5826 = vmatpush.bf16.msra.mxu0 %v4571
    %5827 = vmatpush.bf16.msra.mxu0 %v4563
    %5828 = vmatpush.bf16.msra.mxu0 %v4555
    %5829 = vmatpush.bf16.msra.mxu0 %v4547
    %5830 = vmatpush.bf16.msra.mxu0 %v4539
    %5831 = vmatmul.bf16.gmra.mxu0 %v2145
    %v5832 = vpop.f32.mrf.mxu0
    %v5833 = vadd.f32 %v5820, %v5832
    %v5834 = vpop.f32.mrf.mxu0
    %5835 = vdwg.mxu0
    %5836 = vmatpush.bf16.msra.mxu0 %v4659
    %5837 = vmatpush.bf16.msra.mxu0 %v4651
    %5838 = vmatpush.bf16.msra.mxu0 %v4643
    %5839 = vmatpush.bf16.msra.mxu0 %v4635
    %5840 = vmatpush.bf16.msra.mxu0 %v4627
    %5841 = vmatpush.bf16.msra.mxu0 %v4619
    %5842 = vmatpush.bf16.msra.mxu0 %v4611
    %5843 = vmatpush.bf16.msra.mxu0 %v4603
    %5844 = vmatmul.bf16.gmra.mxu0 %v2146
    %v5845 = vpop.f32.mrf.mxu0
    %v5846 = vadd.f32 %v5833, %v5845
    %v5847 = vpop.f32.mrf.mxu0
    %5848 = vdwg.mxu0
    %5849 = vmatpush.bf16.msra.mxu0 %v4723
    %5850 = vmatpush.bf16.msra.mxu0 %v4715
    %5851 = vmatpush.bf16.msra.mxu0 %v4707
    %5852 = vmatpush.bf16.msra.mxu0 %v4699
    %5853 = vmatpush.bf16.msra.mxu0 %v4691
    %5854 = vmatpush.bf16.msra.mxu0 %v4683
    %5855 = vmatpush.bf16.msra.mxu0 %v4675
    %5856 = vmatpush.bf16.msra.mxu0 %v4667
    %5857 = vmatmul.bf16.gmra.mxu0 %v2147
    %v5858 = vpop.f32.mrf.mxu0
    %v5859 = vadd.f32 %v5846, %v5858
    %v5860 = vpop.f32.mrf.mxu0
    %5861 = vdwg.mxu0
    %5862 = vmatpush.bf16.msra.mxu0 %v4276
    %5863 = vmatpush.bf16.msra.mxu0 %v4268
    %5864 = vmatpush.bf16.msra.mxu0 %v4260
    %5865 = vmatpush.bf16.msra.mxu0 %v4252
    %5866 = vmatpush.bf16.msra.mxu0 %v4244
    %5867 = vmatpush.bf16.msra.mxu0 %v4236
    %5868 = vmatpush.bf16.msra.mxu0 %v4228
    %5869 = vmatpush.bf16.msra.mxu0 %v4220
    %5870 = vmatmul.bf16.gmra.mxu0 %v2140
    %v5871 = vpop.f32.mrf.mxu0
    %v5872 = vadd.f32 %v2668, %v5871
    %v5873 = vpop.f32.mrf.mxu0
    %5874 = vdwg.mxu0
    %5875 = vmatpush.bf16.msra.mxu0 %v4340
    %5876 = vmatpush.bf16.msra.mxu0 %v4332
    %5877 = vmatpush.bf16.msra.mxu0 %v4324
    %5878 = vmatpush.bf16.msra.mxu0 %v4316
    %5879 = vmatpush.bf16.msra.mxu0 %v4308
    %5880 = vmatpush.bf16.msra.mxu0 %v4300
    %5881 = vmatpush.bf16.msra.mxu0 %v4292
    %5882 = vmatpush.bf16.msra.mxu0 %v4284
    %5883 = vmatmul.bf16.gmra.mxu0 %v2141
    %v5884 = vpop.f32.mrf.mxu0
    %v5885 = vadd.f32 %v5872, %v5884
    %v5886 = vpop.f32.mrf.mxu0
    %5887 = vdwg.mxu0
    %5888 = vmatpush.bf16.msra.mxu0 %v4404
    %5889 = vmatpush.bf16.msra.mxu0 %v4396
    %5890 = vmatpush.bf16.msra.mxu0 %v4388
    %5891 = vmatpush.bf16.msra.mxu0 %v4380
    %5892 = vmatpush.bf16.msra.mxu0 %v4372
    %5893 = vmatpush.bf16.msra.mxu0 %v4364
    %5894 = vmatpush.bf16.msra.mxu0 %v4356
    %5895 = vmatpush.bf16.msra.mxu0 %v4348
    %5896 = vmatmul.bf16.gmra.mxu0 %v2142
    %v5897 = vpop.f32.mrf.mxu0
    %v5898 = vadd.f32 %v5885, %v5897
    %v5899 = vpop.f32.mrf.mxu0
    %5900 = vdwg.mxu0
    %5901 = vmatpush.bf16.msra.mxu0 %v4468
    %5902 = vmatpush.bf16.msra.mxu0 %v4460
    %5903 = vmatpush.bf16.msra.mxu0 %v4452
    %5904 = vmatpush.bf16.msra.mxu0 %v4444
    %5905 = vmatpush.bf16.msra.mxu0 %v4436
    %5906 = vmatpush.bf16.msra.mxu0 %v4428
    %5907 = vmatpush.bf16.msra.mxu0 %v4420
    %5908 = vmatpush.bf16.msra.mxu0 %v4412
    %5909 = vmatmul.bf16.gmra.mxu0 %v2143
    %v5910 = vpop.f32.mrf.mxu0
    %v5911 = vadd.f32 %v5898, %v5910
    %v5912 = vpop.f32.mrf.mxu0
    %5913 = vdwg.mxu0
    %5914 = vmatpush.bf16.msra.mxu0 %v4532
    %5915 = vmatpush.bf16.msra.mxu0 %v4524
    %5916 = vmatpush.bf16.msra.mxu0 %v4516
    %5917 = vmatpush.bf16.msra.mxu0 %v4508
    %5918 = vmatpush.bf16.msra.mxu0 %v4500
    %5919 = vmatpush.bf16.msra.mxu0 %v4492
    %5920 = vmatpush.bf16.msra.mxu0 %v4484
    %5921 = vmatpush.bf16.msra.mxu0 %v4476
    %5922 = vmatmul.bf16.gmra.mxu0 %v2144
    %v5923 = vpop.f32.mrf.mxu0
    %v5924 = vadd.f32 %v5911, %v5923
    %v5925 = vpop.f32.mrf.mxu0
    %5926 = vdwg.mxu0
    %5927 = vmatpush.bf16.msra.mxu0 %v4596
    %5928 = vmatpush.bf16.msra.mxu0 %v4588
    %5929 = vmatpush.bf16.msra.mxu0 %v4580
    %5930 = vmatpush.bf16.msra.mxu0 %v4572
    %5931 = vmatpush.bf16.msra.mxu0 %v4564
    %5932 = vmatpush.bf16.msra.mxu0 %v4556
    %5933 = vmatpush.bf16.msra.mxu0 %v4548
    %5934 = vmatpush.bf16.msra.mxu0 %v4540
    %5935 = vmatmul.bf16.gmra.mxu0 %v2145
    %v5936 = vpop.f32.mrf.mxu0
    %v5937 = vadd.f32 %v5924, %v5936
    %v5938 = vpop.f32.mrf.mxu0
    %5939 = vdwg.mxu0
    %5940 = vmatpush.bf16.msra.mxu0 %v4660
    %5941 = vmatpush.bf16.msra.mxu0 %v4652
    %5942 = vmatpush.bf16.msra.mxu0 %v4644
    %5943 = vmatpush.bf16.msra.mxu0 %v4636
    %5944 = vmatpush.bf16.msra.mxu0 %v4628
    %5945 = vmatpush.bf16.msra.mxu0 %v4620
    %5946 = vmatpush.bf16.msra.mxu0 %v4612
    %5947 = vmatpush.bf16.msra.mxu0 %v4604
    %5948 = vmatmul.bf16.gmra.mxu0 %v2146
    %v5949 = vpop.f32.mrf.mxu0
    %v5950 = vadd.f32 %v5937, %v5949
    %v5951 = vpop.f32.mrf.mxu0
    %5952 = vdwg.mxu0
    %5953 = vmatpush.bf16.msra.mxu0 %v4724
    %5954 = vmatpush.bf16.msra.mxu0 %v4716
    %5955 = vmatpush.bf16.msra.mxu0 %v4708
    %5956 = vmatpush.bf16.msra.mxu0 %v4700
    %5957 = vmatpush.bf16.msra.mxu0 %v4692
    %5958 = vmatpush.bf16.msra.mxu0 %v4684
    %5959 = vmatpush.bf16.msra.mxu0 %v4676
    %5960 = vmatpush.bf16.msra.mxu0 %v4668
    %5961 = vmatmul.bf16.gmra.mxu0 %v2147
    %v5962 = vpop.f32.mrf.mxu0
    %v5963 = vadd.f32 %v5950, %v5962
    %v5964 = vpop.f32.mrf.mxu0
    %5965 = vdwg.mxu0
    %5966 = vmatpush.bf16.msra.mxu0 %v4277
    %5967 = vmatpush.bf16.msra.mxu0 %v4269
    %5968 = vmatpush.bf16.msra.mxu0 %v4261
    %5969 = vmatpush.bf16.msra.mxu0 %v4253
    %5970 = vmatpush.bf16.msra.mxu0 %v4245
    %5971 = vmatpush.bf16.msra.mxu0 %v4237
    %5972 = vmatpush.bf16.msra.mxu0 %v4229
    %5973 = vmatpush.bf16.msra.mxu0 %v4221
    %5974 = vmatmul.bf16.gmra.mxu0 %v2140
    %v5975 = vpop.f32.mrf.mxu0
    %v5976 = vadd.f32 %v2669, %v5975
    %v5977 = vpop.f32.mrf.mxu0
    %5978 = vdwg.mxu0
    %5979 = vmatpush.bf16.msra.mxu0 %v4341
    %5980 = vmatpush.bf16.msra.mxu0 %v4333
    %5981 = vmatpush.bf16.msra.mxu0 %v4325
    %5982 = vmatpush.bf16.msra.mxu0 %v4317
    %5983 = vmatpush.bf16.msra.mxu0 %v4309
    %5984 = vmatpush.bf16.msra.mxu0 %v4301
    %5985 = vmatpush.bf16.msra.mxu0 %v4293
    %5986 = vmatpush.bf16.msra.mxu0 %v4285
    %5987 = vmatmul.bf16.gmra.mxu0 %v2141
    %v5988 = vpop.f32.mrf.mxu0
    %v5989 = vadd.f32 %v5976, %v5988
    %v5990 = vpop.f32.mrf.mxu0
    %5991 = vdwg.mxu0
    %5992 = vmatpush.bf16.msra.mxu0 %v4405
    %5993 = vmatpush.bf16.msra.mxu0 %v4397
    %5994 = vmatpush.bf16.msra.mxu0 %v4389
    %5995 = vmatpush.bf16.msra.mxu0 %v4381
    %5996 = vmatpush.bf16.msra.mxu0 %v4373
    %5997 = vmatpush.bf16.msra.mxu0 %v4365
    %5998 = vmatpush.bf16.msra.mxu0 %v4357
    %5999 = vmatpush.bf16.msra.mxu0 %v4349
    %6000 = vmatmul.bf16.gmra.mxu0 %v2142
    %v6001 = vpop.f32.mrf.mxu0
    %v6002 = vadd.f32 %v5989, %v6001
    %v6003 = vpop.f32.mrf.mxu0
    %6004 = vdwg.mxu0
    %6005 = vmatpush.bf16.msra.mxu0 %v4469
    %6006 = vmatpush.bf16.msra.mxu0 %v4461
    %6007 = vmatpush.bf16.msra.mxu0 %v4453
    %6008 = vmatpush.bf16.msra.mxu0 %v4445
    %6009 = vmatpush.bf16.msra.mxu0 %v4437
    %6010 = vmatpush.bf16.msra.mxu0 %v4429
    %6011 = vmatpush.bf16.msra.mxu0 %v4421
    %6012 = vmatpush.bf16.msra.mxu0 %v4413
    %6013 = vmatmul.bf16.gmra.mxu0 %v2143
    %v6014 = vpop.f32.mrf.mxu0
    %v6015 = vadd.f32 %v6002, %v6014
    %v6016 = vpop.f32.mrf.mxu0
    %6017 = vdwg.mxu0
    %6018 = vmatpush.bf16.msra.mxu0 %v4533
    %6019 = vmatpush.bf16.msra.mxu0 %v4525
    %6020 = vmatpush.bf16.msra.mxu0 %v4517
    %6021 = vmatpush.bf16.msra.mxu0 %v4509
    %6022 = vmatpush.bf16.msra.mxu0 %v4501
    %6023 = vmatpush.bf16.msra.mxu0 %v4493
    %6024 = vmatpush.bf16.msra.mxu0 %v4485
    %6025 = vmatpush.bf16.msra.mxu0 %v4477
    %6026 = vmatmul.bf16.gmra.mxu0 %v2144
    %v6027 = vpop.f32.mrf.mxu0
    %v6028 = vadd.f32 %v6015, %v6027
    %v6029 = vpop.f32.mrf.mxu0
    %6030 = vdwg.mxu0
    %6031 = vmatpush.bf16.msra.mxu0 %v4597
    %6032 = vmatpush.bf16.msra.mxu0 %v4589
    %6033 = vmatpush.bf16.msra.mxu0 %v4581
    %6034 = vmatpush.bf16.msra.mxu0 %v4573
    %6035 = vmatpush.bf16.msra.mxu0 %v4565
    %6036 = vmatpush.bf16.msra.mxu0 %v4557
    %6037 = vmatpush.bf16.msra.mxu0 %v4549
    %6038 = vmatpush.bf16.msra.mxu0 %v4541
    %6039 = vmatmul.bf16.gmra.mxu0 %v2145
    %v6040 = vpop.f32.mrf.mxu0
    %v6041 = vadd.f32 %v6028, %v6040
    %v6042 = vpop.f32.mrf.mxu0
    %6043 = vdwg.mxu0
    %6044 = vmatpush.bf16.msra.mxu0 %v4661
    %6045 = vmatpush.bf16.msra.mxu0 %v4653
    %6046 = vmatpush.bf16.msra.mxu0 %v4645
    %6047 = vmatpush.bf16.msra.mxu0 %v4637
    %6048 = vmatpush.bf16.msra.mxu0 %v4629
    %6049 = vmatpush.bf16.msra.mxu0 %v4621
    %6050 = vmatpush.bf16.msra.mxu0 %v4613
    %6051 = vmatpush.bf16.msra.mxu0 %v4605
    %6052 = vmatmul.bf16.gmra.mxu0 %v2146
    %v6053 = vpop.f32.mrf.mxu0
    %v6054 = vadd.f32 %v6041, %v6053
    %v6055 = vpop.f32.mrf.mxu0
    %6056 = vdwg.mxu0
    %6057 = vmatpush.bf16.msra.mxu0 %v4725
    %6058 = vmatpush.bf16.msra.mxu0 %v4717
    %6059 = vmatpush.bf16.msra.mxu0 %v4709
    %6060 = vmatpush.bf16.msra.mxu0 %v4701
    %6061 = vmatpush.bf16.msra.mxu0 %v4693
    %6062 = vmatpush.bf16.msra.mxu0 %v4685
    %6063 = vmatpush.bf16.msra.mxu0 %v4677
    %6064 = vmatpush.bf16.msra.mxu0 %v4669
    %6065 = vmatmul.bf16.gmra.mxu0 %v2147
    %v6066 = vpop.f32.mrf.mxu0
    %v6067 = vadd.f32 %v6054, %v6066
    %v6068 = vpop.f32.mrf.mxu0
    %6069 = vdwg.mxu0
    %v6070 = vtanh.pop %v5339
    %v6071 = vtanh.pop %v5443
    %v6072 = vtanh.pop %v5547
    %v6073 = vtanh.pop %v5651
    %v6074 = vtanh.pop %v5755
    %v6075 = vtanh.pop %v5859
    %v6076 = vtanh.pop %v5963
    %v6077 = vtanh.pop %v6067
    %6078 = vst [vmem:[%s10] sm:$0xff] %v6070
    %6079 = vst [vmem:[%s10 + $0x8] sm:$0xff] %v6071
    %6080 = vst [vmem:[%s10 + $0x10] sm:$0xff] %v6072
    %6081 = vst [vmem:[%s10 + $0x18] sm:$0xff] %v6073
    %6082 = vst [vmem:[%s10 + $0x20] sm:$0xff] %v6074
    %6083 = vst [vmem:[%s10 + $0x28] sm:$0xff] %v6075
    %6084 = vst [vmem:[%s10 + $0x30] sm:$0xff] %v6076
    %6085 = vst [vmem:[%s10 + $0x38] sm:$0xff] %v6077
    %v6086 = vld [vmem:[%s1] sm:$0xff]
    %v6087 = vpack.c.bf16 %v6086, %v6086
    %v6088 = vld [vmem:[#allocation9] sm:$0xff]
    %v6089 = vld [vmem:[#allocation9 + $0x8] sm:$0xff]
    %v6090 = vld [vmem:[#allocation9 + $0x10] sm:$0xff]
    %v6091 = vld [vmem:[#allocation9 + $0x18] sm:$0xff]
    %v6092 = vld [vmem:[#allocation9 + $0x20] sm:$0xff]
    %v6093 = vld [vmem:[#allocation9 + $0x28] sm:$0xff]
    %v6094 = vld [vmem:[#allocation9 + $0x30] sm:$0xff]
    %v6095 = vld [vmem:[#allocation9 + $0x38] sm:$0xff]
    %v6096 = vld [vmem:[#allocation9 + $0x40] sm:$0xff]
    %v6097 = vld [vmem:[#allocation9 + $0x48] sm:$0xff]
    %v6098 = vld [vmem:[#allocation9 + $0x50] sm:$0xff]
    %v6099 = vld [vmem:[#allocation9 + $0x58] sm:$0xff]
    %v6100 = vld [vmem:[#allocation9 + $0x60] sm:$0xff]
    %v6101 = vld [vmem:[#allocation9 + $0x68] sm:$0xff]
    %v6102 = vld [vmem:[#allocation9 + $0x70] sm:$0xff]
    %v6103 = vld [vmem:[#allocation9 + $0x78] sm:$0xff]
    %v6104 = vld [vmem:[#allocation9 + $0x80] sm:$0xff]
    %v6105 = vld [vmem:[#allocation9 + $0x88] sm:$0xff]
    %v6106 = vld [vmem:[#allocation9 + $0x90] sm:$0xff]
    %v6107 = vld [vmem:[#allocation9 + $0x98] sm:$0xff]
    %v6108 = vld [vmem:[#allocation9 + $0xa0] sm:$0xff]
    %v6109 = vld [vmem:[#allocation9 + $0xa8] sm:$0xff]
    %v6110 = vld [vmem:[#allocation9 + $0xb0] sm:$0xff]
    %v6111 = vld [vmem:[#allocation9 + $0xb8] sm:$0xff]
    %v6112 = vld [vmem:[#allocation9 + $0xc0] sm:$0xff]
    %v6113 = vld [vmem:[#allocation9 + $0xc8] sm:$0xff]
    %v6114 = vld [vmem:[#allocation9 + $0xd0] sm:$0xff]
    %v6115 = vld [vmem:[#allocation9 + $0xd8] sm:$0xff]
    %v6116 = vld [vmem:[#allocation9 + $0xe0] sm:$0xff]
    %v6117 = vld [vmem:[#allocation9 + $0xe8] sm:$0xff]
    %v6118 = vld [vmem:[#allocation9 + $0xf0] sm:$0xff]
    %v6119 = vld [vmem:[#allocation9 + $0xf8] sm:$0xff]
    %v6120 = vld [vmem:[#allocation10] sm:$0xf]
    %v6122 = vperm.slane %v6120, 0
    %v6123 = vperm.slane %v6120, 1
    %v6124 = vperm.slane %v6120, 2
    %v6125 = vperm.slane %v6120, 3
    %v6162 = vunpack.c.l.b16 %v6088
    %v6163 = vunpack.c.h.b16 %v6088
    %v6164 = vunpack.c.l.b16 %v6089
    %v6165 = vunpack.c.h.b16 %v6089
    %v6166 = vunpack.c.l.b16 %v6090
    %v6167 = vunpack.c.h.b16 %v6090
    %v6168 = vunpack.c.l.b16 %v6091
    %v6169 = vunpack.c.h.b16 %v6091
    %v6170 = vunpack.c.l.b16 %v6092
    %v6171 = vunpack.c.h.b16 %v6092
    %v6172 = vunpack.c.l.b16 %v6093
    %v6173 = vunpack.c.h.b16 %v6093
    %v6174 = vunpack.c.l.b16 %v6094
    %v6175 = vunpack.c.h.b16 %v6094
    %v6176 = vunpack.c.l.b16 %v6095
    %v6177 = vunpack.c.h.b16 %v6095
    %v6178 = vunpack.c.l.b16 %v6096
    %v6179 = vunpack.c.h.b16 %v6096
    %v6180 = vunpack.c.l.b16 %v6097
    %v6181 = vunpack.c.h.b16 %v6097
    %v6182 = vunpack.c.l.b16 %v6098
    %v6183 = vunpack.c.h.b16 %v6098
    %v6184 = vunpack.c.l.b16 %v6099
    %v6185 = vunpack.c.h.b16 %v6099
    %v6186 = vunpack.c.l.b16 %v6100
    %v6187 = vunpack.c.h.b16 %v6100
    %v6188 = vunpack.c.l.b16 %v6101
    %v6189 = vunpack.c.h.b16 %v6101
    %v6190 = vunpack.c.l.b16 %v6102
    %v6191 = vunpack.c.h.b16 %v6102
    %v6192 = vunpack.c.l.b16 %v6103
    %v6193 = vunpack.c.h.b16 %v6103
    %v6194 = vunpack.c.l.b16 %v6104
    %v6195 = vunpack.c.h.b16 %v6104
    %v6196 = vunpack.c.l.b16 %v6105
    %v6197 = vunpack.c.h.b16 %v6105
    %v6198 = vunpack.c.l.b16 %v6106
    %v6199 = vunpack.c.h.b16 %v6106
    %v6200 = vunpack.c.l.b16 %v6107
    %v6201 = vunpack.c.h.b16 %v6107
    %v6202 = vunpack.c.l.b16 %v6108
    %v6203 = vunpack.c.h.b16 %v6108
    %v6204 = vunpack.c.l.b16 %v6109
    %v6205 = vunpack.c.h.b16 %v6109
    %v6206 = vunpack.c.l.b16 %v6110
    %v6207 = vunpack.c.h.b16 %v6110
    %v6208 = vunpack.c.l.b16 %v6111
    %v6209 = vunpack.c.h.b16 %v6111
    %v6210 = vunpack.c.l.b16 %v6112
    %v6211 = vunpack.c.h.b16 %v6112
    %v6212 = vunpack.c.l.b16 %v6113
    %v6213 = vunpack.c.h.b16 %v6113
    %v6214 = vunpack.c.l.b16 %v6114
    %v6215 = vunpack.c.h.b16 %v6114
    %v6216 = vunpack.c.l.b16 %v6115
    %v6217 = vunpack.c.h.b16 %v6115
    %v6218 = vunpack.c.l.b16 %v6116
    %v6219 = vunpack.c.h.b16 %v6116
    %v6220 = vunpack.c.l.b16 %v6117
    %v6221 = vunpack.c.h.b16 %v6117
    %v6222 = vunpack.c.l.b16 %v6118
    %v6223 = vunpack.c.h.b16 %v6118
    %v6224 = vunpack.c.l.b16 %v6119
    %v6225 = vunpack.c.h.b16 %v6119
    %v6226 = vpack.c.b16 %v6166, %v6162
    %v6227 = vpack.c.b16 %v6167, %v6163
    %v6228 = vpack.c.b16 %v6168, %v6164
    %v6229 = vpack.c.b16 %v6169, %v6165
    %v6230 = vpack.c.b16 %v6174, %v6170
    %v6231 = vpack.c.b16 %v6175, %v6171
    %v6232 = vpack.c.b16 %v6176, %v6172
    %v6233 = vpack.c.b16 %v6177, %v6173
    %v6234 = vpack.c.b16 %v6182, %v6178
    %v6235 = vpack.c.b16 %v6183, %v6179
    %v6236 = vpack.c.b16 %v6184, %v6180
    %v6237 = vpack.c.b16 %v6185, %v6181
    %v6238 = vpack.c.b16 %v6190, %v6186
    %v6239 = vpack.c.b16 %v6191, %v6187
    %v6240 = vpack.c.b16 %v6192, %v6188
    %v6241 = vpack.c.b16 %v6193, %v6189
    %v6242 = vpack.c.b16 %v6198, %v6194
    %v6243 = vpack.c.b16 %v6199, %v6195
    %v6244 = vpack.c.b16 %v6200, %v6196
    %v6245 = vpack.c.b16 %v6201, %v6197
    %v6246 = vpack.c.b16 %v6206, %v6202
    %v6247 = vpack.c.b16 %v6207, %v6203
    %v6248 = vpack.c.b16 %v6208, %v6204
    %v6249 = vpack.c.b16 %v6209, %v6205
    %v6250 = vpack.c.b16 %v6214, %v6210
    %v6251 = vpack.c.b16 %v6215, %v6211
    %v6252 = vpack.c.b16 %v6216, %v6212
    %v6253 = vpack.c.b16 %v6217, %v6213
    %v6254 = vpack.c.b16 %v6222, %v6218
    %v6255 = vpack.c.b16 %v6223, %v6219
    %v6256 = vpack.c.b16 %v6224, %v6220
    %v6257 = vpack.c.b16 %v6225, %v6221
    %6290 = vmatpush.bf16.msra.mxu0 %v6254
    %6291 = vmatpush.bf16.msra.mxu0 %v6250
    %6292 = vmatpush.bf16.msra.mxu0 %v6246
    %6293 = vmatpush.bf16.msra.mxu0 %v6242
    %6294 = vmatpush.bf16.msra.mxu0 %v6238
    %6295 = vmatpush.bf16.msra.mxu0 %v6234
    %6296 = vmatpush.bf16.msra.mxu0 %v6230
    %6297 = vmatpush.bf16.msra.mxu0 %v6226
    %6298 = vmatmul.bf16.gmra.mxu0 %v6087
    %v6299 = vpop.f32.mrf.mxu0
    %v6300 = vadd.f32 %v6122, %v6299
    %v6301 = vpop.f32.mrf.mxu0
    %6302 = vdwg.mxu0
    %6303 = vmatpush.bf16.msra.mxu0 %v6255
    %6304 = vmatpush.bf16.msra.mxu0 %v6251
    %6305 = vmatpush.bf16.msra.mxu0 %v6247
    %6306 = vmatpush.bf16.msra.mxu0 %v6243
    %6307 = vmatpush.bf16.msra.mxu0 %v6239
    %6308 = vmatpush.bf16.msra.mxu0 %v6235
    %6309 = vmatpush.bf16.msra.mxu0 %v6231
    %6310 = vmatpush.bf16.msra.mxu0 %v6227
    %6311 = vmatmul.bf16.gmra.mxu0 %v6087
    %v6312 = vpop.f32.mrf.mxu0
    %v6313 = vadd.f32 %v6123, %v6312
    %v6314 = vpop.f32.mrf.mxu0
    %6315 = vdwg.mxu0
    %6316 = vmatpush.bf16.msra.mxu0 %v6256
    %6317 = vmatpush.bf16.msra.mxu0 %v6252
    %6318 = vmatpush.bf16.msra.mxu0 %v6248
    %6319 = vmatpush.bf16.msra.mxu0 %v6244
    %6320 = vmatpush.bf16.msra.mxu0 %v6240
    %6321 = vmatpush.bf16.msra.mxu0 %v6236
    %6322 = vmatpush.bf16.msra.mxu0 %v6232
    %6323 = vmatpush.bf16.msra.mxu0 %v6228
    %6324 = vmatmul.bf16.gmra.mxu0 %v6087
    %v6325 = vpop.f32.mrf.mxu0
    %v6326 = vadd.f32 %v6124, %v6325
    %v6327 = vpop.f32.mrf.mxu0
    %6328 = vdwg.mxu0
    %6329 = vmatpush.bf16.msra.mxu0 %v6257
    %6330 = vmatpush.bf16.msra.mxu0 %v6253
    %6331 = vmatpush.bf16.msra.mxu0 %v6249
    %6332 = vmatpush.bf16.msra.mxu0 %v6245
    %6333 = vmatpush.bf16.msra.mxu0 %v6241
    %6334 = vmatpush.bf16.msra.mxu0 %v6237
    %6335 = vmatpush.bf16.msra.mxu0 %v6233
    %6336 = vmatpush.bf16.msra.mxu0 %v6229
    %6337 = vmatmul.bf16.gmra.mxu0 %v6087
    %v6338 = vpop.f32.mrf.mxu0
    %v6339 = vadd.f32 %v6125, %v6338
    %v6340 = vpop.f32.mrf.mxu0
    %6341 = vdwg.mxu0
    %v6342 = vmax.f32 %v6300, 0.0
    %v6343 = vmax.f32 %v6313, 0.0
    %v6344 = vmax.f32 %v6326, 0.0
    %v6345 = vmax.f32 %v6339, 0.0
    %v6346 = vpack.c.bf16 %v6342, %v6342
    %v6347 = vpack.c.bf16 %v6343, %v6343
    %v6348 = vpack.c.bf16 %v6344, %v6344
    %v6349 = vpack.c.bf16 %v6345, %v6345
    %v6350 = vld [vmem:[#allocation12] sm:$0xff]
    %v6351 = vld [vmem:[#allocation12 + $0x8] sm:$0xff]
    %v6352 = vld [vmem:[#allocation12 + $0x10] sm:$0xff]
    %v6353 = vld [vmem:[#allocation12 + $0x18] sm:$0xff]
    %v6354 = vld [vmem:[#allocation12 + $0x20] sm:$0xff]
    %v6355 = vld [vmem:[#allocation12 + $0x28] sm:$0xff]
    %v6356 = vld [vmem:[#allocation12 + $0x30] sm:$0xff]
    %v6357 = vld [vmem:[#allocation12 + $0x38] sm:$0xff]
    %v6358 = vld [vmem:[#allocation12 + $0x40] sm:$0xff]
    %v6359 = vld [vmem:[#allocation12 + $0x48] sm:$0xff]
    %v6360 = vld [vmem:[#allocation12 + $0x50] sm:$0xff]
    %v6361 = vld [vmem:[#allocation12 + $0x58] sm:$0xff]
    %v6362 = vld [vmem:[#allocation12 + $0x60] sm:$0xff]
    %v6363 = vld [vmem:[#allocation12 + $0x68] sm:$0xff]
    %v6364 = vld [vmem:[#allocation12 + $0x70] sm:$0xff]
    %v6365 = vld [vmem:[#allocation12 + $0x78] sm:$0xff]
    %v6366 = vld [vmem:[#allocation12 + $0x80] sm:$0xff]
    %v6367 = vld [vmem:[#allocation12 + $0x88] sm:$0xff]
    %v6368 = vld [vmem:[#allocation12 + $0x90] sm:$0xff]
    %v6369 = vld [vmem:[#allocation12 + $0x98] sm:$0xff]
    %v6370 = vld [vmem:[#allocation12 + $0xa0] sm:$0xff]
    %v6371 = vld [vmem:[#allocation12 + $0xa8] sm:$0xff]
    %v6372 = vld [vmem:[#allocation12 + $0xb0] sm:$0xff]
    %v6373 = vld [vmem:[#allocation12 + $0xb8] sm:$0xff]
    %v6374 = vld [vmem:[#allocation12 + $0xc0] sm:$0xff]
    %v6375 = vld [vmem:[#allocation12 + $0xc8] sm:$0xff]
    %v6376 = vld [vmem:[#allocation12 + $0xd0] sm:$0xff]
    %v6377 = vld [vmem:[#allocation12 + $0xd8] sm:$0xff]
    %v6378 = vld [vmem:[#allocation12 + $0xe0] sm:$0xff]
    %v6379 = vld [vmem:[#allocation12 + $0xe8] sm:$0xff]
    %v6380 = vld [vmem:[#allocation12 + $0xf0] sm:$0xff]
    %v6381 = vld [vmem:[#allocation12 + $0xf8] sm:$0xff]
    %v6382 = vld [vmem:[#allocation12 + $0x100] sm:$0xff]
    %v6383 = vld [vmem:[#allocation12 + $0x108] sm:$0xff]
    %v6384 = vld [vmem:[#allocation12 + $0x110] sm:$0xff]
    %v6385 = vld [vmem:[#allocation12 + $0x118] sm:$0xff]
    %v6386 = vld [vmem:[#allocation12 + $0x120] sm:$0xff]
    %v6387 = vld [vmem:[#allocation12 + $0x128] sm:$0xff]
    %v6388 = vld [vmem:[#allocation12 + $0x130] sm:$0xff]
    %v6389 = vld [vmem:[#allocation12 + $0x138] sm:$0xff]
    %v6390 = vld [vmem:[#allocation12 + $0x140] sm:$0xff]
    %v6391 = vld [vmem:[#allocation12 + $0x148] sm:$0xff]
    %v6392 = vld [vmem:[#allocation12 + $0x150] sm:$0xff]
    %v6393 = vld [vmem:[#allocation12 + $0x158] sm:$0xff]
    %v6394 = vld [vmem:[#allocation12 + $0x160] sm:$0xff]
    %v6395 = vld [vmem:[#allocation12 + $0x168] sm:$0xff]
    %v6396 = vld [vmem:[#allocation12 + $0x170] sm:$0xff]
    %v6397 = vld [vmem:[#allocation12 + $0x178] sm:$0xff]
    %v6398 = vld [vmem:[#allocation12 + $0x180] sm:$0xff]
    %v6399 = vld [vmem:[#allocation12 + $0x188] sm:$0xff]
    %v6400 = vld [vmem:[#allocation12 + $0x190] sm:$0xff]
    %v6401 = vld [vmem:[#allocation12 + $0x198] sm:$0xff]
    %v6402 = vld [vmem:[#allocation12 + $0x1a0] sm:$0xff]
    %v6403 = vld [vmem:[#allocation12 + $0x1a8] sm:$0xff]
    %v6404 = vld [vmem:[#allocation12 + $0x1b0] sm:$0xff]
    %v6405 = vld [vmem:[#allocation12 + $0x1b8] sm:$0xff]
    %v6406 = vld [vmem:[#allocation12 + $0x1c0] sm:$0xff]
    %v6407 = vld [vmem:[#allocation12 + $0x1c8] sm:$0xff]
    %v6408 = vld [vmem:[#allocation12 + $0x1d0] sm:$0xff]
    %v6409 = vld [vmem:[#allocation12 + $0x1d8] sm:$0xff]
    %v6410 = vld [vmem:[#allocation12 + $0x1e0] sm:$0xff]
    %v6411 = vld [vmem:[#allocation12 + $0x1e8] sm:$0xff]
    %v6412 = vld [vmem:[#allocation12 + $0x1f0] sm:$0xff]
    %v6413 = vld [vmem:[#allocation12 + $0x1f8] sm:$0xff]
    %v6414 = vld [vmem:[#allocation12 + $0x200] sm:$0xff]
    %v6415 = vld [vmem:[#allocation12 + $0x208] sm:$0xff]
    %v6416 = vld [vmem:[#allocation12 + $0x210] sm:$0xff]
    %v6417 = vld [vmem:[#allocation12 + $0x218] sm:$0xff]
    %v6418 = vld [vmem:[#allocation12 + $0x220] sm:$0xff]
    %v6419 = vld [vmem:[#allocation12 + $0x228] sm:$0xff]
    %v6420 = vld [vmem:[#allocation12 + $0x230] sm:$0xff]
    %v6421 = vld [vmem:[#allocation12 + $0x238] sm:$0xff]
    %v6422 = vld [vmem:[#allocation12 + $0x240] sm:$0xff]
    %v6423 = vld [vmem:[#allocation12 + $0x248] sm:$0xff]
    %v6424 = vld [vmem:[#allocation12 + $0x250] sm:$0xff]
    %v6425 = vld [vmem:[#allocation12 + $0x258] sm:$0xff]
    %v6426 = vld [vmem:[#allocation12 + $0x260] sm:$0xff]
    %v6427 = vld [vmem:[#allocation12 + $0x268] sm:$0xff]
    %v6428 = vld [vmem:[#allocation12 + $0x270] sm:$0xff]
    %v6429 = vld [vmem:[#allocation12 + $0x278] sm:$0xff]
    %v6430 = vld [vmem:[#allocation12 + $0x280] sm:$0xff]
    %v6431 = vld [vmem:[#allocation12 + $0x288] sm:$0xff]
    %v6432 = vld [vmem:[#allocation12 + $0x290] sm:$0xff]
    %v6433 = vld [vmem:[#allocation12 + $0x298] sm:$0xff]
    %v6434 = vld [vmem:[#allocation12 + $0x2a0] sm:$0xff]
    %v6435 = vld [vmem:[#allocation12 + $0x2a8] sm:$0xff]
    %v6436 = vld [vmem:[#allocation12 + $0x2b0] sm:$0xff]
    %v6437 = vld [vmem:[#allocation12 + $0x2b8] sm:$0xff]
    %v6438 = vld [vmem:[#allocation12 + $0x2c0] sm:$0xff]
    %v6439 = vld [vmem:[#allocation12 + $0x2c8] sm:$0xff]
    %v6440 = vld [vmem:[#allocation12 + $0x2d0] sm:$0xff]
    %v6441 = vld [vmem:[#allocation12 + $0x2d8] sm:$0xff]
    %v6442 = vld [vmem:[#allocation12 + $0x2e0] sm:$0xff]
    %v6443 = vld [vmem:[#allocation12 + $0x2e8] sm:$0xff]
    %v6444 = vld [vmem:[#allocation12 + $0x2f0] sm:$0xff]
    %v6445 = vld [vmem:[#allocation12 + $0x2f8] sm:$0xff]
    %v6446 = vld [vmem:[#allocation12 + $0x300] sm:$0xff]
    %v6447 = vld [vmem:[#allocation12 + $0x308] sm:$0xff]
    %v6448 = vld [vmem:[#allocation12 + $0x310] sm:$0xff]
    %v6449 = vld [vmem:[#allocation12 + $0x318] sm:$0xff]
    %v6450 = vld [vmem:[#allocation12 + $0x320] sm:$0xff]
    %v6451 = vld [vmem:[#allocation12 + $0x328] sm:$0xff]
    %v6452 = vld [vmem:[#allocation12 + $0x330] sm:$0xff]
    %v6453 = vld [vmem:[#allocation12 + $0x338] sm:$0xff]
    %v6454 = vld [vmem:[#allocation12 + $0x340] sm:$0xff]
    %v6455 = vld [vmem:[#allocation12 + $0x348] sm:$0xff]
    %v6456 = vld [vmem:[#allocation12 + $0x350] sm:$0xff]
    %v6457 = vld [vmem:[#allocation12 + $0x358] sm:$0xff]
    %v6458 = vld [vmem:[#allocation12 + $0x360] sm:$0xff]
    %v6459 = vld [vmem:[#allocation12 + $0x368] sm:$0xff]
    %v6460 = vld [vmem:[#allocation12 + $0x370] sm:$0xff]
    %v6461 = vld [vmem:[#allocation12 + $0x378] sm:$0xff]
    %v6462 = vld [vmem:[#allocation12 + $0x380] sm:$0xff]
    %v6463 = vld [vmem:[#allocation12 + $0x388] sm:$0xff]
    %v6464 = vld [vmem:[#allocation12 + $0x390] sm:$0xff]
    %v6465 = vld [vmem:[#allocation12 + $0x398] sm:$0xff]
    %v6466 = vld [vmem:[#allocation12 + $0x3a0] sm:$0xff]
    %v6467 = vld [vmem:[#allocation12 + $0x3a8] sm:$0xff]
    %v6468 = vld [vmem:[#allocation12 + $0x3b0] sm:$0xff]
    %v6469 = vld [vmem:[#allocation12 + $0x3b8] sm:$0xff]
    %v6470 = vld [vmem:[#allocation12 + $0x3c0] sm:$0xff]
    %v6471 = vld [vmem:[#allocation12 + $0x3c8] sm:$0xff]
    %v6472 = vld [vmem:[#allocation12 + $0x3d0] sm:$0xff]
    %v6473 = vld [vmem:[#allocation12 + $0x3d8] sm:$0xff]
    %v6474 = vld [vmem:[#allocation12 + $0x3e0] sm:$0xff]
    %v6475 = vld [vmem:[#allocation12 + $0x3e8] sm:$0xff]
    %v6476 = vld [vmem:[#allocation12 + $0x3f0] sm:$0xff]
    %v6477 = vld [vmem:[#allocation12 + $0x3f8] sm:$0xff]
    %v6478 = vld [vmem:[#allocation13] sm:$0xf]
    %v6480 = vperm.slane %v6478, 0
    %v6481 = vperm.slane %v6478, 1
    %v6482 = vperm.slane %v6478, 2
    %v6483 = vperm.slane %v6478, 3
    %v6616 = vunpack.c.l.b16 %v6350
    %v6617 = vunpack.c.h.b16 %v6350
    %v6618 = vunpack.c.l.b16 %v6351
    %v6619 = vunpack.c.h.b16 %v6351
    %v6620 = vunpack.c.l.b16 %v6352
    %v6621 = vunpack.c.h.b16 %v6352
    %v6622 = vunpack.c.l.b16 %v6353
    %v6623 = vunpack.c.h.b16 %v6353
    %v6624 = vunpack.c.l.b16 %v6354
    %v6625 = vunpack.c.h.b16 %v6354
    %v6626 = vunpack.c.l.b16 %v6355
    %v6627 = vunpack.c.h.b16 %v6355
    %v6628 = vunpack.c.l.b16 %v6356
    %v6629 = vunpack.c.h.b16 %v6356
    %v6630 = vunpack.c.l.b16 %v6357
    %v6631 = vunpack.c.h.b16 %v6357
    %v6632 = vunpack.c.l.b16 %v6358
    %v6633 = vunpack.c.h.b16 %v6358
    %v6634 = vunpack.c.l.b16 %v6359
    %v6635 = vunpack.c.h.b16 %v6359
    %v6636 = vunpack.c.l.b16 %v6360
    %v6637 = vunpack.c.h.b16 %v6360
    %v6638 = vunpack.c.l.b16 %v6361
    %v6639 = vunpack.c.h.b16 %v6361
    %v6640 = vunpack.c.l.b16 %v6362
    %v6641 = vunpack.c.h.b16 %v6362
    %v6642 = vunpack.c.l.b16 %v6363
    %v6643 = vunpack.c.h.b16 %v6363
    %v6644 = vunpack.c.l.b16 %v6364
    %v6645 = vunpack.c.h.b16 %v6364
    %v6646 = vunpack.c.l.b16 %v6365
    %v6647 = vunpack.c.h.b16 %v6365
    %v6648 = vunpack.c.l.b16 %v6366
    %v6649 = vunpack.c.h.b16 %v6366
    %v6650 = vunpack.c.l.b16 %v6367
    %v6651 = vunpack.c.h.b16 %v6367
    %v6652 = vunpack.c.l.b16 %v6368
    %v6653 = vunpack.c.h.b16 %v6368
    %v6654 = vunpack.c.l.b16 %v6369
    %v6655 = vunpack.c.h.b16 %v6369
    %v6656 = vunpack.c.l.b16 %v6370
    %v6657 = vunpack.c.h.b16 %v6370
    %v6658 = vunpack.c.l.b16 %v6371
    %v6659 = vunpack.c.h.b16 %v6371
    %v6660 = vunpack.c.l.b16 %v6372
    %v6661 = vunpack.c.h.b16 %v6372
    %v6662 = vunpack.c.l.b16 %v6373
    %v6663 = vunpack.c.h.b16 %v6373
    %v6664 = vunpack.c.l.b16 %v6374
    %v6665 = vunpack.c.h.b16 %v6374
    %v6666 = vunpack.c.l.b16 %v6375
    %v6667 = vunpack.c.h.b16 %v6375
    %v6668 = vunpack.c.l.b16 %v6376
    %v6669 = vunpack.c.h.b16 %v6376
    %v6670 = vunpack.c.l.b16 %v6377
    %v6671 = vunpack.c.h.b16 %v6377
    %v6672 = vunpack.c.l.b16 %v6378
    %v6673 = vunpack.c.h.b16 %v6378
    %v6674 = vunpack.c.l.b16 %v6379
    %v6675 = vunpack.c.h.b16 %v6379
    %v6676 = vunpack.c.l.b16 %v6380
    %v6677 = vunpack.c.h.b16 %v6380
    %v6678 = vunpack.c.l.b16 %v6381
    %v6679 = vunpack.c.h.b16 %v6381
    %v6680 = vunpack.c.l.b16 %v6382
    %v6681 = vunpack.c.h.b16 %v6382
    %v6682 = vunpack.c.l.b16 %v6383
    %v6683 = vunpack.c.h.b16 %v6383
    %v6684 = vunpack.c.l.b16 %v6384
    %v6685 = vunpack.c.h.b16 %v6384
    %v6686 = vunpack.c.l.b16 %v6385
    %v6687 = vunpack.c.h.b16 %v6385
    %v6688 = vunpack.c.l.b16 %v6386
    %v6689 = vunpack.c.h.b16 %v6386
    %v6690 = vunpack.c.l.b16 %v6387
    %v6691 = vunpack.c.h.b16 %v6387
    %v6692 = vunpack.c.l.b16 %v6388
    %v6693 = vunpack.c.h.b16 %v6388
    %v6694 = vunpack.c.l.b16 %v6389
    %v6695 = vunpack.c.h.b16 %v6389
    %v6696 = vunpack.c.l.b16 %v6390
    %v6697 = vunpack.c.h.b16 %v6390
    %v6698 = vunpack.c.l.b16 %v6391
    %v6699 = vunpack.c.h.b16 %v6391
    %v6700 = vunpack.c.l.b16 %v6392
    %v6701 = vunpack.c.h.b16 %v6392
    %v6702 = vunpack.c.l.b16 %v6393
    %v6703 = vunpack.c.h.b16 %v6393
    %v6704 = vunpack.c.l.b16 %v6394
    %v6705 = vunpack.c.h.b16 %v6394
    %v6706 = vunpack.c.l.b16 %v6395
    %v6707 = vunpack.c.h.b16 %v6395
    %v6708 = vunpack.c.l.b16 %v6396
    %v6709 = vunpack.c.h.b16 %v6396
    %v6710 = vunpack.c.l.b16 %v6397
    %v6711 = vunpack.c.h.b16 %v6397
    %v6712 = vunpack.c.l.b16 %v6398
    %v6713 = vunpack.c.h.b16 %v6398
    %v6714 = vunpack.c.l.b16 %v6399
    %v6715 = vunpack.c.h.b16 %v6399
    %v6716 = vunpack.c.l.b16 %v6400
    %v6717 = vunpack.c.h.b16 %v6400
    %v6718 = vunpack.c.l.b16 %v6401
    %v6719 = vunpack.c.h.b16 %v6401
    %v6720 = vunpack.c.l.b16 %v6402
    %v6721 = vunpack.c.h.b16 %v6402
    %v6722 = vunpack.c.l.b16 %v6403
    %v6723 = vunpack.c.h.b16 %v6403
    %v6724 = vunpack.c.l.b16 %v6404
    %v6725 = vunpack.c.h.b16 %v6404
    %v6726 = vunpack.c.l.b16 %v6405
    %v6727 = vunpack.c.h.b16 %v6405
    %v6728 = vunpack.c.l.b16 %v6406
    %v6729 = vunpack.c.h.b16 %v6406
    %v6730 = vunpack.c.l.b16 %v6407
    %v6731 = vunpack.c.h.b16 %v6407
    %v6732 = vunpack.c.l.b16 %v6408
    %v6733 = vunpack.c.h.b16 %v6408
    %v6734 = vunpack.c.l.b16 %v6409
    %v6735 = vunpack.c.h.b16 %v6409
    %v6736 = vunpack.c.l.b16 %v6410
    %v6737 = vunpack.c.h.b16 %v6410
    %v6738 = vunpack.c.l.b16 %v6411
    %v6739 = vunpack.c.h.b16 %v6411
    %v6740 = vunpack.c.l.b16 %v6412
    %v6741 = vunpack.c.h.b16 %v6412
    %v6742 = vunpack.c.l.b16 %v6413
    %v6743 = vunpack.c.h.b16 %v6413
    %v6744 = vunpack.c.l.b16 %v6414
    %v6745 = vunpack.c.h.b16 %v6414
    %v6746 = vunpack.c.l.b16 %v6415
    %v6747 = vunpack.c.h.b16 %v6415
    %v6748 = vunpack.c.l.b16 %v6416
    %v6749 = vunpack.c.h.b16 %v6416
    %v6750 = vunpack.c.l.b16 %v6417
    %v6751 = vunpack.c.h.b16 %v6417
    %v6752 = vunpack.c.l.b16 %v6418
    %v6753 = vunpack.c.h.b16 %v6418
    %v6754 = vunpack.c.l.b16 %v6419
    %v6755 = vunpack.c.h.b16 %v6419
    %v6756 = vunpack.c.l.b16 %v6420
    %v6757 = vunpack.c.h.b16 %v6420
    %v6758 = vunpack.c.l.b16 %v6421
    %v6759 = vunpack.c.h.b16 %v6421
    %v6760 = vunpack.c.l.b16 %v6422
    %v6761 = vunpack.c.h.b16 %v6422
    %v6762 = vunpack.c.l.b16 %v6423
    %v6763 = vunpack.c.h.b16 %v6423
    %v6764 = vunpack.c.l.b16 %v6424
    %v6765 = vunpack.c.h.b16 %v6424
    %v6766 = vunpack.c.l.b16 %v6425
    %v6767 = vunpack.c.h.b16 %v6425
    %v6768 = vunpack.c.l.b16 %v6426
    %v6769 = vunpack.c.h.b16 %v6426
    %v6770 = vunpack.c.l.b16 %v6427
    %v6771 = vunpack.c.h.b16 %v6427
    %v6772 = vunpack.c.l.b16 %v6428
    %v6773 = vunpack.c.h.b16 %v6428
    %v6774 = vunpack.c.l.b16 %v6429
    %v6775 = vunpack.c.h.b16 %v6429
    %v6776 = vunpack.c.l.b16 %v6430
    %v6777 = vunpack.c.h.b16 %v6430
    %v6778 = vunpack.c.l.b16 %v6431
    %v6779 = vunpack.c.h.b16 %v6431
    %v6780 = vunpack.c.l.b16 %v6432
    %v6781 = vunpack.c.h.b16 %v6432
    %v6782 = vunpack.c.l.b16 %v6433
    %v6783 = vunpack.c.h.b16 %v6433
    %v6784 = vunpack.c.l.b16 %v6434
    %v6785 = vunpack.c.h.b16 %v6434
    %v6786 = vunpack.c.l.b16 %v6435
    %v6787 = vunpack.c.h.b16 %v6435
    %v6788 = vunpack.c.l.b16 %v6436
    %v6789 = vunpack.c.h.b16 %v6436
    %v6790 = vunpack.c.l.b16 %v6437
    %v6791 = vunpack.c.h.b16 %v6437
    %v6792 = vunpack.c.l.b16 %v6438
    %v6793 = vunpack.c.h.b16 %v6438
    %v6794 = vunpack.c.l.b16 %v6439
    %v6795 = vunpack.c.h.b16 %v6439
    %v6796 = vunpack.c.l.b16 %v6440
    %v6797 = vunpack.c.h.b16 %v6440
    %v6798 = vunpack.c.l.b16 %v6441
    %v6799 = vunpack.c.h.b16 %v6441
    %v6800 = vunpack.c.l.b16 %v6442
    %v6801 = vunpack.c.h.b16 %v6442
    %v6802 = vunpack.c.l.b16 %v6443
    %v6803 = vunpack.c.h.b16 %v6443
    %v6804 = vunpack.c.l.b16 %v6444
    %v6805 = vunpack.c.h.b16 %v6444
    %v6806 = vunpack.c.l.b16 %v6445
    %v6807 = vunpack.c.h.b16 %v6445
    %v6808 = vunpack.c.l.b16 %v6446
    %v6809 = vunpack.c.h.b16 %v6446
    %v6810 = vunpack.c.l.b16 %v6447
    %v6811 = vunpack.c.h.b16 %v6447
    %v6812 = vunpack.c.l.b16 %v6448
    %v6813 = vunpack.c.h.b16 %v6448
    %v6814 = vunpack.c.l.b16 %v6449
    %v6815 = vunpack.c.h.b16 %v6449
    %v6816 = vunpack.c.l.b16 %v6450
    %v6817 = vunpack.c.h.b16 %v6450
    %v6818 = vunpack.c.l.b16 %v6451
    %v6819 = vunpack.c.h.b16 %v6451
    %v6820 = vunpack.c.l.b16 %v6452
    %v6821 = vunpack.c.h.b16 %v6452
    %v6822 = vunpack.c.l.b16 %v6453
    %v6823 = vunpack.c.h.b16 %v6453
    %v6824 = vunpack.c.l.b16 %v6454
    %v6825 = vunpack.c.h.b16 %v6454
    %v6826 = vunpack.c.l.b16 %v6455
    %v6827 = vunpack.c.h.b16 %v6455
    %v6828 = vunpack.c.l.b16 %v6456
    %v6829 = vunpack.c.h.b16 %v6456
    %v6830 = vunpack.c.l.b16 %v6457
    %v6831 = vunpack.c.h.b16 %v6457
    %v6832 = vunpack.c.l.b16 %v6458
    %v6833 = vunpack.c.h.b16 %v6458
    %v6834 = vunpack.c.l.b16 %v6459
    %v6835 = vunpack.c.h.b16 %v6459
    %v6836 = vunpack.c.l.b16 %v6460
    %v6837 = vunpack.c.h.b16 %v6460
    %v6838 = vunpack.c.l.b16 %v6461
    %v6839 = vunpack.c.h.b16 %v6461
    %v6840 = vunpack.c.l.b16 %v6462
    %v6841 = vunpack.c.h.b16 %v6462
    %v6842 = vunpack.c.l.b16 %v6463
    %v6843 = vunpack.c.h.b16 %v6463
    %v6844 = vunpack.c.l.b16 %v6464
    %v6845 = vunpack.c.h.b16 %v6464
    %v6846 = vunpack.c.l.b16 %v6465
    %v6847 = vunpack.c.h.b16 %v6465
    %v6848 = vunpack.c.l.b16 %v6466
    %v6849 = vunpack.c.h.b16 %v6466
    %v6850 = vunpack.c.l.b16 %v6467
    %v6851 = vunpack.c.h.b16 %v6467
    %v6852 = vunpack.c.l.b16 %v6468
    %v6853 = vunpack.c.h.b16 %v6468
    %v6854 = vunpack.c.l.b16 %v6469
    %v6855 = vunpack.c.h.b16 %v6469
    %v6856 = vunpack.c.l.b16 %v6470
    %v6857 = vunpack.c.h.b16 %v6470
    %v6858 = vunpack.c.l.b16 %v6471
    %v6859 = vunpack.c.h.b16 %v6471
    %v6860 = vunpack.c.l.b16 %v6472
    %v6861 = vunpack.c.h.b16 %v6472
    %v6862 = vunpack.c.l.b16 %v6473
    %v6863 = vunpack.c.h.b16 %v6473
    %v6864 = vunpack.c.l.b16 %v6474
    %v6865 = vunpack.c.h.b16 %v6474
    %v6866 = vunpack.c.l.b16 %v6475
    %v6867 = vunpack.c.h.b16 %v6475
    %v6868 = vunpack.c.l.b16 %v6476
    %v6869 = vunpack.c.h.b16 %v6476
    %v6870 = vunpack.c.l.b16 %v6477
    %v6871 = vunpack.c.h.b16 %v6477
    %v6872 = vpack.c.b16 %v6620, %v6616
    %v6873 = vpack.c.b16 %v6621, %v6617
    %v6874 = vpack.c.b16 %v6622, %v6618
    %v6875 = vpack.c.b16 %v6623, %v6619
    %v6876 = vpack.c.b16 %v6628, %v6624
    %v6877 = vpack.c.b16 %v6629, %v6625
    %v6878 = vpack.c.b16 %v6630, %v6626
    %v6879 = vpack.c.b16 %v6631, %v6627
    %v6880 = vpack.c.b16 %v6636, %v6632
    %v6881 = vpack.c.b16 %v6637, %v6633
    %v6882 = vpack.c.b16 %v6638, %v6634
    %v6883 = vpack.c.b16 %v6639, %v6635
    %v6884 = vpack.c.b16 %v6644, %v6640
    %v6885 = vpack.c.b16 %v6645, %v6641
    %v6886 = vpack.c.b16 %v6646, %v6642
    %v6887 = vpack.c.b16 %v6647, %v6643
    %v6888 = vpack.c.b16 %v6652, %v6648
    %v6889 = vpack.c.b16 %v6653, %v6649
    %v6890 = vpack.c.b16 %v6654, %v6650
    %v6891 = vpack.c.b16 %v6655, %v6651
    %v6892 = vpack.c.b16 %v6660, %v6656
    %v6893 = vpack.c.b16 %v6661, %v6657
    %v6894 = vpack.c.b16 %v6662, %v6658
    %v6895 = vpack.c.b16 %v6663, %v6659
    %v6896 = vpack.c.b16 %v6668, %v6664
    %v6897 = vpack.c.b16 %v6669, %v6665
    %v6898 = vpack.c.b16 %v6670, %v6666
    %v6899 = vpack.c.b16 %v6671, %v6667
    %v6900 = vpack.c.b16 %v6676, %v6672
    %v6901 = vpack.c.b16 %v6677, %v6673
    %v6902 = vpack.c.b16 %v6678, %v6674
    %v6903 = vpack.c.b16 %v6679, %v6675
    %v6904 = vpack.c.b16 %v6684, %v6680
    %v6905 = vpack.c.b16 %v6685, %v6681
    %v6906 = vpack.c.b16 %v6686, %v6682
    %v6907 = vpack.c.b16 %v6687, %v6683
    %v6908 = vpack.c.b16 %v6692, %v6688
    %v6909 = vpack.c.b16 %v6693, %v6689
    %v6910 = vpack.c.b16 %v6694, %v6690
    %v6911 = vpack.c.b16 %v6695, %v6691
    %v6912 = vpack.c.b16 %v6700, %v6696
    %v6913 = vpack.c.b16 %v6701, %v6697
    %v6914 = vpack.c.b16 %v6702, %v6698
    %v6915 = vpack.c.b16 %v6703, %v6699
    %v6916 = vpack.c.b16 %v6708, %v6704
    %v6917 = vpack.c.b16 %v6709, %v6705
    %v6918 = vpack.c.b16 %v6710, %v6706
    %v6919 = vpack.c.b16 %v6711, %v6707
    %v6920 = vpack.c.b16 %v6716, %v6712
    %v6921 = vpack.c.b16 %v6717, %v6713
    %v6922 = vpack.c.b16 %v6718, %v6714
    %v6923 = vpack.c.b16 %v6719, %v6715
    %v6924 = vpack.c.b16 %v6724, %v6720
    %v6925 = vpack.c.b16 %v6725, %v6721
    %v6926 = vpack.c.b16 %v6726, %v6722
    %v6927 = vpack.c.b16 %v6727, %v6723
    %v6928 = vpack.c.b16 %v6732, %v6728
    %v6929 = vpack.c.b16 %v6733, %v6729
    %v6930 = vpack.c.b16 %v6734, %v6730
    %v6931 = vpack.c.b16 %v6735, %v6731
    %v6932 = vpack.c.b16 %v6740, %v6736
    %v6933 = vpack.c.b16 %v6741, %v6737
    %v6934 = vpack.c.b16 %v6742, %v6738
    %v6935 = vpack.c.b16 %v6743, %v6739
    %v6936 = vpack.c.b16 %v6748, %v6744
    %v6937 = vpack.c.b16 %v6749, %v6745
    %v6938 = vpack.c.b16 %v6750, %v6746
    %v6939 = vpack.c.b16 %v6751, %v6747
    %v6940 = vpack.c.b16 %v6756, %v6752
    %v6941 = vpack.c.b16 %v6757, %v6753
    %v6942 = vpack.c.b16 %v6758, %v6754
    %v6943 = vpack.c.b16 %v6759, %v6755
    %v6944 = vpack.c.b16 %v6764, %v6760
    %v6945 = vpack.c.b16 %v6765, %v6761
    %v6946 = vpack.c.b16 %v6766, %v6762
    %v6947 = vpack.c.b16 %v6767, %v6763
    %v6948 = vpack.c.b16 %v6772, %v6768
    %v6949 = vpack.c.b16 %v6773, %v6769
    %v6950 = vpack.c.b16 %v6774, %v6770
    %v6951 = vpack.c.b16 %v6775, %v6771
    %v6952 = vpack.c.b16 %v6780, %v6776
    %v6953 = vpack.c.b16 %v6781, %v6777
    %v6954 = vpack.c.b16 %v6782, %v6778
    %v6955 = vpack.c.b16 %v6783, %v6779
    %v6956 = vpack.c.b16 %v6788, %v6784
    %v6957 = vpack.c.b16 %v6789, %v6785
    %v6958 = vpack.c.b16 %v6790, %v6786
    %v6959 = vpack.c.b16 %v6791, %v6787
    %v6960 = vpack.c.b16 %v6796, %v6792
    %v6961 = vpack.c.b16 %v6797, %v6793
    %v6962 = vpack.c.b16 %v6798, %v6794
    %v6963 = vpack.c.b16 %v6799, %v6795
    %v6964 = vpack.c.b16 %v6804, %v6800
    %v6965 = vpack.c.b16 %v6805, %v6801
    %v6966 = vpack.c.b16 %v6806, %v6802
    %v6967 = vpack.c.b16 %v6807, %v6803
    %v6968 = vpack.c.b16 %v6812, %v6808
    %v6969 = vpack.c.b16 %v6813, %v6809
    %v6970 = vpack.c.b16 %v6814, %v6810
    %v6971 = vpack.c.b16 %v6815, %v6811
    %v6972 = vpack.c.b16 %v6820, %v6816
    %v6973 = vpack.c.b16 %v6821, %v6817
    %v6974 = vpack.c.b16 %v6822, %v6818
    %v6975 = vpack.c.b16 %v6823, %v6819
    %v6976 = vpack.c.b16 %v6828, %v6824
    %v6977 = vpack.c.b16 %v6829, %v6825
    %v6978 = vpack.c.b16 %v6830, %v6826
    %v6979 = vpack.c.b16 %v6831, %v6827
    %v6980 = vpack.c.b16 %v6836, %v6832
    %v6981 = vpack.c.b16 %v6837, %v6833
    %v6982 = vpack.c.b16 %v6838, %v6834
    %v6983 = vpack.c.b16 %v6839, %v6835
    %v6984 = vpack.c.b16 %v6844, %v6840
    %v6985 = vpack.c.b16 %v6845, %v6841
    %v6986 = vpack.c.b16 %v6846, %v6842
    %v6987 = vpack.c.b16 %v6847, %v6843
    %v6988 = vpack.c.b16 %v6852, %v6848
    %v6989 = vpack.c.b16 %v6853, %v6849
    %v6990 = vpack.c.b16 %v6854, %v6850
    %v6991 = vpack.c.b16 %v6855, %v6851
    %v6992 = vpack.c.b16 %v6860, %v6856
    %v6993 = vpack.c.b16 %v6861, %v6857
    %v6994 = vpack.c.b16 %v6862, %v6858
    %v6995 = vpack.c.b16 %v6863, %v6859
    %v6996 = vpack.c.b16 %v6868, %v6864
    %v6997 = vpack.c.b16 %v6869, %v6865
    %v6998 = vpack.c.b16 %v6870, %v6866
    %v6999 = vpack.c.b16 %v6871, %v6867
    %7128 = vmatpush.bf16.msra.mxu0 %v6900
    %7129 = vmatpush.bf16.msra.mxu0 %v6896
    %7130 = vmatpush.bf16.msra.mxu0 %v6892
    %7131 = vmatpush.bf16.msra.mxu0 %v6888
    %7132 = vmatpush.bf16.msra.mxu0 %v6884
    %7133 = vmatpush.bf16.msra.mxu0 %v6880
    %7134 = vmatpush.bf16.msra.mxu0 %v6876
    %7135 = vmatpush.bf16.msra.mxu0 %v6872
    %7136 = vmatmul.bf16.gmra.mxu0 %v6346
    %v7137 = vpop.f32.mrf.mxu0
    %v7138 = vadd.f32 %v6480, %v7137
    %v7139 = vpop.f32.mrf.mxu0
    %7140 = vdwg.mxu0
    %7141 = vmatpush.bf16.msra.mxu0 %v6932
    %7142 = vmatpush.bf16.msra.mxu0 %v6928
    %7143 = vmatpush.bf16.msra.mxu0 %v6924
    %7144 = vmatpush.bf16.msra.mxu0 %v6920
    %7145 = vmatpush.bf16.msra.mxu0 %v6916
    %7146 = vmatpush.bf16.msra.mxu0 %v6912
    %7147 = vmatpush.bf16.msra.mxu0 %v6908
    %7148 = vmatpush.bf16.msra.mxu0 %v6904
    %7149 = vmatmul.bf16.gmra.mxu0 %v6347
    %v7150 = vpop.f32.mrf.mxu0
    %v7151 = vadd.f32 %v7138, %v7150
    %v7152 = vpop.f32.mrf.mxu0
    %7153 = vdwg.mxu0
    %7154 = vmatpush.bf16.msra.mxu0 %v6964
    %7155 = vmatpush.bf16.msra.mxu0 %v6960
    %7156 = vmatpush.bf16.msra.mxu0 %v6956
    %7157 = vmatpush.bf16.msra.mxu0 %v6952
    %7158 = vmatpush.bf16.msra.mxu0 %v6948
    %7159 = vmatpush.bf16.msra.mxu0 %v6944
    %7160 = vmatpush.bf16.msra.mxu0 %v6940
    %7161 = vmatpush.bf16.msra.mxu0 %v6936
    %7162 = vmatmul.bf16.gmra.mxu0 %v6348
    %v7163 = vpop.f32.mrf.mxu0
    %v7164 = vadd.f32 %v7151, %v7163
    %v7165 = vpop.f32.mrf.mxu0
    %7166 = vdwg.mxu0
    %7167 = vmatpush.bf16.msra.mxu0 %v6996
    %7168 = vmatpush.bf16.msra.mxu0 %v6992
    %7169 = vmatpush.bf16.msra.mxu0 %v6988
    %7170 = vmatpush.bf16.msra.mxu0 %v6984
    %7171 = vmatpush.bf16.msra.mxu0 %v6980
    %7172 = vmatpush.bf16.msra.mxu0 %v6976
    %7173 = vmatpush.bf16.msra.mxu0 %v6972
    %7174 = vmatpush.bf16.msra.mxu0 %v6968
    %7175 = vmatmul.bf16.gmra.mxu0 %v6349
    %v7176 = vpop.f32.mrf.mxu0
    %v7177 = vadd.f32 %v7164, %v7176
    %v7178 = vpop.f32.mrf.mxu0
    %7179 = vdwg.mxu0
    %7180 = vmatpush.bf16.msra.mxu0 %v6901
    %7181 = vmatpush.bf16.msra.mxu0 %v6897
    %7182 = vmatpush.bf16.msra.mxu0 %v6893
    %7183 = vmatpush.bf16.msra.mxu0 %v6889
    %7184 = vmatpush.bf16.msra.mxu0 %v6885
    %7185 = vmatpush.bf16.msra.mxu0 %v6881
    %7186 = vmatpush.bf16.msra.mxu0 %v6877
    %7187 = vmatpush.bf16.msra.mxu0 %v6873
    %7188 = vmatmul.bf16.gmra.mxu0 %v6346
    %v7189 = vpop.f32.mrf.mxu0
    %v7190 = vadd.f32 %v6481, %v7189
    %v7191 = vpop.f32.mrf.mxu0
    %7192 = vdwg.mxu0
    %7193 = vmatpush.bf16.msra.mxu0 %v6933
    %7194 = vmatpush.bf16.msra.mxu0 %v6929
    %7195 = vmatpush.bf16.msra.mxu0 %v6925
    %7196 = vmatpush.bf16.msra.mxu0 %v6921
    %7197 = vmatpush.bf16.msra.mxu0 %v6917
    %7198 = vmatpush.bf16.msra.mxu0 %v6913
    %7199 = vmatpush.bf16.msra.mxu0 %v6909
    %7200 = vmatpush.bf16.msra.mxu0 %v6905
    %7201 = vmatmul.bf16.gmra.mxu0 %v6347
    %v7202 = vpop.f32.mrf.mxu0
    %v7203 = vadd.f32 %v7190, %v7202
    %v7204 = vpop.f32.mrf.mxu0
    %7205 = vdwg.mxu0
    %7206 = vmatpush.bf16.msra.mxu0 %v6965
    %7207 = vmatpush.bf16.msra.mxu0 %v6961
    %7208 = vmatpush.bf16.msra.mxu0 %v6957
    %7209 = vmatpush.bf16.msra.mxu0 %v6953
    %7210 = vmatpush.bf16.msra.mxu0 %v6949
    %7211 = vmatpush.bf16.msra.mxu0 %v6945
    %7212 = vmatpush.bf16.msra.mxu0 %v6941
    %7213 = vmatpush.bf16.msra.mxu0 %v6937
    %7214 = vmatmul.bf16.gmra.mxu0 %v6348
    %v7215 = vpop.f32.mrf.mxu0
    %v7216 = vadd.f32 %v7203, %v7215
    %v7217 = vpop.f32.mrf.mxu0
    %7218 = vdwg.mxu0
    %7219 = vmatpush.bf16.msra.mxu0 %v6997
    %7220 = vmatpush.bf16.msra.mxu0 %v6993
    %7221 = vmatpush.bf16.msra.mxu0 %v6989
    %7222 = vmatpush.bf16.msra.mxu0 %v6985
    %7223 = vmatpush.bf16.msra.mxu0 %v6981
    %7224 = vmatpush.bf16.msra.mxu0 %v6977
    %7225 = vmatpush.bf16.msra.mxu0 %v6973
    %7226 = vmatpush.bf16.msra.mxu0 %v6969
    %7227 = vmatmul.bf16.gmra.mxu0 %v6349
    %v7228 = vpop.f32.mrf.mxu0
    %v7229 = vadd.f32 %v7216, %v7228
    %v7230 = vpop.f32.mrf.mxu0
    %7231 = vdwg.mxu0
    %7232 = vmatpush.bf16.msra.mxu0 %v6902
    %7233 = vmatpush.bf16.msra.mxu0 %v6898
    %7234 = vmatpush.bf16.msra.mxu0 %v6894
    %7235 = vmatpush.bf16.msra.mxu0 %v6890
    %7236 = vmatpush.bf16.msra.mxu0 %v6886
    %7237 = vmatpush.bf16.msra.mxu0 %v6882
    %7238 = vmatpush.bf16.msra.mxu0 %v6878
    %7239 = vmatpush.bf16.msra.mxu0 %v6874
    %7240 = vmatmul.bf16.gmra.mxu0 %v6346
    %v7241 = vpop.f32.mrf.mxu0
    %v7242 = vadd.f32 %v6482, %v7241
    %v7243 = vpop.f32.mrf.mxu0
    %7244 = vdwg.mxu0
    %7245 = vmatpush.bf16.msra.mxu0 %v6934
    %7246 = vmatpush.bf16.msra.mxu0 %v6930
    %7247 = vmatpush.bf16.msra.mxu0 %v6926
    %7248 = vmatpush.bf16.msra.mxu0 %v6922
    %7249 = vmatpush.bf16.msra.mxu0 %v6918
    %7250 = vmatpush.bf16.msra.mxu0 %v6914
    %7251 = vmatpush.bf16.msra.mxu0 %v6910
    %7252 = vmatpush.bf16.msra.mxu0 %v6906
    %7253 = vmatmul.bf16.gmra.mxu0 %v6347
    %v7254 = vpop.f32.mrf.mxu0
    %v7255 = vadd.f32 %v7242, %v7254
    %v7256 = vpop.f32.mrf.mxu0
    %7257 = vdwg.mxu0
    %7258 = vmatpush.bf16.msra.mxu0 %v6966
    %7259 = vmatpush.bf16.msra.mxu0 %v6962
    %7260 = vmatpush.bf16.msra.mxu0 %v6958
    %7261 = vmatpush.bf16.msra.mxu0 %v6954
    %7262 = vmatpush.bf16.msra.mxu0 %v6950
    %7263 = vmatpush.bf16.msra.mxu0 %v6946
    %7264 = vmatpush.bf16.msra.mxu0 %v6942
    %7265 = vmatpush.bf16.msra.mxu0 %v6938
    %7266 = vmatmul.bf16.gmra.mxu0 %v6348
    %v7267 = vpop.f32.mrf.mxu0
    %v7268 = vadd.f32 %v7255, %v7267
    %v7269 = vpop.f32.mrf.mxu0
    %7270 = vdwg.mxu0
    %7271 = vmatpush.bf16.msra.mxu0 %v6998
    %7272 = vmatpush.bf16.msra.mxu0 %v6994
    %7273 = vmatpush.bf16.msra.mxu0 %v6990
    %7274 = vmatpush.bf16.msra.mxu0 %v6986
    %7275 = vmatpush.bf16.msra.mxu0 %v6982
    %7276 = vmatpush.bf16.msra.mxu0 %v6978
    %7277 = vmatpush.bf16.msra.mxu0 %v6974
    %7278 = vmatpush.bf16.msra.mxu0 %v6970
    %7279 = vmatmul.bf16.gmra.mxu0 %v6349
    %v7280 = vpop.f32.mrf.mxu0
    %v7281 = vadd.f32 %v7268, %v7280
    %v7282 = vpop.f32.mrf.mxu0
    %7283 = vdwg.mxu0
    %7284 = vmatpush.bf16.msra.mxu0 %v6903
    %7285 = vmatpush.bf16.msra.mxu0 %v6899
    %7286 = vmatpush.bf16.msra.mxu0 %v6895
    %7287 = vmatpush.bf16.msra.mxu0 %v6891
    %7288 = vmatpush.bf16.msra.mxu0 %v6887
    %7289 = vmatpush.bf16.msra.mxu0 %v6883
    %7290 = vmatpush.bf16.msra.mxu0 %v6879
    %7291 = vmatpush.bf16.msra.mxu0 %v6875
    %7292 = vmatmul.bf16.gmra.mxu0 %v6346
    %v7293 = vpop.f32.mrf.mxu0
    %v7294 = vadd.f32 %v6483, %v7293
    %v7295 = vpop.f32.mrf.mxu0
    %7296 = vdwg.mxu0
    %7297 = vmatpush.bf16.msra.mxu0 %v6935
    %7298 = vmatpush.bf16.msra.mxu0 %v6931
    %7299 = vmatpush.bf16.msra.mxu0 %v6927
    %7300 = vmatpush.bf16.msra.mxu0 %v6923
    %7301 = vmatpush.bf16.msra.mxu0 %v6919
    %7302 = vmatpush.bf16.msra.mxu0 %v6915
    %7303 = vmatpush.bf16.msra.mxu0 %v6911
    %7304 = vmatpush.bf16.msra.mxu0 %v6907
    %7305 = vmatmul.bf16.gmra.mxu0 %v6347
    %v7306 = vpop.f32.mrf.mxu0
    %v7307 = vadd.f32 %v7294, %v7306
    %v7308 = vpop.f32.mrf.mxu0
    %7309 = vdwg.mxu0
    %7310 = vmatpush.bf16.msra.mxu0 %v6967
    %7311 = vmatpush.bf16.msra.mxu0 %v6963
    %7312 = vmatpush.bf16.msra.mxu0 %v6959
    %7313 = vmatpush.bf16.msra.mxu0 %v6955
    %7314 = vmatpush.bf16.msra.mxu0 %v6951
    %7315 = vmatpush.bf16.msra.mxu0 %v6947
    %7316 = vmatpush.bf16.msra.mxu0 %v6943
    %7317 = vmatpush.bf16.msra.mxu0 %v6939
    %7318 = vmatmul.bf16.gmra.mxu0 %v6348
    %v7319 = vpop.f32.mrf.mxu0
    %v7320 = vadd.f32 %v7307, %v7319
    %v7321 = vpop.f32.mrf.mxu0
    %7322 = vdwg.mxu0
    %7323 = vmatpush.bf16.msra.mxu0 %v6999
    %7324 = vmatpush.bf16.msra.mxu0 %v6995
    %7325 = vmatpush.bf16.msra.mxu0 %v6991
    %7326 = vmatpush.bf16.msra.mxu0 %v6987
    %7327 = vmatpush.bf16.msra.mxu0 %v6983
    %7328 = vmatpush.bf16.msra.mxu0 %v6979
    %7329 = vmatpush.bf16.msra.mxu0 %v6975
    %7330 = vmatpush.bf16.msra.mxu0 %v6971
    %7331 = vmatmul.bf16.gmra.mxu0 %v6349
    %v7332 = vpop.f32.mrf.mxu0
    %v7333 = vadd.f32 %v7320, %v7332
    %v7334 = vpop.f32.mrf.mxu0
    %7335 = vdwg.mxu0
    %v7336 = vtanh.pop %v7177
    %v7337 = vtanh.pop %v7229
    %v7338 = vtanh.pop %v7281
    %v7339 = vtanh.pop %v7333
    %7340 = vst [vmem:[%s11] sm:$0xff] %v7336
    %7341 = vst [vmem:[%s11 + $0x8] sm:$0xff] %v7337
    %7342 = vst [vmem:[%s11 + $0x10] sm:$0xff] %v7338
    %7343 = vst [vmem:[%s11 + $0x18] sm:$0xff] %v7339
    // Predicated region
    $region74: #{tag_mapping_net_forward.1} parent=1 // pred_check
      _
    $region75: #{tag_mapping_net_forward.1} parent=1 // pred_check_branch
      %7345 = sbr.rel (0) target = $region77
    $region76: #{tag_mapping_net_forward.1} parent=1 // pred_region
      _
    $region77: #{tag_mapping_net_forward.1} parent=1 // pred_fallthru
      _
    // Predicated region
    $region78: #{tag_mapping_net_forward.1} parent=1 // pred_check
      _
    $region79: #{tag_mapping_net_forward.1} parent=1 // pred_check_branch
      %7347 = sbr.rel (0) target = $region81
    $region80: #{tag_mapping_net_forward.1} parent=1 // pred_region
      _
    $region81: #{tag_mapping_net_forward.1} parent=1 // pred_fallthru
      _
    // Predicated region
    $region82: #{tag_mapping_net_forward.1} parent=1 // pred_check
      _
    $region83: #{tag_mapping_net_forward.1} parent=1 // pred_check_branch
      %7349 = sbr.rel (0) target = $region85
    $region84: #{tag_mapping_net_forward.1} parent=1 // pred_region
      _
    $region85: #{tag_mapping_net_forward.1} parent=1 // pred_fallthru
      _
    // Predicated region
    $region86: #{tag_mapping_net_forward.1} parent=1 // pred_check
      _
    $region87: #{tag_mapping_net_forward.1} parent=1 // pred_check_branch
      %7351 = sbr.rel (0) target = $region89
    $region88: #{tag_mapping_net_forward.1} parent=1 // pred_region
      _
    $region89: #{tag_mapping_net_forward.1} parent=1 // pred_fallthru
      _
    %7352 = vsyncpa [#allocation3], 1
    %7353 = vsyncpa [#allocation5], 1
    %7354 = vsyncpa [#allocation8], 1
    %7355 = vsyncpa [#allocation11], 1
    %7356 = vsyncpa [#allocation14], 1

</llo_original>
